<compile_context>
chip_gen: v7x
topology: tpu7x:2x2x1
jax: 0.10.0
libtpu: 0.0.40
codegen_flags: <defaults>
</compile_context>

<pallas_src>
import functools

import jax
import jax.numpy as jnp
from jax.experimental import pallas as pl
from jax.experimental.pallas import tpu as pltpu

# ----------------------------- configuration --------------------------------
B = 2            # batch
C = 3            # image channels
IMG = 16         # image height = width
PATCH = 4        # patch size  -> 16 patches, seq len 17 (with cls token)
V_DIM = 32       # vision width
V_HEADS = 4
V_DEPTH = 2
V_MLP = 4 * V_DIM

VOCAB = 64
CTX = 8          # text context length
T_DIM = 32       # text width
T_HEADS = 4
T_DEPTH = 2
T_MLP = 4 * T_DIM

EMBED = 32       # joint CLIP embedding dim


# ----------------------------- Pallas kernels -------------------------------
def _ln(x, g, b, eps=1e-5):
    mu = jnp.mean(x, axis=-1, keepdims=True)
    xc = x - mu
    var = jnp.mean(xc * xc, axis=-1, keepdims=True)
    return xc * jax.lax.rsqrt(var + eps) * g + b


def linear_kernel(x_ref, w_ref, b_ref, o_ref):
    # x: [M, K], w: [K, N], b: [1, N].  bf16 operands -> MXU, f32 accumulate.
    o_ref[...] = (jnp.dot(x_ref[...].astype(jnp.bfloat16),
                          w_ref[...].astype(jnp.bfloat16),
                          preferred_element_type=jnp.float32) + b_ref[0])


def head_kernel(x_ref, g_ref, b_ref, w_ref, bias_ref, o_ref):
    """Fused epilogue: LayerNorm -> projection -> F.normalize(dim=-1)."""
    h = _ln(x_ref[...], g_ref[0], b_ref[0])
    f = jnp.dot(h, w_ref[...], preferred_element_type=jnp.float32) + bias_ref[0]
    # F.normalize: x / max(||x||, 1e-12)  ==  x * rsqrt(max(sum(x^2), 1e-24))
    inv = jax.lax.rsqrt(jnp.maximum(jnp.sum(f * f, axis=-1, keepdims=True), 1e-24))
    o_ref[...] = f * inv


def tower_kernel(x_ref, pos_ref,
                 ln1g_ref, ln1b_ref, wq_ref, wk_ref, wv_ref,
                 bq_ref, bk_ref, bv_ref, wo_ref, bo_ref,
                 ln2g_ref, ln2b_ref, w1_ref, b1_ref, w2_ref, b2_ref,
                 o_ref, *, num_heads, causal):
    """Full pre-LN transformer tower.

    grid = (batch, depth).  The output block index only depends on batch, so
    the [1, S, D] output block stays resident in VMEM across the depth axis and
    carries the residual stream between blocks.  Weight refs hold one depth
    slice (leading block dim of 1).
    """
    d = pl.program_id(1)

    # Fused positional-embedding add on the first depth step.
    @pl.when(d == 0)
    def _():
        o_ref[0] = x_ref[0] + pos_ref[...]

    x = o_ref[0]                                   # [S, D] residual (VMEM)
    S, D = x.shape
    dh = D // num_heads
    scale = 1.0 / (dh ** 0.5)
    bf16 = jnp.bfloat16

    # Causal mask built once per grid step (hoisted out of the head loop).
    if causal:
        row = jax.lax.broadcasted_iota(jnp.int32, (S, S), 0)
        col = jax.lax.broadcasted_iota(jnp.int32, (S, S), 1)
        keep = col <= row

    # ---- multi-head self-attention ----
    h = _ln(x, ln1g_ref[0], ln1b_ref[0])
    hb = h.astype(bf16)
    q = jnp.dot(hb, wq_ref[0].astype(bf16),
                preferred_element_type=jnp.float32) + bq_ref[0]
    k = jnp.dot(hb, wk_ref[0].astype(bf16),
                preferred_element_type=jnp.float32) + bk_ref[0]
    v = jnp.dot(hb, wv_ref[0].astype(bf16),
                preferred_element_type=jnp.float32) + bv_ref[0]

    heads = []
    for hd in range(num_heads):                    # static unroll over heads
        sl = slice(hd * dh, (hd + 1) * dh)
        qh, kh, vh = q[:, sl], k[:, sl], v[:, sl]
        s = jax.lax.dot_general(qh, kh, (((1,), (1,)), ((), ())),
                                preferred_element_type=jnp.float32) * scale
        if causal:
            s = jnp.where(keep, s, jnp.float32(-1e30))
        s = s - jnp.max(s, axis=-1, keepdims=True)
        p = jnp.exp(s)
        p = p * pl.reciprocal(jnp.sum(p, axis=-1, keepdims=True), approx=True)
        heads.append(jnp.dot(p, vh, preferred_element_type=jnp.float32))
    o_cat = jnp.concatenate(heads, axis=-1)        # [S, D]
    attn = jnp.dot(o_cat.astype(bf16), wo_ref[0].astype(bf16),
                   preferred_element_type=jnp.float32) + bo_ref[0]
    x = x + attn

    # ---- MLP ----
    h2 = _ln(x, ln2g_ref[0], ln2b_ref[0])
    m = jnp.dot(h2.astype(bf16), w1_ref[0].astype(bf16),
                preferred_element_type=jnp.float32) + b1_ref[0]
    # TODO(synk): PyTorch nn.GELU defaults to exact erf; tanh approximation used
    # here for Mosaic-safe lowering (negligible numeric difference).
    m = jax.nn.gelu(m, approximate=True)
    m = jnp.dot(m.astype(bf16), w2_ref[0].astype(bf16),
                preferred_element_type=jnp.float32) + b2_ref[0]
    o_ref[0] = x + m


# ----------------------------- kernel wrappers -------------------------------
def pallas_linear(x, w, b):
    return pl.pallas_call(
        linear_kernel,
        out_shape=jax.ShapeDtypeStruct((x.shape[0], w.shape[1]), jnp.float32),
    )(x, w, b)


def pallas_head(x, g, b, w, bias):
    return pl.pallas_call(
        head_kernel,
        out_shape=jax.ShapeDtypeStruct((x.shape[0], w.shape[1]), jnp.float32),
    )(x, g, b, w, bias)


def _stack_blocks(blocks, dim):
    """Stack per-block params along a leading depth axis.

    The PyTorch-style fused qkv weight/bias is split host-side into separate
    q/k/v slabs so the kernel never lane-slices its matmul outputs.
    All results are 3-D so the depth axis never hits the (8,128) tile rules.
    """
    def st(key):
        return jnp.stack([blk[key] for blk in blocks], axis=0)

    w_qkv = st("w_qkv")                            # [depth, D, 3D]
    b_qkv = st("b_qkv")                            # [depth, 1, 3D]
    wq, wk, wv = (w_qkv[:, :, :dim], w_qkv[:, :, dim:2 * dim], w_qkv[:, :, 2 * dim:])
    bq, bk, bv = (b_qkv[:, :, :dim], b_qkv[:, :, dim:2 * dim], b_qkv[:, :, 2 * dim:])
    return [st("ln1_g"), st("ln1_b"), wq, wk, wv, bq, bk, bv,
            st("w_o"), st("b_o"), st("ln2_g"), st("ln2_b"),
            st("w_fc1"), st("b_fc1"), st("w_fc2"), st("b_fc2")]


def pallas_tower(x, pos, stacked, *, num_heads, causal):
    Bb, S, D = x.shape
    depth = stacked[0].shape[0]
    kern = functools.partial(tower_kernel, num_heads=num_heads, causal=causal)

    def wspec(a):
        # one depth slice per grid step; depth is the innermost ("arbitrary") axis
        return pl.BlockSpec((1,) + a.shape[1:], lambda b, d: (d, 0, 0))

    in_specs = [pl.BlockSpec((1, S, D), lambda b, d: (b, 0, 0)),   # x
                pl.BlockSpec((S, D), lambda b, d: (0, 0))]         # pos
    in_specs += [wspec(a) for a in stacked]

    return pl.pallas_call(
        kern,
        grid=(Bb, depth),
        in_specs=in_specs,
        out_specs=pl.BlockSpec((1, S, D), lambda b, d: (b, 0, 0)),
        out_shape=jax.ShapeDtypeStruct((Bb, S, D), jnp.float32),
        compiler_params=pltpu.CompilerParams(
            dimension_semantics=("parallel", "arbitrary")),
    )(x, pos, *stacked)


# ----------------------------- parameter init --------------------------------
def _block_params(key, dim, mlp_dim):
    ks = jax.random.split(key, 4)
    s = 0.02
    return {
        "ln1_g": jnp.ones((1, dim), jnp.float32),
        "ln1_b": jnp.zeros((1, dim), jnp.float32),
        "w_qkv": s * jax.random.normal(ks[0], (dim, 3 * dim), jnp.float32),
        "b_qkv": jnp.zeros((1, 3 * dim), jnp.float32),
        "w_o": s * jax.random.normal(ks[1], (dim, dim), jnp.float32),
        "b_o": jnp.zeros((1, dim), jnp.float32),
        "ln2_g": jnp.ones((1, dim), jnp.float32),
        "ln2_b": jnp.zeros((1, dim), jnp.float32),
        "w_fc1": s * jax.random.normal(ks[2], (dim, mlp_dim), jnp.float32),
        "b_fc1": jnp.zeros((1, mlp_dim), jnp.float32),
        "w_fc2": s * jax.random.normal(ks[3], (mlp_dim, dim), jnp.float32),
        "b_fc2": jnp.zeros((1, dim), jnp.float32),
    }


def init_params(key):
    kv, kt, _ = jax.random.split(key, 3)
    s = 0.02
    n_patches = (IMG // PATCH) ** 2
    # vision tower
    kvs = jax.random.split(kv, V_DEPTH + 4)
    visual = {
        "patch_w": s * jax.random.normal(kvs[0], (C * PATCH * PATCH, V_DIM), jnp.float32),
        "patch_b": jnp.zeros((1, V_DIM), jnp.float32),
        "cls": s * jax.random.normal(kvs[1], (1, V_DIM), jnp.float32),
        "pos": s * jax.random.normal(kvs[2], (n_patches + 1, V_DIM), jnp.float32),
        "blocks": [_block_params(kvs[4 + i], V_DIM, V_MLP) for i in range(V_DEPTH)],
        "ln_g": jnp.ones((1, V_DIM), jnp.float32),
        "ln_b": jnp.zeros((1, V_DIM), jnp.float32),
        "head_w": s * jax.random.normal(kvs[3], (V_DIM, EMBED), jnp.float32),
        "head_b": jnp.zeros((1, EMBED), jnp.float32),
    }
    # text tower
    kts = jax.random.split(kt, T_DEPTH + 3)
    text = {
        "tok_emb": s * jax.random.normal(kts[0], (VOCAB, T_DIM), jnp.float32),
        "pos": s * jax.random.normal(kts[1], (CTX, T_DIM), jnp.float32),
        "blocks": [_block_params(kts[3 + i], T_DIM, T_MLP) for i in range(T_DEPTH)],
        "ln_g": jnp.ones((1, T_DIM), jnp.float32),
        "ln_b": jnp.zeros((1, T_DIM), jnp.float32),
        "proj_w": s * jax.random.normal(kts[2], (T_DIM, EMBED), jnp.float32),
        # CLIP text_projection has no bias; kept as a zero slot for a uniform kernel.
        "proj_b": jnp.zeros((1, EMBED), jnp.float32),
    }
    return {
        "visual": visual,
        "text": text,
        "logit_scale": jnp.asarray(jnp.log(1.0 / 0.07), jnp.float32),
    }


# ----------------------------- encoders / forward ----------------------------
def encode_image(image, vp):
    Bb, Cc, H, W = image.shape
    hp, wp = H // PATCH, W // PATCH
    # NCHW -> [B*N_patches, C*p*p]  (glue; matches Conv2d(p, stride=p) weight flattening)
    patches = image.reshape(Bb, Cc, hp, PATCH, wp, PATCH)
    patches = patches.transpose(0, 2, 4, 1, 3, 5).reshape(Bb * hp * wp, Cc * PATCH * PATCH)
    emb = pallas_linear(patches, vp["patch_w"], vp["patch_b"]).reshape(Bb, hp * wp, V_DIM)
    cls = jnp.broadcast_to(vp["cls"][None, :, :], (Bb, 1, V_DIM))
    x = jnp.concatenate([cls, emb], axis=1)                     # [B, 1+N, D]  (glue)
    stacked = _stack_blocks(vp["blocks"], V_DIM)
    x = pallas_tower(x, vp["pos"], stacked, num_heads=V_HEADS, causal=False)
    cls_tok = x[:, 0, :]                                        # glue: cls select
    # fused LN -> head -> F.normalize
    return pallas_head(cls_tok, vp["ln_g"], vp["ln_b"], vp["head_w"], vp["head_b"])


def encode_text(text, tp):
    Bb, L = text.shape
    x = jnp.take(tp["tok_emb"], text, axis=0)                   # glue: embedding gather
    stacked = _stack_blocks(tp["blocks"], T_DIM)
    x = pallas_tower(x, tp["pos"], stacked, num_heads=T_HEADS, causal=True)
    eot = jnp.argmax(text, axis=-1)                             # EOT = highest token id
    x_eot = x[jnp.arange(Bb), eot, :]                           # glue: token gather
    # fused LN -> text projection -> F.normalize
    return pallas_head(x_eot, tp["ln_g"], tp["ln_b"], tp["proj_w"], tp["proj_b"])


def clip_forward(image, text, params):
    image_features = encode_image(image, params["visual"])
    text_features = encode_text(text, params["text"])
    return image_features, text_features, jnp.exp(params["logit_scale"])


# ----------------------------- main -----------------------------------------
if __name__ == "__main__":
    key = jax.random.PRNGKey(0)
    k_img, k_txt, k_par = jax.random.split(key, 3)

    image = jax.random.normal(k_img, (B, C, IMG, IMG), jnp.float32)     # NCHW
    text = jax.random.randint(k_txt, (B, CTX), 1, VOCAB, dtype=jnp.int32)
    params = init_params(k_par)

    fwd = jax.jit(clip_forward)
    img_f, txt_f, scale = fwd(image, text, params)
    jax.block_until_ready((img_f, txt_f, scale))

    assert img_f.shape == (B, EMBED) and txt_f.shape == (B, EMBED)
    assert jnp.allclose(jnp.linalg.norm(img_f, axis=-1), 1.0, atol=1e-4)
    assert jnp.allclose(jnp.linalg.norm(txt_f, axis=-1), 1.0, atol=1e-4)
    assert jnp.allclose(scale, 1.0 / 0.07, rtol=1e-5)
    print("KERNEL_OK")
</pallas_src>

<mosaic_0001>
module attributes {stable_mosaic.version = 11 : i64} {
  func.func @linear_kernel(%arg0: memref<32x48xf32, #tpu.memory_space<vmem>>, %arg1: memref<48x32xf32, #tpu.memory_space<vmem>>, %arg2: memref<1x32xf32, #tpu.memory_space<vmem>>, %arg3: memref<32x32xf32, #tpu.memory_space<vmem>>) attributes {dimension_semantics = [], scalar_prefetch = 0 : i64, scratch_operands = 0 : i64, tpu.core_type = #tpu.core_type<tc>} {
    %c0 = arith.constant 0 : index
    %c0_0 = arith.constant 0 : index
    %0 = vector.load %arg0[%c0, %c0_0] : memref<32x48xf32, #tpu.memory_space<vmem>>, vector<32x48xf32>
    %1 = arith.truncf %0 : vector<32x48xf32> to vector<32x48xbf16>
    %c0_1 = arith.constant 0 : index
    %c0_2 = arith.constant 0 : index
    %2 = vector.load %arg1[%c0_1, %c0_2] : memref<48x32xf32, #tpu.memory_space<vmem>>, vector<48x32xf32>
    %3 = arith.truncf %2 : vector<48x32xf32> to vector<48x32xbf16>
    %cst = arith.constant dense<0.000000e+00> : vector<32x32xf32>
    %4 = tpu.matmul %1, %3, %cst {dimension_numbers = #tpu.dot_dimension_numbers<[1], [0], [0], [1], [0, 0, 1, 1], [], []>} : vector<32x48xbf16>, vector<48x32xbf16>, vector<32x32xf32> -> vector<32x32xf32>
    %c0_3 = arith.constant 0 : index
    %c0_4 = arith.constant 0 : index
    %5 = vector.load %arg2[%c0_3, %c0_4] : memref<1x32xf32, #tpu.memory_space<vmem>>, vector<1x32xf32>
    %6 = vector.shape_cast %5 : vector<1x32xf32> to vector<32xf32>
    %7 = vector.shape_cast %6 : vector<32xf32> to vector<1x32xf32>
    %8 = vector.broadcast %7 : vector<1x32xf32> to vector<32x32xf32>
    %9 = arith.addf %4, %8 : vector<32x32xf32>
    %c0_5 = arith.constant 0 : index
    %c0_6 = arith.constant 0 : index
    %10 = vector.load %arg3[%c0_5, %c0_6] : memref<32x32xf32, #tpu.memory_space<vmem>>, vector<32x32xf32>
    tpu.vector_store %arg3[%c0_5, %c0_6], %9 {strides = array<i32>} : memref<32x32xf32, #tpu.memory_space<vmem>>, vector<32x32xf32>,
    return
  }
}

module attributes {stable_mosaic.version = 11 : i64} {
  func.func @head_kernel(%arg0: memref<2x32xf32, #tpu.memory_space<vmem>>, %arg1: memref<1x32xf32, #tpu.memory_space<vmem>>, %arg2: memref<1x32xf32, #tpu.memory_space<vmem>>, %arg3: memref<32x32xf32, #tpu.memory_space<vmem>>, %arg4: memref<1x32xf32, #tpu.memory_space<vmem>>, %arg5: memref<2x32xf32, #tpu.memory_space<vmem>>) attributes {dimension_semantics = [], scalar_prefetch = 0 : i64, scratch_operands = 0 : i64, tpu.core_type = #tpu.core_type<tc>} {
    %c0 = arith.constant 0 : index
    %c0_0 = arith.constant 0 : index
    %0 = vector.load %arg0[%c0, %c0_0] : memref<2x32xf32, #tpu.memory_space<vmem>>, vector<2x32xf32>
    %c0_1 = arith.constant 0 : index
    %c0_2 = arith.constant 0 : index
    %1 = vector.load %arg1[%c0_1, %c0_2] : memref<1x32xf32, #tpu.memory_space<vmem>>, vector<1x32xf32>
    %2 = vector.shape_cast %1 : vector<1x32xf32> to vector<32xf32>
    %c0_3 = arith.constant 0 : index
    %c0_4 = arith.constant 0 : index
    %3 = vector.load %arg2[%c0_3, %c0_4] : memref<1x32xf32, #tpu.memory_space<vmem>>, vector<1x32xf32>
    %4 = vector.shape_cast %3 : vector<1x32xf32> to vector<32xf32>
    %cst = arith.constant dense<0.000000e+00> : vector<2xf32>
    %5 = vector.multi_reduction <add>, %0, %cst [1] : vector<2x32xf32> to vector<2xf32>
    %6 = vector.shape_cast %5 : vector<2xf32> to vector<2x1xf32>
    %cst_5 = arith.constant 3.200000e+01 : f32
    %7 = vector.broadcast %cst_5 : f32 to vector<2x1xf32>
    %8 = arith.divf %6, %7 : vector<2x1xf32>
    %9 = vector.broadcast %8 : vector<2x1xf32> to vector<2x32xf32>
    %10 = arith.subf %0, %9 : vector<2x32xf32>
    %11 = arith.mulf %10, %10 : vector<2x32xf32>
    %cst_6 = arith.constant dense<0.000000e+00> : vector<2xf32>
    %12 = vector.multi_reduction <add>, %11, %cst_6 [1] : vector<2x32xf32> to vector<2xf32>
    %13 = vector.shape_cast %12 : vector<2xf32> to vector<2x1xf32>
    %cst_7 = arith.constant 3.200000e+01 : f32
    %14 = vector.broadcast %cst_7 : f32 to vector<2x1xf32>
    %15 = arith.divf %13, %14 : vector<2x1xf32>
    %cst_8 = arith.constant 9.99999974E-6 : f32
    %16 = vector.broadcast %cst_8 : f32 to vector<2x1xf32>
    %17 = arith.addf %15, %16 : vector<2x1xf32>
    %18 = math.rsqrt %17 : vector<2x1xf32>
    %19 = vector.broadcast %18 : vector<2x1xf32> to vector<2x32xf32>
    %20 = arith.mulf %10, %19 : vector<2x32xf32>
    %21 = vector.shape_cast %2 : vector<32xf32> to vector<1x32xf32>
    %22 = vector.broadcast %21 : vector<1x32xf32> to vector<2x32xf32>
    %23 = arith.mulf %20, %22 : vector<2x32xf32>
    %24 = vector.shape_cast %4 : vector<32xf32> to vector<1x32xf32>
    %25 = vector.broadcast %24 : vector<1x32xf32> to vector<2x32xf32>
    %26 = arith.addf %23, %25 : vector<2x32xf32>
    %c0_9 = arith.constant 0 : index
    %c0_10 = arith.constant 0 : index
    %27 = vector.load %arg3[%c0_9, %c0_10] : memref<32x32xf32, #tpu.memory_space<vmem>>, vector<32x32xf32>
    %cst_11 = arith.constant dense<0.000000e+00> : vector<2x32xf32>
    %28 = tpu.matmul %26, %27, %cst_11 {dimension_numbers = #tpu.dot_dimension_numbers<[1], [0], [0], [1], [0, 0, 1, 1], [], []>} : vector<2x32xf32>, vector<32x32xf32>, vector<2x32xf32> -> vector<2x32xf32>
    %c0_12 = arith.constant 0 : index
    %c0_13 = arith.constant 0 : index
    %29 = vector.load %arg4[%c0_12, %c0_13] : memref<1x32xf32, #tpu.memory_space<vmem>>, vector<1x32xf32>
    %30 = vector.shape_cast %29 : vector<1x32xf32> to vector<32xf32>
    %31 = vector.shape_cast %30 : vector<32xf32> to vector<1x32xf32>
    %32 = vector.broadcast %31 : vector<1x32xf32> to vector<2x32xf32>
    %33 = arith.addf %28, %32 : vector<2x32xf32>
    %34 = arith.mulf %33, %33 : vector<2x32xf32>
    %cst_14 = arith.constant dense<0.000000e+00> : vector<2xf32>
    %35 = vector.multi_reduction <add>, %34, %cst_14 [1] : vector<2x32xf32> to vector<2xf32>
    %36 = vector.shape_cast %35 : vector<2xf32> to vector<2x1xf32>
    %cst_15 = arith.constant 1.000000e-24 : f32
    %37 = vector.broadcast %cst_15 : f32 to vector<2x1xf32>
    %38 = arith.maximumf %36, %37 : vector<2x1xf32>
    %39 = math.rsqrt %38 : vector<2x1xf32>
    %40 = vector.broadcast %39 : vector<2x1xf32> to vector<2x32xf32>
    %41 = arith.mulf %33, %40 : vector<2x32xf32>
    %c0_16 = arith.constant 0 : index
    %c0_17 = arith.constant 0 : index
    %42 = vector.load %arg5[%c0_16, %c0_17] : memref<2x32xf32, #tpu.memory_space<vmem>>, vector<2x32xf32>
    tpu.vector_store %arg5[%c0_16, %c0_17], %41 {strides = array<i32>} : memref<2x32xf32, #tpu.memory_space<vmem>>, vector<2x32xf32>,
    return
  }
}

module attributes {stable_mosaic.version = 11 : i64} {
  func.func @tower_kernel(%arg0: i32, %arg1: i32, %arg2: memref<1x17x32xf32, #tpu.memory_space<vmem>>, %arg3: memref<17x32xf32, #tpu.memory_space<vmem>>, %arg4: memref<1x1x32xf32, #tpu.memory_space<vmem>>, %arg5: memref<1x1x32xf32, #tpu.memory_space<vmem>>, %arg6: memref<1x32x32xf32, #tpu.memory_space<vmem>>, %arg7: memref<1x32x32xf32, #tpu.memory_space<vmem>>, %arg8: memref<1x32x32xf32, #tpu.memory_space<vmem>>, %arg9: memref<1x1x32xf32, #tpu.memory_space<vmem>>, %arg10: memref<1x1x32xf32, #tpu.memory_space<vmem>>, %arg11: memref<1x1x32xf32, #tpu.memory_space<vmem>>, %arg12: memref<1x32x32xf32, #tpu.memory_space<vmem>>, %arg13: memref<1x1x32xf32, #tpu.memory_space<vmem>>, %arg14: memref<1x1x32xf32, #tpu.memory_space<vmem>>, %arg15: memref<1x1x32xf32, #tpu.memory_space<vmem>>, %arg16: memref<1x32x128xf32, #tpu.memory_space<vmem>>, %arg17: memref<1x1x128xf32, #tpu.memory_space<vmem>>, %arg18: memref<1x128x32xf32, #tpu.memory_space<vmem>>, %arg19: memref<1x1x32xf32, #tpu.memory_space<vmem>>, %arg20: memref<1x17x32xf32, #tpu.memory_space<vmem>>) attributes {dimension_semantics = [#tpu.dimension_semantics<parallel>, #tpu.dimension_semantics<arbitrary>], iteration_bounds = array<i64: 2, 2>, scalar_prefetch = 0 : i64, scratch_operands = 0 : i64, tpu.core_type = #tpu.core_type<tc>, window_params = [{transform_indices = @transform_0, window_bounds = array<i64: 1, 17, 32>}, {pipeline_mode = #tpu.pipeline_mode<synchronous>, transform_indices = @transform_1, window_bounds = array<i64: 17, 32>}, {transform_indices = @transform_2, window_bounds = array<i64: 1, 1, 32>}, {transform_indices = @transform_3, window_bounds = array<i64: 1, 1, 32>}, {transform_indices = @transform_4, window_bounds = array<i64: 1, 32, 32>}, {transform_indices = @transform_5, window_bounds = array<i64: 1, 32, 32>}, {transform_indices = @transform_6, window_bounds = array<i64: 1, 32, 32>}, {transform_indices = @transform_7, window_bounds = array<i64: 1, 1, 32>}, {transform_indices = @transform_8, window_bounds = array<i64: 1, 1, 32>}, {transform_indices = @transform_9, window_bounds = array<i64: 1, 1, 32>}, {transform_indices = @transform_10, window_bounds = array<i64: 1, 32, 32>}, {transform_indices = @transform_11, window_bounds = array<i64: 1, 1, 32>}, {transform_indices = @transform_12, window_bounds = array<i64: 1, 1, 32>}, {transform_indices = @transform_13, window_bounds = array<i64: 1, 1, 32>}, {transform_indices = @transform_14, window_bounds = array<i64: 1, 32, 128>}, {transform_indices = @transform_15, window_bounds = array<i64: 1, 1, 128>}, {transform_indices = @transform_16, window_bounds = array<i64: 1, 128, 32>}, {transform_indices = @transform_17, window_bounds = array<i64: 1, 1, 32>}, {transform_indices = @transform_18, window_bounds = array<i64: 1, 17, 32>}]} {
    %c0_i32 = arith.constant 0 : i32
    %0 = arith.cmpi eq, %arg1, %c0_i32 : i32
    %1 = arith.extui %0 : i1 to i32
    %c0_i32_0 = arith.constant 0 : i32
    %2 = arith.cmpi ne, %1, %c0_i32_0 : i32
    scf.if %2 {
      %c0_93 = arith.constant 0 : index
      %c0_94 = arith.constant 0 : index
      %c0_95 = arith.constant 0 : index
      %192 = vector.load %arg2[%c0_93, %c0_94, %c0_95] : memref<1x17x32xf32, #tpu.memory_space<vmem>>, vector<1x17x32xf32>
      %193 = vector.shape_cast %192 : vector<1x17x32xf32> to vector<17x32xf32>
      %c0_96 = arith.constant 0 : index
      %c0_97 = arith.constant 0 : index
      %194 = vector.load %arg3[%c0_96, %c0_97] : memref<17x32xf32, #tpu.memory_space<vmem>>, vector<17x32xf32>
      %195 = arith.addf %193, %194 : vector<17x32xf32>
      %c0_98 = arith.constant 0 : index
      %c0_99 = arith.constant 0 : index
      %c0_100 = arith.constant 0 : index
      %196 = vector.load %arg20[%c0_98, %c0_99, %c0_100] : memref<1x17x32xf32, #tpu.memory_space<vmem>>, vector<1x17x32xf32>
      %197 = vector.shape_cast %196 : vector<1x17x32xf32> to vector<17x32xf32>
      %198 = vector.shape_cast %195 : vector<17x32xf32> to vector<1x17x32xf32>
      tpu.vector_store %arg20[%c0_98, %c0_99, %c0_100], %198 {strides = array<i32>} : memref<1x17x32xf32, #tpu.memory_space<vmem>>, vector<1x17x32xf32>,
    } else {
    }
    %c0 = arith.constant 0 : index
    %c0_1 = arith.constant 0 : index
    %c0_2 = arith.constant 0 : index
    %3 = vector.load %arg20[%c0, %c0_1, %c0_2] : memref<1x17x32xf32, #tpu.memory_space<vmem>>, vector<1x17x32xf32>
    %4 = vector.shape_cast %3 : vector<1x17x32xf32> to vector<17x32xf32>
    %c0_3 = arith.constant 0 : index
    %c0_4 = arith.constant 0 : index
    %c0_5 = arith.constant 0 : index
    %5 = vector.load %arg4[%c0_3, %c0_4, %c0_5] : memref<1x1x32xf32, #tpu.memory_space<vmem>>, vector<1x1x32xf32>
    %6 = vector.shape_cast %5 : vector<1x1x32xf32> to vector<1x32xf32>
    %c0_6 = arith.constant 0 : index
    %c0_7 = arith.constant 0 : index
    %c0_8 = arith.constant 0 : index
    %7 = vector.load %arg5[%c0_6, %c0_7, %c0_8] : memref<1x1x32xf32, #tpu.memory_space<vmem>>, vector<1x1x32xf32>
    %8 = vector.shape_cast %7 : vector<1x1x32xf32> to vector<1x32xf32>
    %cst = arith.constant dense<0.000000e+00> : vector<17xf32>
    %9 = vector.multi_reduction <add>, %4, %cst [1] : vector<17x32xf32> to vector<17xf32>
    %10 = vector.shape_cast %9 : vector<17xf32> to vector<17x1xf32>
    %cst_9 = arith.constant 3.200000e+01 : f32
    %11 = vector.broadcast %cst_9 : f32 to vector<17x1xf32>
    %12 = arith.divf %10, %11 : vector<17x1xf32>
    %13 = vector.broadcast %12 : vector<17x1xf32> to vector<17x32xf32>
    %14 = arith.subf %4, %13 : vector<17x32xf32>
    %15 = arith.mulf %14, %14 : vector<17x32xf32>
    %cst_10 = arith.constant dense<0.000000e+00> : vector<17xf32>
    %16 = vector.multi_reduction <add>, %15, %cst_10 [1] : vector<17x32xf32> to vector<17xf32>
    %17 = vector.shape_cast %16 : vector<17xf32> to vector<17x1xf32>
    %cst_11 = arith.constant 3.200000e+01 : f32
    %18 = vector.broadcast %cst_11 : f32 to vector<17x1xf32>
    %19 = arith.divf %17, %18 : vector<17x1xf32>
    %cst_12 = arith.constant 9.99999974E-6 : f32
    %20 = vector.broadcast %cst_12 : f32 to vector<17x1xf32>
    %21 = arith.addf %19, %20 : vector<17x1xf32>
    %22 = math.rsqrt %21 : vector<17x1xf32>
    %23 = vector.broadcast %22 : vector<17x1xf32> to vector<17x32xf32>
    %24 = arith.mulf %14, %23 : vector<17x32xf32>
    %25 = vector.broadcast %6 : vector<1x32xf32> to vector<17x32xf32>
    %26 = arith.mulf %24, %25 : vector<17x32xf32>
    %27 = vector.broadcast %8 : vector<1x32xf32> to vector<17x32xf32>
    %28 = arith.addf %26, %27 : vector<17x32xf32>
    %29 = arith.truncf %28 : vector<17x32xf32> to vector<17x32xbf16>
    %c0_13 = arith.constant 0 : index
    %c0_14 = arith.constant 0 : index
    %c0_15 = arith.constant 0 : index
    %30 = vector.load %arg6[%c0_13, %c0_14, %c0_15] : memref<1x32x32xf32, #tpu.memory_space<vmem>>, vector<1x32x32xf32>
    %31 = vector.shape_cast %30 : vector<1x32x32xf32> to vector<32x32xf32>
    %32 = arith.truncf %31 : vector<32x32xf32> to vector<32x32xbf16>
    %cst_16 = arith.constant dense<0.000000e+00> : vector<17x32xf32>
    %33 = tpu.matmul %29, %32, %cst_16 {dimension_numbers = #tpu.dot_dimension_numbers<[1], [0], [0], [1], [0, 0, 1, 1], [], []>} : vector<17x32xbf16>, vector<32x32xbf16>, vector<17x32xf32> -> vector<17x32xf32>
    %c0_17 = arith.constant 0 : index
    %c0_18 = arith.constant 0 : index
    %c0_19 = arith.constant 0 : index
    %34 = vector.load %arg9[%c0_17, %c0_18, %c0_19] : memref<1x1x32xf32, #tpu.memory_space<vmem>>, vector<1x1x32xf32>
    %35 = vector.shape_cast %34 : vector<1x1x32xf32> to vector<1x32xf32>
    %36 = vector.broadcast %35 : vector<1x32xf32> to vector<17x32xf32>
    %37 = arith.addf %33, %36 : vector<17x32xf32>
    %c0_20 = arith.constant 0 : index
    %c0_21 = arith.constant 0 : index
    %c0_22 = arith.constant 0 : index
    %38 = vector.load %arg7[%c0_20, %c0_21, %c0_22] : memref<1x32x32xf32, #tpu.memory_space<vmem>>, vector<1x32x32xf32>
    %39 = vector.shape_cast %38 : vector<1x32x32xf32> to vector<32x32xf32>
    %40 = arith.truncf %39 : vector<32x32xf32> to vector<32x32xbf16>
    %cst_23 = arith.constant dense<0.000000e+00> : vector<17x32xf32>
    %41 = tpu.matmul %29, %40, %cst_23 {dimension_numbers = #tpu.dot_dimension_numbers<[1], [0], [0], [1], [0, 0, 1, 1], [], []>} : vector<17x32xbf16>, vector<32x32xbf16>, vector<17x32xf32> -> vector<17x32xf32>
    %c0_24 = arith.constant 0 : index
    %c0_25 = arith.constant 0 : index
    %c0_26 = arith.constant 0 : index
    %42 = vector.load %arg10[%c0_24, %c0_25, %c0_26] : memref<1x1x32xf32, #tpu.memory_space<vmem>>, vector<1x1x32xf32>
    %43 = vector.shape_cast %42 : vector<1x1x32xf32> to vector<1x32xf32>
    %44 = vector.broadcast %43 : vector<1x32xf32> to vector<17x32xf32>
    %45 = arith.addf %41, %44 : vector<17x32xf32>
    %c0_27 = arith.constant 0 : index
    %c0_28 = arith.constant 0 : index
    %c0_29 = arith.constant 0 : index
    %46 = vector.load %arg8[%c0_27, %c0_28, %c0_29] : memref<1x32x32xf32, #tpu.memory_space<vmem>>, vector<1x32x32xf32>
    %47 = vector.shape_cast %46 : vector<1x32x32xf32> to vector<32x32xf32>
    %48 = arith.truncf %47 : vector<32x32xf32> to vector<32x32xbf16>
    %cst_30 = arith.constant dense<0.000000e+00> : vector<17x32xf32>
    %49 = tpu.matmul %29, %48, %cst_30 {dimension_numbers = #tpu.dot_dimension_numbers<[1], [0], [0], [1], [0, 0, 1, 1], [], []>} : vector<17x32xbf16>, vector<32x32xbf16>, vector<17x32xf32> -> vector<17x32xf32>
    %c0_31 = arith.constant 0 : index
    %c0_32 = arith.constant 0 : index
    %c0_33 = arith.constant 0 : index
    %50 = vector.load %arg11[%c0_31, %c0_32, %c0_33] : memref<1x1x32xf32, #tpu.memory_space<vmem>>, vector<1x1x32xf32>
    %51 = vector.shape_cast %50 : vector<1x1x32xf32> to vector<1x32xf32>
    %52 = vector.broadcast %51 : vector<1x32xf32> to vector<17x32xf32>
    %53 = arith.addf %49, %52 : vector<17x32xf32>
    %54 = vector.extract_strided_slice %37 {offsets = [0, 0], sizes = [17, 8], strides = [1, 1]} : vector<17x32xf32> to vector<17x8xf32>
    %55 = vector.extract_strided_slice %45 {offsets = [0, 0], sizes = [17, 8], strides = [1, 1]} : vector<17x32xf32> to vector<17x8xf32>
    %56 = vector.extract_strided_slice %53 {offsets = [0, 0], sizes = [17, 8], strides = [1, 1]} : vector<17x32xf32> to vector<17x8xf32>
    %cst_34 = arith.constant dense<0.000000e+00> : vector<17x17xf32>
    %57 = tpu.matmul %54, %55, %cst_34 {dimension_numbers = #tpu.dot_dimension_numbers<[1], [1], [0], [0], [0, 0, 1, 0], [], []>} : vector<17x8xf32>, vector<17x8xf32>, vector<17x17xf32> -> vector<17x17xf32>
    %cst_35 = arith.constant 0.353553385 : f32
    %58 = vector.broadcast %cst_35 : f32 to vector<17x17xf32>
    %59 = arith.mulf %57, %58 : vector<17x17xf32>
    %cst_36 = arith.constant dense<0xFF800000> : vector<17xf32>
    %60 = vector.multi_reduction <maximumf>, %59, %cst_36 [1] : vector<17x17xf32> to vector<17xf32>
    %61 = vector.shape_cast %60 : vector<17xf32> to vector<17x1xf32>
    %62 = vector.broadcast %61 : vector<17x1xf32> to vector<17x17xf32>
    %63 = arith.subf %59, %62 : vector<17x17xf32>
    %64 = math.exp %63 : vector<17x17xf32>
    %cst_37 = arith.constant dense<0.000000e+00> : vector<17xf32>
    %65 = vector.multi_reduction <add>, %64, %cst_37 [1] : vector<17x17xf32> to vector<17xf32>
    %66 = vector.shape_cast %65 : vector<17xf32> to vector<17x1xf32>
    %67 = tpu.reciprocal %66 {approx = true} : vector<17x1xf32> -> vector<17x1xf32>
    %68 = vector.broadcast %67 : vector<17x1xf32> to vector<17x17xf32>
    %69 = arith.mulf %64, %68 : vector<17x17xf32>
    %cst_38 = arith.constant dense<0.000000e+00> : vector<17x8xf32>
    %70 = tpu.matmul %69, %56, %cst_38 {dimension_numbers = #tpu.dot_dimension_numbers<[1], [0], [0], [1], [0, 0, 1, 1], [], []>} : vector<17x17xf32>, vector<17x8xf32>, vector<17x8xf32> -> vector<17x8xf32>
    %71 = vector.extract_strided_slice %37 {offsets = [0, 8], sizes = [17, 8], strides = [1, 1]} : vector<17x32xf32> to vector<17x8xf32>
    %72 = vector.extract_strided_slice %45 {offsets = [0, 8], sizes = [17, 8], strides = [1, 1]} : vector<17x32xf32> to vector<17x8xf32>
    %73 = vector.extract_strided_slice %53 {offsets = [0, 8], sizes = [17, 8], strides = [1, 1]} : vector<17x32xf32> to vector<17x8xf32>
    %cst_39 = arith.constant dense<0.000000e+00> : vector<17x17xf32>
    %74 = tpu.matmul %71, %72, %cst_39 {dimension_numbers = #tpu.dot_dimension_numbers<[1], [1], [0], [0], [0, 0, 1, 0], [], []>} : vector<17x8xf32>, vector<17x8xf32>, vector<17x17xf32> -> vector<17x17xf32>
    %cst_40 = arith.constant 0.353553385 : f32
    %75 = vector.broadcast %cst_40 : f32 to vector<17x17xf32>
    %76 = arith.mulf %74, %75 : vector<17x17xf32>
    %cst_41 = arith.constant dense<0xFF800000> : vector<17xf32>
    %77 = vector.multi_reduction <maximumf>, %76, %cst_41 [1] : vector<17x17xf32> to vector<17xf32>
    %78 = vector.shape_cast %77 : vector<17xf32> to vector<17x1xf32>
    %79 = vector.broadcast %78 : vector<17x1xf32> to vector<17x17xf32>
    %80 = arith.subf %76, %79 : vector<17x17xf32>
    %81 = math.exp %80 : vector<17x17xf32>
    %cst_42 = arith.constant dense<0.000000e+00> : vector<17xf32>
    %82 = vector.multi_reduction <add>, %81, %cst_42 [1] : vector<17x17xf32> to vector<17xf32>
    %83 = vector.shape_cast %82 : vector<17xf32> to vector<17x1xf32>
    %84 = tpu.reciprocal %83 {approx = true} : vector<17x1xf32> -> vector<17x1xf32>
    %85 = vector.broadcast %84 : vector<17x1xf32> to vector<17x17xf32>
    %86 = arith.mulf %81, %85 : vector<17x17xf32>
    %cst_43 = arith.constant dense<0.000000e+00> : vector<17x8xf32>
    %87 = tpu.matmul %86, %73, %cst_43 {dimension_numbers = #tpu.dot_dimension_numbers<[1], [0], [0], [1], [0, 0, 1, 1], [], []>} : vector<17x17xf32>, vector<17x8xf32>, vector<17x8xf32> -> vector<17x8xf32>
    %88 = vector.extract_strided_slice %37 {offsets = [0, 16], sizes = [17, 8], strides = [1, 1]} : vector<17x32xf32> to vector<17x8xf32>
    %89 = vector.extract_strided_slice %45 {offsets = [0, 16], sizes = [17, 8], strides = [1, 1]} : vector<17x32xf32> to vector<17x8xf32>
    %90 = vector.extract_strided_slice %53 {offsets = [0, 16], sizes = [17, 8], strides = [1, 1]} : vector<17x32xf32> to vector<17x8xf32>
    %cst_44 = arith.constant dense<0.000000e+00> : vector<17x17xf32>
    %91 = tpu.matmul %88, %89, %cst_44 {dimension_numbers = #tpu.dot_dimension_numbers<[1], [1], [0], [0], [0, 0, 1, 0], [], []>} : vector<17x8xf32>, vector<17x8xf32>, vector<17x17xf32> -> vector<17x17xf32>
    %cst_45 = arith.constant 0.353553385 : f32
    %92 = vector.broadcast %cst_45 : f32 to vector<17x17xf32>
    %93 = arith.mulf %91, %92 : vector<17x17xf32>
    %cst_46 = arith.constant dense<0xFF800000> : vector<17xf32>
    %94 = vector.multi_reduction <maximumf>, %93, %cst_46 [1] : vector<17x17xf32> to vector<17xf32>
    %95 = vector.shape_cast %94 : vector<17xf32> to vector<17x1xf32>
    %96 = vector.broadcast %95 : vector<17x1xf32> to vector<17x17xf32>
    %97 = arith.subf %93, %96 : vector<17x17xf32>
    %98 = math.exp %97 : vector<17x17xf32>
    %cst_47 = arith.constant dense<0.000000e+00> : vector<17xf32>
    %99 = vector.multi_reduction <add>, %98, %cst_47 [1] : vector<17x17xf32> to vector<17xf32>
    %100 = vector.shape_cast %99 : vector<17xf32> to vector<17x1xf32>
    %101 = tpu.reciprocal %100 {approx = true} : vector<17x1xf32> -> vector<17x1xf32>
    %102 = vector.broadcast %101 : vector<17x1xf32> to vector<17x17xf32>
    %103 = arith.mulf %98, %102 : vector<17x17xf32>
    %cst_48 = arith.constant dense<0.000000e+00> : vector<17x8xf32>
    %104 = tpu.matmul %103, %90, %cst_48 {dimension_numbers = #tpu.dot_dimension_numbers<[1], [0], [0], [1], [0, 0, 1, 1], [], []>} : vector<17x17xf32>, vector<17x8xf32>, vector<17x8xf32> -> vector<17x8xf32>
    %105 = vector.extract_strided_slice %37 {offsets = [0, 24], sizes = [17, 8], strides = [1, 1]} : vector<17x32xf32> to vector<17x8xf32>
    %106 = vector.extract_strided_slice %45 {offsets = [0, 24], sizes = [17, 8], strides = [1, 1]} : vector<17x32xf32> to vector<17x8xf32>
    %107 = vector.extract_strided_slice %53 {offsets = [0, 24], sizes = [17, 8], strides = [1, 1]} : vector<17x32xf32> to vector<17x8xf32>
    %cst_49 = arith.constant dense<0.000000e+00> : vector<17x17xf32>
    %108 = tpu.matmul %105, %106, %cst_49 {dimension_numbers = #tpu.dot_dimension_numbers<[1], [1], [0], [0], [0, 0, 1, 0], [], []>} : vector<17x8xf32>, vector<17x8xf32>, vector<17x17xf32> -> vector<17x17xf32>
    %cst_50 = arith.constant 0.353553385 : f32
    %109 = vector.broadcast %cst_50 : f32 to vector<17x17xf32>
    %110 = arith.mulf %108, %109 : vector<17x17xf32>
    %cst_51 = arith.constant dense<0xFF800000> : vector<17xf32>
    %111 = vector.multi_reduction <maximumf>, %110, %cst_51 [1] : vector<17x17xf32> to vector<17xf32>
    %112 = vector.shape_cast %111 : vector<17xf32> to vector<17x1xf32>
    %113 = vector.broadcast %112 : vector<17x1xf32> to vector<17x17xf32>
    %114 = arith.subf %110, %113 : vector<17x17xf32>
    %115 = math.exp %114 : vector<17x17xf32>
    %cst_52 = arith.constant dense<0.000000e+00> : vector<17xf32>
    %116 = vector.multi_reduction <add>, %115, %cst_52 [1] : vector<17x17xf32> to vector<17xf32>
    %117 = vector.shape_cast %116 : vector<17xf32> to vector<17x1xf32>
    %118 = tpu.reciprocal %117 {approx = true} : vector<17x1xf32> -> vector<17x1xf32>
    %119 = vector.broadcast %118 : vector<17x1xf32> to vector<17x17xf32>
    %120 = arith.mulf %115, %119 : vector<17x17xf32>
    %cst_53 = arith.constant dense<0.000000e+00> : vector<17x8xf32>
    %121 = tpu.matmul %120, %107, %cst_53 {dimension_numbers = #tpu.dot_dimension_numbers<[1], [0], [0], [1], [0, 0, 1, 1], [], []>} : vector<17x17xf32>, vector<17x8xf32>, vector<17x8xf32> -> vector<17x8xf32>
    %122 = tpu.concatenate %70, %87, %104, %121 in 1 : vector<17x8xf32>, vector<17x8xf32>, vector<17x8xf32>, vector<17x8xf32> -> vector<17x32xf32>
    %123 = arith.truncf %122 : vector<17x32xf32> to vector<17x32xbf16>
    %c0_54 = arith.constant 0 : index
    %c0_55 = arith.constant 0 : index
    %c0_56 = arith.constant 0 : index
    %124 = vector.load %arg12[%c0_54, %c0_55, %c0_56] : memref<1x32x32xf32, #tpu.memory_space<vmem>>, vector<1x32x32xf32>
    %125 = vector.shape_cast %124 : vector<1x32x32xf32> to vector<32x32xf32>
    %126 = arith.truncf %125 : vector<32x32xf32> to vector<32x32xbf16>
    %cst_57 = arith.constant dense<0.000000e+00> : vector<17x32xf32>
    %127 = tpu.matmul %123, %126, %cst_57 {dimension_numbers = #tpu.dot_dimension_numbers<[1], [0], [0], [1], [0, 0, 1, 1], [], []>} : vector<17x32xbf16>, vector<32x32xbf16>, vector<17x32xf32> -> vector<17x32xf32>
    %c0_58 = arith.constant 0 : index
    %c0_59 = arith.constant 0 : index
    %c0_60 = arith.constant 0 : index
    %128 = vector.load %arg13[%c0_58, %c0_59, %c0_60] : memref<1x1x32xf32, #tpu.memory_space<vmem>>, vector<1x1x32xf32>
    %129 = vector.shape_cast %128 : vector<1x1x32xf32> to vector<1x32xf32>
    %130 = vector.broadcast %129 : vector<1x32xf32> to vector<17x32xf32>
    %131 = arith.addf %127, %130 : vector<17x32xf32>
    %132 = arith.addf %4, %131 : vector<17x32xf32>
    %c0_61 = arith.constant 0 : index
    %c0_62 = arith.constant 0 : index
    %c0_63 = arith.constant 0 : index
    %133 = vector.load %arg14[%c0_61, %c0_62, %c0_63] : memref<1x1x32xf32, #tpu.memory_space<vmem>>, vector<1x1x32xf32>
    %134 = vector.shape_cast %133 : vector<1x1x32xf32> to vector<1x32xf32>
    %c0_64 = arith.constant 0 : index
    %c0_65 = arith.constant 0 : index
    %c0_66 = arith.constant 0 : index
    %135 = vector.load %arg15[%c0_64, %c0_65, %c0_66] : memref<1x1x32xf32, #tpu.memory_space<vmem>>, vector<1x1x32xf32>
    %136 = vector.shape_cast %135 : vector<1x1x32xf32> to vector<1x32xf32>
    %cst_67 = arith.constant dense<0.000000e+00> : vector<17xf32>
    %137 = vector.multi_reduction <add>, %132, %cst_67 [1] : vector<17x32xf32> to vector<17xf32>
    %138 = vector.shape_cast %137 : vector<17xf32> to vector<17x1xf32>
    %cst_68 = arith.constant 3.200000e+01 : f32
    %139 = vector.broadcast %cst_68 : f32 to vector<17x1xf32>
    %140 = arith.divf %138, %139 : vector<17x1xf32>
    %141 = vector.broadcast %140 : vector<17x1xf32> to vector<17x32xf32>
    %142 = arith.subf %132, %141 : vector<17x32xf32>
    %143 = arith.mulf %142, %142 : vector<17x32xf32>
    %cst_69 = arith.constant dense<0.000000e+00> : vector<17xf32>
    %144 = vector.multi_reduction <add>, %143, %cst_69 [1] : vector<17x32xf32> to vector<17xf32>
    %145 = vector.shape_cast %144 : vector<17xf32> to vector<17x1xf32>
    %cst_70 = arith.constant 3.200000e+01 : f32
    %146 = vector.broadcast %cst_70 : f32 to vector<17x1xf32>
    %147 = arith.divf %145, %146 : vector<17x1xf32>
    %cst_71 = arith.constant 9.99999974E-6 : f32
    %148 = vector.broadcast %cst_71 : f32 to vector<17x1xf32>
    %149 = arith.addf %147, %148 : vector<17x1xf32>
    %150 = math.rsqrt %149 : vector<17x1xf32>
    %151 = vector.broadcast %150 : vector<17x1xf32> to vector<17x32xf32>
    %152 = arith.mulf %142, %151 : vector<17x32xf32>
    %153 = vector.broadcast %134 : vector<1x32xf32> to vector<17x32xf32>
    %154 = arith.mulf %152, %153 : vector<17x32xf32>
    %155 = vector.broadcast %136 : vector<1x32xf32> to vector<17x32xf32>
    %156 = arith.addf %154, %155 : vector<17x32xf32>
    %157 = arith.truncf %156 : vector<17x32xf32> to vector<17x32xbf16>
    %c0_72 = arith.constant 0 : index
    %c0_73 = arith.constant 0 : index
    %c0_74 = arith.constant 0 : index
    %158 = vector.load %arg16[%c0_72, %c0_73, %c0_74] : memref<1x32x128xf32, #tpu.memory_space<vmem>>, vector<1x32x128xf32>
    %159 = vector.shape_cast %158 : vector<1x32x128xf32> to vector<32x128xf32>
    %160 = arith.truncf %159 : vector<32x128xf32> to vector<32x128xbf16>
    %cst_75 = arith.constant dense<0.000000e+00> : vector<17x128xf32>
    %161 = tpu.matmul %157, %160, %cst_75 {dimension_numbers = #tpu.dot_dimension_numbers<[1], [0], [0], [1], [0, 0, 1, 1], [], []>} : vector<17x32xbf16>, vector<32x128xbf16>, vector<17x128xf32> -> vector<17x128xf32>
    %c0_76 = arith.constant 0 : index
    %c0_77 = arith.constant 0 : index
    %c0_78 = arith.constant 0 : index
    %162 = vector.load %arg17[%c0_76, %c0_77, %c0_78] : memref<1x1x128xf32, #tpu.memory_space<vmem>>, vector<1x1x128xf32>
    %163 = vector.shape_cast %162 : vector<1x1x128xf32> to vector<1x128xf32>
    %164 = vector.broadcast %163 : vector<1x128xf32> to vector<17x128xf32>
    %165 = arith.addf %161, %164 : vector<17x128xf32>
    %166 = arith.mulf %165, %165 : vector<17x128xf32>
    %167 = arith.mulf %165, %166 : vector<17x128xf32>
    %cst_79 = arith.constant 4.471500e-02 : f32
    %168 = vector.broadcast %cst_79 : f32 to vector<17x128xf32>
    %169 = arith.mulf %168, %167 : vector<17x128xf32>
    %170 = arith.addf %165, %169 : vector<17x128xf32>
    %cst_80 = arith.constant 0.797884583 : f32
    %171 = vector.broadcast %cst_80 : f32 to vector<17x128xf32>
    %172 = arith.mulf %171, %170 : vector<17x128xf32>
    %173 = math.tanh %172 : vector<17x128xf32>
    %cst_81 = arith.constant 1.000000e+00 : f32
    %174 = vector.broadcast %cst_81 : f32 to vector<17x128xf32>
    %175 = arith.addf %174, %173 : vector<17x128xf32>
    %cst_82 = arith.constant 5.000000e-01 : f32
    %176 = vector.broadcast %cst_82 : f32 to vector<17x128xf32>
    %177 = arith.mulf %176, %175 : vector<17x128xf32>
    %178 = arith.mulf %165, %177 : vector<17x128xf32>
    %179 = arith.truncf %178 : vector<17x128xf32> to vector<17x128xbf16>
    %c0_83 = arith.constant 0 : index
    %c0_84 = arith.constant 0 : index
    %c0_85 = arith.constant 0 : index
    %180 = vector.load %arg18[%c0_83, %c0_84, %c0_85] : memref<1x128x32xf32, #tpu.memory_space<vmem>>, vector<1x128x32xf32>
    %181 = vector.shape_cast %180 : vector<1x128x32xf32> to vector<128x32xf32>
    %182 = arith.truncf %181 : vector<128x32xf32> to vector<128x32xbf16>
    %cst_86 = arith.constant dense<0.000000e+00> : vector<17x32xf32>
    %183 = tpu.matmul %179, %182, %cst_86 {dimension_numbers = #tpu.dot_dimension_numbers<[1], [0], [0], [1], [0, 0, 1, 1], [], []>} : vector<17x128xbf16>, vector<128x32xbf16>, vector<17x32xf32> -> vector<17x32xf32>
    %c0_87 = arith.constant 0 : index
    %c0_88 = arith.constant 0 : index
    %c0_89 = arith.constant 0 : index
    %184 = vector.load %arg19[%c0_87, %c0_88, %c0_89] : memref<1x1x32xf32, #tpu.memory_space<vmem>>, vector<1x1x32xf32>
    %185 = vector.shape_cast %184 : vector<1x1x32xf32> to vector<1x32xf32>
    %186 = vector.broadcast %185 : vector<1x32xf32> to vector<17x32xf32>
    %187 = arith.addf %183, %186 : vector<17x32xf32>
    %188 = arith.addf %132, %187 : vector<17x32xf32>
    %c0_90 = arith.constant 0 : index
    %c0_91 = arith.constant 0 : index
    %c0_92 = arith.constant 0 : index
    %189 = vector.load %arg20[%c0_90, %c0_91, %c0_92] : memref<1x17x32xf32, #tpu.memory_space<vmem>>, vector<1x17x32xf32>
    %190 = vector.shape_cast %189 : vector<1x17x32xf32> to vector<17x32xf32>
    %191 = vector.shape_cast %188 : vector<17x32xf32> to vector<1x17x32xf32>
    tpu.vector_store %arg20[%c0_90, %c0_91, %c0_92], %191 {strides = array<i32>} : memref<1x17x32xf32, #tpu.memory_space<vmem>>, vector<1x17x32xf32>,
    return
  }
  func.func @transform_0(%arg0: i32, %arg1: i32) -> (i32, i32, i32) {
    %c0_i32 = arith.constant 0 : i32
    %c0_i32_0 = arith.constant 0 : i32
    %c0_i32_1 = arith.constant 0 : i32
    return %arg0, %c0_i32, %c0_i32_0 : i32, i32, i32
  }
  func.func @transform_1(%arg0: i32, %arg1: i32) -> (i32, i32) {
    %c0_i32 = arith.constant 0 : i32
    %c0_i32_0 = arith.constant 0 : i32
    %c0_i32_1 = arith.constant 0 : i32
    return %c0_i32, %c0_i32_0 : i32, i32
  }
  func.func @transform_2(%arg0: i32, %arg1: i32) -> (i32, i32, i32) {
    %c0_i32 = arith.constant 0 : i32
    %c0_i32_0 = arith.constant 0 : i32
    %c0_i32_1 = arith.constant 0 : i32
    return %arg1, %c0_i32, %c0_i32_0 : i32, i32, i32
  }
  func.func @transform_3(%arg0: i32, %arg1: i32) -> (i32, i32, i32) {
    %c0_i32 = arith.constant 0 : i32
    %c0_i32_0 = arith.constant 0 : i32
    %c0_i32_1 = arith.constant 0 : i32
    return %arg1, %c0_i32, %c0_i32_0 : i32, i32, i32
  }
  func.func @transform_4(%arg0: i32, %arg1: i32) -> (i32, i32, i32) {
    %c0_i32 = arith.constant 0 : i32
    %c0_i32_0 = arith.constant 0 : i32
    %c0_i32_1 = arith.constant 0 : i32
    return %arg1, %c0_i32, %c0_i32_0 : i32, i32, i32
  }
  func.func @transform_5(%arg0: i32, %arg1: i32) -> (i32, i32, i32) {
    %c0_i32 = arith.constant 0 : i32
    %c0_i32_0 = arith.constant 0 : i32
    %c0_i32_1 = arith.constant 0 : i32
    return %arg1, %c0_i32, %c0_i32_0 : i32, i32, i32
  }
  func.func @transform_6(%arg0: i32, %arg1: i32) -> (i32, i32, i32) {
    %c0_i32 = arith.constant 0 : i32
    %c0_i32_0 = arith.constant 0 : i32
    %c0_i32_1 = arith.constant 0 : i32
    return %arg1, %c0_i32, %c0_i32_0 : i32, i32, i32
  }
  func.func @transform_7(%arg0: i32, %arg1: i32) -> (i32, i32, i32) {
    %c0_i32 = arith.constant 0 : i32
    %c0_i32_0 = arith.constant 0 : i32
    %c0_i32_1 = arith.constant 0 : i32
    return %arg1, %c0_i32, %c0_i32_0 : i32, i32, i32
  }
  func.func @transform_8(%arg0: i32, %arg1: i32) -> (i32, i32, i32) {
    %c0_i32 = arith.constant 0 : i32
    %c0_i32_0 = arith.constant 0 : i32
    %c0_i32_1 = arith.constant 0 : i32
    return %arg1, %c0_i32, %c0_i32_0 : i32, i32, i32
  }
  func.func @transform_9(%arg0: i32, %arg1: i32) -> (i32, i32, i32) {
    %c0_i32 = arith.constant 0 : i32
    %c0_i32_0 = arith.constant 0 : i32
    %c0_i32_1 = arith.constant 0 : i32
    return %arg1, %c0_i32, %c0_i32_0 : i32, i32, i32
  }
  func.func @transform_10(%arg0: i32, %arg1: i32) -> (i32, i32, i32) {
    %c0_i32 = arith.constant 0 : i32
    %c0_i32_0 = arith.constant 0 : i32
    %c0_i32_1 = arith.constant 0 : i32
    return %arg1, %c0_i32, %c0_i32_0 : i32, i32, i32
  }
  func.func @transform_11(%arg0: i32, %arg1: i32) -> (i32, i32, i32) {
    %c0_i32 = arith.constant 0 : i32
    %c0_i32_0 = arith.constant 0 : i32
    %c0_i32_1 = arith.constant 0 : i32
    return %arg1, %c0_i32, %c0_i32_0 : i32, i32, i32
  }
  func.func @transform_12(%arg0: i32, %arg1: i32) -> (i32, i32, i32) {
    %c0_i32 = arith.constant 0 : i32
    %c0_i32_0 = arith.constant 0 : i32
    %c0_i32_1 = arith.constant 0 : i32
    return %arg1, %c0_i32, %c0_i32_0 : i32, i32, i32
  }
  func.func @transform_13(%arg0: i32, %arg1: i32) -> (i32, i32, i32) {
    %c0_i32 = arith.constant 0 : i32
    %c0_i32_0 = arith.constant 0 : i32
    %c0_i32_1 = arith.constant 0 : i32
    return %arg1, %c0_i32, %c0_i32_0 : i32, i32, i32
  }
  func.func @transform_14(%arg0: i32, %arg1: i32) -> (i32, i32, i32) {
    %c0_i32 = arith.constant 0 : i32
    %c0_i32_0 = arith.constant 0 : i32
    %c0_i32_1 = arith.constant 0 : i32
    return %arg1, %c0_i32, %c0_i32_0 : i32, i32, i32
  }
  func.func @transform_15(%arg0: i32, %arg1: i32) -> (i32, i32, i32) {
    %c0_i32 = arith.constant 0 : i32
    %c0_i32_0 = arith.constant 0 : i32
    %c0_i32_1 = arith.constant 0 : i32
    return %arg1, %c0_i32, %c0_i32_0 : i32, i32, i32
  }
  func.func @transform_16(%arg0: i32, %arg1: i32) -> (i32, i32, i32) {
    %c0_i32 = arith.constant 0 : i32
    %c0_i32_0 = arith.constant 0 : i32
    %c0_i32_1 = arith.constant 0 : i32
    return %arg1, %c0_i32, %c0_i32_0 : i32, i32, i32
  }
  func.func @transform_17(%arg0: i32, %arg1: i32) -> (i32, i32, i32) {
    %c0_i32 = arith.constant 0 : i32
    %c0_i32_0 = arith.constant 0 : i32
    %c0_i32_1 = arith.constant 0 : i32
    return %arg1, %c0_i32, %c0_i32_0 : i32, i32, i32
  }
  func.func @transform_18(%arg0: i32, %arg1: i32) -> (i32, i32, i32) {
    %c0_i32 = arith.constant 0 : i32
    %c0_i32_0 = arith.constant 0 : i32
    %c0_i32_1 = arith.constant 0 : i32
    return %arg0, %c0_i32, %c0_i32_0 : i32, i32, i32
  }
}

module attributes {stable_mosaic.version = 11 : i64} {
  func.func @tower_kernel(%arg0: i32, %arg1: i32, %arg2: memref<1x8x32xf32, #tpu.memory_space<vmem>>, %arg3: memref<8x32xf32, #tpu.memory_space<vmem>>, %arg4: memref<1x1x32xf32, #tpu.memory_space<vmem>>, %arg5: memref<1x1x32xf32, #tpu.memory_space<vmem>>, %arg6: memref<1x32x32xf32, #tpu.memory_space<vmem>>, %arg7: memref<1x32x32xf32, #tpu.memory_space<vmem>>, %arg8: memref<1x32x32xf32, #tpu.memory_space<vmem>>, %arg9: memref<1x1x32xf32, #tpu.memory_space<vmem>>, %arg10: memref<1x1x32xf32, #tpu.memory_space<vmem>>, %arg11: memref<1x1x32xf32, #tpu.memory_space<vmem>>, %arg12: memref<1x32x32xf32, #tpu.memory_space<vmem>>, %arg13: memref<1x1x32xf32, #tpu.memory_space<vmem>>, %arg14: memref<1x1x32xf32, #tpu.memory_space<vmem>>, %arg15: memref<1x1x32xf32, #tpu.memory_space<vmem>>, %arg16: memref<1x32x128xf32, #tpu.memory_space<vmem>>, %arg17: memref<1x1x128xf32, #tpu.memory_space<vmem>>, %arg18: memref<1x128x32xf32, #tpu.memory_space<vmem>>, %arg19: memref<1x1x32xf32, #tpu.memory_space<vmem>>, %arg20: memref<1x8x32xf32, #tpu.memory_space<vmem>>) attributes {dimension_semantics = [#tpu.dimension_semantics<parallel>, #tpu.dimension_semantics<arbitrary>], iteration_bounds = array<i64: 2, 2>, scalar_prefetch = 0 : i64, scratch_operands = 0 : i64, tpu.core_type = #tpu.core_type<tc>, window_params = [{transform_indices = @transform_0, window_bounds = array<i64: 1, 8, 32>}, {pipeline_mode = #tpu.pipeline_mode<synchronous>, transform_indices = @transform_1, window_bounds = array<i64: 8, 32>}, {transform_indices = @transform_2, window_bounds = array<i64: 1, 1, 32>}, {transform_indices = @transform_3, window_bounds = array<i64: 1, 1, 32>}, {transform_indices = @transform_4, window_bounds = array<i64: 1, 32, 32>}, {transform_indices = @transform_5, window_bounds = array<i64: 1, 32, 32>}, {transform_indices = @transform_6, window_bounds = array<i64: 1, 32, 32>}, {transform_indices = @transform_7, window_bounds = array<i64: 1, 1, 32>}, {transform_indices = @transform_8, window_bounds = array<i64: 1, 1, 32>}, {transform_indices = @transform_9, window_bounds = array<i64: 1, 1, 32>}, {transform_indices = @transform_10, window_bounds = array<i64: 1, 32, 32>}, {transform_indices = @transform_11, window_bounds = array<i64: 1, 1, 32>}, {transform_indices = @transform_12, window_bounds = array<i64: 1, 1, 32>}, {transform_indices = @transform_13, window_bounds = array<i64: 1, 1, 32>}, {transform_indices = @transform_14, window_bounds = array<i64: 1, 32, 128>}, {transform_indices = @transform_15, window_bounds = array<i64: 1, 1, 128>}, {transform_indices = @transform_16, window_bounds = array<i64: 1, 128, 32>}, {transform_indices = @transform_17, window_bounds = array<i64: 1, 1, 32>}, {transform_indices = @transform_18, window_bounds = array<i64: 1, 8, 32>}]} {
    %c0_i32 = arith.constant 0 : i32
    %0 = arith.cmpi eq, %arg1, %c0_i32 : i32
    %1 = arith.extui %0 : i1 to i32
    %c0_i32_0 = arith.constant 0 : i32
    %2 = arith.cmpi ne, %1, %c0_i32_0 : i32
    scf.if %2 {
      %c0_97 = arith.constant 0 : index
      %c0_98 = arith.constant 0 : index
      %c0_99 = arith.constant 0 : index
      %203 = vector.load %arg2[%c0_97, %c0_98, %c0_99] : memref<1x8x32xf32, #tpu.memory_space<vmem>>, vector<1x8x32xf32>
      %204 = vector.shape_cast %203 : vector<1x8x32xf32> to vector<8x32xf32>
      %c0_100 = arith.constant 0 : index
      %c0_101 = arith.constant 0 : index
      %205 = vector.load %arg3[%c0_100, %c0_101] : memref<8x32xf32, #tpu.memory_space<vmem>>, vector<8x32xf32>
      %206 = arith.addf %204, %205 : vector<8x32xf32>
      %c0_102 = arith.constant 0 : index
      %c0_103 = arith.constant 0 : index
      %c0_104 = arith.constant 0 : index
      %207 = vector.load %arg20[%c0_102, %c0_103, %c0_104] : memref<1x8x32xf32, #tpu.memory_space<vmem>>, vector<1x8x32xf32>
      %208 = vector.shape_cast %207 : vector<1x8x32xf32> to vector<8x32xf32>
      %209 = vector.shape_cast %206 : vector<8x32xf32> to vector<1x8x32xf32>
      tpu.vector_store %arg20[%c0_102, %c0_103, %c0_104], %209 {strides = array<i32>} : memref<1x8x32xf32, #tpu.memory_space<vmem>>, vector<1x8x32xf32>,
    } else {
    }
    %c0 = arith.constant 0 : index
    %c0_1 = arith.constant 0 : index
    %c0_2 = arith.constant 0 : index
    %3 = vector.load %arg20[%c0, %c0_1, %c0_2] : memref<1x8x32xf32, #tpu.memory_space<vmem>>, vector<1x8x32xf32>
    %4 = vector.shape_cast %3 : vector<1x8x32xf32> to vector<8x32xf32>
    %5 = tpu.iota {dimensions = array<i32: 0>} : vector<8x8xi32>
    %6 = tpu.iota {dimensions = array<i32: 1>} : vector<8x8xi32>
    %7 = arith.cmpi sle, %6, %5 : vector<8x8xi32>
    %c0_3 = arith.constant 0 : index
    %c0_4 = arith.constant 0 : index
    %c0_5 = arith.constant 0 : index
    %8 = vector.load %arg4[%c0_3, %c0_4, %c0_5] : memref<1x1x32xf32, #tpu.memory_space<vmem>>, vector<1x1x32xf32>
    %9 = vector.shape_cast %8 : vector<1x1x32xf32> to vector<1x32xf32>
    %c0_6 = arith.constant 0 : index
    %c0_7 = arith.constant 0 : index
    %c0_8 = arith.constant 0 : index
    %10 = vector.load %arg5[%c0_6, %c0_7, %c0_8] : memref<1x1x32xf32, #tpu.memory_space<vmem>>, vector<1x1x32xf32>
    %11 = vector.shape_cast %10 : vector<1x1x32xf32> to vector<1x32xf32>
    %cst = arith.constant dense<0.000000e+00> : vector<8xf32>
    %12 = vector.multi_reduction <add>, %4, %cst [1] : vector<8x32xf32> to vector<8xf32>
    %13 = vector.shape_cast %12 : vector<8xf32> to vector<8x1xf32>
    %cst_9 = arith.constant 3.200000e+01 : f32
    %14 = vector.broadcast %cst_9 : f32 to vector<8x1xf32>
    %15 = arith.divf %13, %14 : vector<8x1xf32>
    %16 = vector.broadcast %15 : vector<8x1xf32> to vector<8x32xf32>
    %17 = arith.subf %4, %16 : vector<8x32xf32>
    %18 = arith.mulf %17, %17 : vector<8x32xf32>
    %cst_10 = arith.constant dense<0.000000e+00> : vector<8xf32>
    %19 = vector.multi_reduction <add>, %18, %cst_10 [1] : vector<8x32xf32> to vector<8xf32>
    %20 = vector.shape_cast %19 : vector<8xf32> to vector<8x1xf32>
    %cst_11 = arith.constant 3.200000e+01 : f32
    %21 = vector.broadcast %cst_11 : f32 to vector<8x1xf32>
    %22 = arith.divf %20, %21 : vector<8x1xf32>
    %cst_12 = arith.constant 9.99999974E-6 : f32
    %23 = vector.broadcast %cst_12 : f32 to vector<8x1xf32>
    %24 = arith.addf %22, %23 : vector<8x1xf32>
    %25 = math.rsqrt %24 : vector<8x1xf32>
    %26 = vector.broadcast %25 : vector<8x1xf32> to vector<8x32xf32>
    %27 = arith.mulf %17, %26 : vector<8x32xf32>
    %28 = vector.broadcast %9 : vector<1x32xf32> to vector<8x32xf32>
    %29 = arith.mulf %27, %28 : vector<8x32xf32>
    %30 = vector.broadcast %11 : vector<1x32xf32> to vector<8x32xf32>
    %31 = arith.addf %29, %30 : vector<8x32xf32>
    %32 = arith.truncf %31 : vector<8x32xf32> to vector<8x32xbf16>
    %c0_13 = arith.constant 0 : index
    %c0_14 = arith.constant 0 : index
    %c0_15 = arith.constant 0 : index
    %33 = vector.load %arg6[%c0_13, %c0_14, %c0_15] : memref<1x32x32xf32, #tpu.memory_space<vmem>>, vector<1x32x32xf32>
    %34 = vector.shape_cast %33 : vector<1x32x32xf32> to vector<32x32xf32>
    %35 = arith.truncf %34 : vector<32x32xf32> to vector<32x32xbf16>
    %cst_16 = arith.constant dense<0.000000e+00> : vector<8x32xf32>
    %36 = tpu.matmul %32, %35, %cst_16 {dimension_numbers = #tpu.dot_dimension_numbers<[1], [0], [0], [1], [0, 0, 1, 1], [], []>} : vector<8x32xbf16>, vector<32x32xbf16>, vector<8x32xf32> -> vector<8x32xf32>
    %c0_17 = arith.constant 0 : index
    %c0_18 = arith.constant 0 : index
    %c0_19 = arith.constant 0 : index
    %37 = vector.load %arg9[%c0_17, %c0_18, %c0_19] : memref<1x1x32xf32, #tpu.memory_space<vmem>>, vector<1x1x32xf32>
    %38 = vector.shape_cast %37 : vector<1x1x32xf32> to vector<1x32xf32>
    %39 = vector.broadcast %38 : vector<1x32xf32> to vector<8x32xf32>
    %40 = arith.addf %36, %39 : vector<8x32xf32>
    %c0_20 = arith.constant 0 : index
    %c0_21 = arith.constant 0 : index
    %c0_22 = arith.constant 0 : index
    %41 = vector.load %arg7[%c0_20, %c0_21, %c0_22] : memref<1x32x32xf32, #tpu.memory_space<vmem>>, vector<1x32x32xf32>
    %42 = vector.shape_cast %41 : vector<1x32x32xf32> to vector<32x32xf32>
    %43 = arith.truncf %42 : vector<32x32xf32> to vector<32x32xbf16>
    %cst_23 = arith.constant dense<0.000000e+00> : vector<8x32xf32>
    %44 = tpu.matmul %32, %43, %cst_23 {dimension_numbers = #tpu.dot_dimension_numbers<[1], [0], [0], [1], [0, 0, 1, 1], [], []>} : vector<8x32xbf16>, vector<32x32xbf16>, vector<8x32xf32> -> vector<8x32xf32>
    %c0_24 = arith.constant 0 : index
    %c0_25 = arith.constant 0 : index
    %c0_26 = arith.constant 0 : index
    %45 = vector.load %arg10[%c0_24, %c0_25, %c0_26] : memref<1x1x32xf32, #tpu.memory_space<vmem>>, vector<1x1x32xf32>
    %46 = vector.shape_cast %45 : vector<1x1x32xf32> to vector<1x32xf32>
    %47 = vector.broadcast %46 : vector<1x32xf32> to vector<8x32xf32>
    %48 = arith.addf %44, %47 : vector<8x32xf32>
    %c0_27 = arith.constant 0 : index
    %c0_28 = arith.constant 0 : index
    %c0_29 = arith.constant 0 : index
    %49 = vector.load %arg8[%c0_27, %c0_28, %c0_29] : memref<1x32x32xf32, #tpu.memory_space<vmem>>, vector<1x32x32xf32>
    %50 = vector.shape_cast %49 : vector<1x32x32xf32> to vector<32x32xf32>
    %51 = arith.truncf %50 : vector<32x32xf32> to vector<32x32xbf16>
    %cst_30 = arith.constant dense<0.000000e+00> : vector<8x32xf32>
    %52 = tpu.matmul %32, %51, %cst_30 {dimension_numbers = #tpu.dot_dimension_numbers<[1], [0], [0], [1], [0, 0, 1, 1], [], []>} : vector<8x32xbf16>, vector<32x32xbf16>, vector<8x32xf32> -> vector<8x32xf32>
    %c0_31 = arith.constant 0 : index
    %c0_32 = arith.constant 0 : index
    %c0_33 = arith.constant 0 : index
    %53 = vector.load %arg11[%c0_31, %c0_32, %c0_33] : memref<1x1x32xf32, #tpu.memory_space<vmem>>, vector<1x1x32xf32>
    %54 = vector.shape_cast %53 : vector<1x1x32xf32> to vector<1x32xf32>
    %55 = vector.broadcast %54 : vector<1x32xf32> to vector<8x32xf32>
    %56 = arith.addf %52, %55 : vector<8x32xf32>
    %57 = vector.extract_strided_slice %40 {offsets = [0, 0], sizes = [8, 8], strides = [1, 1]} : vector<8x32xf32> to vector<8x8xf32>
    %58 = vector.extract_strided_slice %48 {offsets = [0, 0], sizes = [8, 8], strides = [1, 1]} : vector<8x32xf32> to vector<8x8xf32>
    %59 = vector.extract_strided_slice %56 {offsets = [0, 0], sizes = [8, 8], strides = [1, 1]} : vector<8x32xf32> to vector<8x8xf32>
    %cst_34 = arith.constant dense<0.000000e+00> : vector<8x8xf32>
    %60 = tpu.matmul %57, %58, %cst_34 {dimension_numbers = #tpu.dot_dimension_numbers<[1], [1], [0], [0], [0, 0, 1, 0], [], []>} : vector<8x8xf32>, vector<8x8xf32>, vector<8x8xf32> -> vector<8x8xf32>
    %cst_35 = arith.constant 0.353553385 : f32
    %61 = vector.broadcast %cst_35 : f32 to vector<8x8xf32>
    %62 = arith.mulf %60, %61 : vector<8x8xf32>
    %cst_36 = arith.constant -1.000000e+30 : f32
    %63 = vector.broadcast %cst_36 : f32 to vector<8x8xf32>
    %64 = arith.select %7, %62, %63 : vector<8x8xi1>, vector<8x8xf32>
    %cst_37 = arith.constant dense<0xFF800000> : vector<8xf32>
    %65 = vector.multi_reduction <maximumf>, %64, %cst_37 [1] : vector<8x8xf32> to vector<8xf32>
    %66 = vector.shape_cast %65 : vector<8xf32> to vector<8x1xf32>
    %67 = vector.broadcast %66 : vector<8x1xf32> to vector<8x8xf32>
    %68 = arith.subf %64, %67 : vector<8x8xf32>
    %69 = math.exp %68 : vector<8x8xf32>
    %cst_38 = arith.constant dense<0.000000e+00> : vector<8xf32>
    %70 = vector.multi_reduction <add>, %69, %cst_38 [1] : vector<8x8xf32> to vector<8xf32>
    %71 = vector.shape_cast %70 : vector<8xf32> to vector<8x1xf32>
    %72 = tpu.reciprocal %71 {approx = true} : vector<8x1xf32> -> vector<8x1xf32>
    %73 = vector.broadcast %72 : vector<8x1xf32> to vector<8x8xf32>
    %74 = arith.mulf %69, %73 : vector<8x8xf32>
    %cst_39 = arith.constant dense<0.000000e+00> : vector<8x8xf32>
    %75 = tpu.matmul %74, %59, %cst_39 {dimension_numbers = #tpu.dot_dimension_numbers<[1], [0], [0], [1], [0, 0, 1, 1], [], []>} : vector<8x8xf32>, vector<8x8xf32>, vector<8x8xf32> -> vector<8x8xf32>
    %76 = vector.extract_strided_slice %40 {offsets = [0, 8], sizes = [8, 8], strides = [1, 1]} : vector<8x32xf32> to vector<8x8xf32>
    %77 = vector.extract_strided_slice %48 {offsets = [0, 8], sizes = [8, 8], strides = [1, 1]} : vector<8x32xf32> to vector<8x8xf32>
    %78 = vector.extract_strided_slice %56 {offsets = [0, 8], sizes = [8, 8], strides = [1, 1]} : vector<8x32xf32> to vector<8x8xf32>
    %cst_40 = arith.constant dense<0.000000e+00> : vector<8x8xf32>
    %79 = tpu.matmul %76, %77, %cst_40 {dimension_numbers = #tpu.dot_dimension_numbers<[1], [1], [0], [0], [0, 0, 1, 0], [], []>} : vector<8x8xf32>, vector<8x8xf32>, vector<8x8xf32> -> vector<8x8xf32>
    %cst_41 = arith.constant 0.353553385 : f32
    %80 = vector.broadcast %cst_41 : f32 to vector<8x8xf32>
    %81 = arith.mulf %79, %80 : vector<8x8xf32>
    %cst_42 = arith.constant -1.000000e+30 : f32
    %82 = vector.broadcast %cst_42 : f32 to vector<8x8xf32>
    %83 = arith.select %7, %81, %82 : vector<8x8xi1>, vector<8x8xf32>
    %cst_43 = arith.constant dense<0xFF800000> : vector<8xf32>
    %84 = vector.multi_reduction <maximumf>, %83, %cst_43 [1] : vector<8x8xf32> to vector<8xf32>
    %85 = vector.shape_cast %84 : vector<8xf32> to vector<8x1xf32>
    %86 = vector.broadcast %85 : vector<8x1xf32> to vector<8x8xf32>
    %87 = arith.subf %83, %86 : vector<8x8xf32>
    %88 = math.exp %87 : vector<8x8xf32>
    %cst_44 = arith.constant dense<0.000000e+00> : vector<8xf32>
    %89 = vector.multi_reduction <add>, %88, %cst_44 [1] : vector<8x8xf32> to vector<8xf32>
    %90 = vector.shape_cast %89 : vector<8xf32> to vector<8x1xf32>
    %91 = tpu.reciprocal %90 {approx = true} : vector<8x1xf32> -> vector<8x1xf32>
    %92 = vector.broadcast %91 : vector<8x1xf32> to vector<8x8xf32>
    %93 = arith.mulf %88, %92 : vector<8x8xf32>
    %cst_45 = arith.constant dense<0.000000e+00> : vector<8x8xf32>
    %94 = tpu.matmul %93, %78, %cst_45 {dimension_numbers = #tpu.dot_dimension_numbers<[1], [0], [0], [1], [0, 0, 1, 1], [], []>} : vector<8x8xf32>, vector<8x8xf32>, vector<8x8xf32> -> vector<8x8xf32>
    %95 = vector.extract_strided_slice %40 {offsets = [0, 16], sizes = [8, 8], strides = [1, 1]} : vector<8x32xf32> to vector<8x8xf32>
    %96 = vector.extract_strided_slice %48 {offsets = [0, 16], sizes = [8, 8], strides = [1, 1]} : vector<8x32xf32> to vector<8x8xf32>
    %97 = vector.extract_strided_slice %56 {offsets = [0, 16], sizes = [8, 8], strides = [1, 1]} : vector<8x32xf32> to vector<8x8xf32>
    %cst_46 = arith.constant dense<0.000000e+00> : vector<8x8xf32>
    %98 = tpu.matmul %95, %96, %cst_46 {dimension_numbers = #tpu.dot_dimension_numbers<[1], [1], [0], [0], [0, 0, 1, 0], [], []>} : vector<8x8xf32>, vector<8x8xf32>, vector<8x8xf32> -> vector<8x8xf32>
    %cst_47 = arith.constant 0.353553385 : f32
    %99 = vector.broadcast %cst_47 : f32 to vector<8x8xf32>
    %100 = arith.mulf %98, %99 : vector<8x8xf32>
    %cst_48 = arith.constant -1.000000e+30 : f32
    %101 = vector.broadcast %cst_48 : f32 to vector<8x8xf32>
    %102 = arith.select %7, %100, %101 : vector<8x8xi1>, vector<8x8xf32>
    %cst_49 = arith.constant dense<0xFF800000> : vector<8xf32>
    %103 = vector.multi_reduction <maximumf>, %102, %cst_49 [1] : vector<8x8xf32> to vector<8xf32>
    %104 = vector.shape_cast %103 : vector<8xf32> to vector<8x1xf32>
    %105 = vector.broadcast %104 : vector<8x1xf32> to vector<8x8xf32>
    %106 = arith.subf %102, %105 : vector<8x8xf32>
    %107 = math.exp %106 : vector<8x8xf32>
    %cst_50 = arith.constant dense<0.000000e+00> : vector<8xf32>
    %108 = vector.multi_reduction <add>, %107, %cst_50 [1] : vector<8x8xf32> to vector<8xf32>
    %109 = vector.shape_cast %108 : vector<8xf32> to vector<8x1xf32>
    %110 = tpu.reciprocal %109 {approx = true} : vector<8x1xf32> -> vector<8x1xf32>
    %111 = vector.broadcast %110 : vector<8x1xf32> to vector<8x8xf32>
    %112 = arith.mulf %107, %111 : vector<8x8xf32>
    %cst_51 = arith.constant dense<0.000000e+00> : vector<8x8xf32>
    %113 = tpu.matmul %112, %97, %cst_51 {dimension_numbers = #tpu.dot_dimension_numbers<[1], [0], [0], [1], [0, 0, 1, 1], [], []>} : vector<8x8xf32>, vector<8x8xf32>, vector<8x8xf32> -> vector<8x8xf32>
    %114 = vector.extract_strided_slice %40 {offsets = [0, 24], sizes = [8, 8], strides = [1, 1]} : vector<8x32xf32> to vector<8x8xf32>
    %115 = vector.extract_strided_slice %48 {offsets = [0, 24], sizes = [8, 8], strides = [1, 1]} : vector<8x32xf32> to vector<8x8xf32>
    %116 = vector.extract_strided_slice %56 {offsets = [0, 24], sizes = [8, 8], strides = [1, 1]} : vector<8x32xf32> to vector<8x8xf32>
    %cst_52 = arith.constant dense<0.000000e+00> : vector<8x8xf32>
    %117 = tpu.matmul %114, %115, %cst_52 {dimension_numbers = #tpu.dot_dimension_numbers<[1], [1], [0], [0], [0, 0, 1, 0], [], []>} : vector<8x8xf32>, vector<8x8xf32>, vector<8x8xf32> -> vector<8x8xf32>
    %cst_53 = arith.constant 0.353553385 : f32
    %118 = vector.broadcast %cst_53 : f32 to vector<8x8xf32>
    %119 = arith.mulf %117, %118 : vector<8x8xf32>
    %cst_54 = arith.constant -1.000000e+30 : f32
    %120 = vector.broadcast %cst_54 : f32 to vector<8x8xf32>
    %121 = arith.select %7, %119, %120 : vector<8x8xi1>, vector<8x8xf32>
    %cst_55 = arith.constant dense<0xFF800000> : vector<8xf32>
    %122 = vector.multi_reduction <maximumf>, %121, %cst_55 [1] : vector<8x8xf32> to vector<8xf32>
    %123 = vector.shape_cast %122 : vector<8xf32> to vector<8x1xf32>
    %124 = vector.broadcast %123 : vector<8x1xf32> to vector<8x8xf32>
    %125 = arith.subf %121, %124 : vector<8x8xf32>
    %126 = math.exp %125 : vector<8x8xf32>
    %cst_56 = arith.constant dense<0.000000e+00> : vector<8xf32>
    %127 = vector.multi_reduction <add>, %126, %cst_56 [1] : vector<8x8xf32> to vector<8xf32>
    %128 = vector.shape_cast %127 : vector<8xf32> to vector<8x1xf32>
    %129 = tpu.reciprocal %128 {approx = true} : vector<8x1xf32> -> vector<8x1xf32>
    %130 = vector.broadcast %129 : vector<8x1xf32> to vector<8x8xf32>
    %131 = arith.mulf %126, %130 : vector<8x8xf32>
    %cst_57 = arith.constant dense<0.000000e+00> : vector<8x8xf32>
    %132 = tpu.matmul %131, %116, %cst_57 {dimension_numbers = #tpu.dot_dimension_numbers<[1], [0], [0], [1], [0, 0, 1, 1], [], []>} : vector<8x8xf32>, vector<8x8xf32>, vector<8x8xf32> -> vector<8x8xf32>
    %133 = tpu.concatenate %75, %94, %113, %132 in 1 : vector<8x8xf32>, vector<8x8xf32>, vector<8x8xf32>, vector<8x8xf32> -> vector<8x32xf32>
    %134 = arith.truncf %133 : vector<8x32xf32> to vector<8x32xbf16>
    %c0_58 = arith.constant 0 : index
    %c0_59 = arith.constant 0 : index
    %c0_60 = arith.constant 0 : index
    %135 = vector.load %arg12[%c0_58, %c0_59, %c0_60] : memref<1x32x32xf32, #tpu.memory_space<vmem>>, vector<1x32x32xf32>
    %136 = vector.shape_cast %135 : vector<1x32x32xf32> to vector<32x32xf32>
    %137 = arith.truncf %136 : vector<32x32xf32> to vector<32x32xbf16>
    %cst_61 = arith.constant dense<0.000000e+00> : vector<8x32xf32>
    %138 = tpu.matmul %134, %137, %cst_61 {dimension_numbers = #tpu.dot_dimension_numbers<[1], [0], [0], [1], [0, 0, 1, 1], [], []>} : vector<8x32xbf16>, vector<32x32xbf16>, vector<8x32xf32> -> vector<8x32xf32>
    %c0_62 = arith.constant 0 : index
    %c0_63 = arith.constant 0 : index
    %c0_64 = arith.constant 0 : index
    %139 = vector.load %arg13[%c0_62, %c0_63, %c0_64] : memref<1x1x32xf32, #tpu.memory_space<vmem>>, vector<1x1x32xf32>
    %140 = vector.shape_cast %139 : vector<1x1x32xf32> to vector<1x32xf32>
    %141 = vector.broadcast %140 : vector<1x32xf32> to vector<8x32xf32>
    %142 = arith.addf %138, %141 : vector<8x32xf32>
    %143 = arith.addf %4, %142 : vector<8x32xf32>
    %c0_65 = arith.constant 0 : index
    %c0_66 = arith.constant 0 : index
    %c0_67 = arith.constant 0 : index
    %144 = vector.load %arg14[%c0_65, %c0_66, %c0_67] : memref<1x1x32xf32, #tpu.memory_space<vmem>>, vector<1x1x32xf32>
    %145 = vector.shape_cast %144 : vector<1x1x32xf32> to vector<1x32xf32>
    %c0_68 = arith.constant 0 : index
    %c0_69 = arith.constant 0 : index
    %c0_70 = arith.constant 0 : index
    %146 = vector.load %arg15[%c0_68, %c0_69, %c0_70] : memref<1x1x32xf32, #tpu.memory_space<vmem>>, vector<1x1x32xf32>
    %147 = vector.shape_cast %146 : vector<1x1x32xf32> to vector<1x32xf32>
    %cst_71 = arith.constant dense<0.000000e+00> : vector<8xf32>
    %148 = vector.multi_reduction <add>, %143, %cst_71 [1] : vector<8x32xf32> to vector<8xf32>
    %149 = vector.shape_cast %148 : vector<8xf32> to vector<8x1xf32>
    %cst_72 = arith.constant 3.200000e+01 : f32
    %150 = vector.broadcast %cst_72 : f32 to vector<8x1xf32>
    %151 = arith.divf %149, %150 : vector<8x1xf32>
    %152 = vector.broadcast %151 : vector<8x1xf32> to vector<8x32xf32>
    %153 = arith.subf %143, %152 : vector<8x32xf32>
    %154 = arith.mulf %153, %153 : vector<8x32xf32>
    %cst_73 = arith.constant dense<0.000000e+00> : vector<8xf32>
    %155 = vector.multi_reduction <add>, %154, %cst_73 [1] : vector<8x32xf32> to vector<8xf32>
    %156 = vector.shape_cast %155 : vector<8xf32> to vector<8x1xf32>
    %cst_74 = arith.constant 3.200000e+01 : f32
    %157 = vector.broadcast %cst_74 : f32 to vector<8x1xf32>
    %158 = arith.divf %156, %157 : vector<8x1xf32>
    %cst_75 = arith.constant 9.99999974E-6 : f32
    %159 = vector.broadcast %cst_75 : f32 to vector<8x1xf32>
    %160 = arith.addf %158, %159 : vector<8x1xf32>
    %161 = math.rsqrt %160 : vector<8x1xf32>
    %162 = vector.broadcast %161 : vector<8x1xf32> to vector<8x32xf32>
    %163 = arith.mulf %153, %162 : vector<8x32xf32>
    %164 = vector.broadcast %145 : vector<1x32xf32> to vector<8x32xf32>
    %165 = arith.mulf %163, %164 : vector<8x32xf32>
    %166 = vector.broadcast %147 : vector<1x32xf32> to vector<8x32xf32>
    %167 = arith.addf %165, %166 : vector<8x32xf32>
    %168 = arith.truncf %167 : vector<8x32xf32> to vector<8x32xbf16>
    %c0_76 = arith.constant 0 : index
    %c0_77 = arith.constant 0 : index
    %c0_78 = arith.constant 0 : index
    %169 = vector.load %arg16[%c0_76, %c0_77, %c0_78] : memref<1x32x128xf32, #tpu.memory_space<vmem>>, vector<1x32x128xf32>
    %170 = vector.shape_cast %169 : vector<1x32x128xf32> to vector<32x128xf32>
    %171 = arith.truncf %170 : vector<32x128xf32> to vector<32x128xbf16>
    %cst_79 = arith.constant dense<0.000000e+00> : vector<8x128xf32>
    %172 = tpu.matmul %168, %171, %cst_79 {dimension_numbers = #tpu.dot_dimension_numbers<[1], [0], [0], [1], [0, 0, 1, 1], [], []>} : vector<8x32xbf16>, vector<32x128xbf16>, vector<8x128xf32> -> vector<8x128xf32>
    %c0_80 = arith.constant 0 : index
    %c0_81 = arith.constant 0 : index
    %c0_82 = arith.constant 0 : index
    %173 = vector.load %arg17[%c0_80, %c0_81, %c0_82] : memref<1x1x128xf32, #tpu.memory_space<vmem>>, vector<1x1x128xf32>
    %174 = vector.shape_cast %173 : vector<1x1x128xf32> to vector<1x128xf32>
    %175 = vector.broadcast %174 : vector<1x128xf32> to vector<8x128xf32>
    %176 = arith.addf %172, %175 : vector<8x128xf32>
    %177 = arith.mulf %176, %176 : vector<8x128xf32>
    %178 = arith.mulf %176, %177 : vector<8x128xf32>
    %cst_83 = arith.constant 4.471500e-02 : f32
    %179 = vector.broadcast %cst_83 : f32 to vector<8x128xf32>
    %180 = arith.mulf %179, %178 : vector<8x128xf32>
    %181 = arith.addf %176, %180 : vector<8x128xf32>
    %cst_84 = arith.constant 0.797884583 : f32
    %182 = vector.broadcast %cst_84 : f32 to vector<8x128xf32>
    %183 = arith.mulf %182, %181 : vector<8x128xf32>
    %184 = math.tanh %183 : vector<8x128xf32>
    %cst_85 = arith.constant 1.000000e+00 : f32
    %185 = vector.broadcast %cst_85 : f32 to vector<8x128xf32>
    %186 = arith.addf %185, %184 : vector<8x128xf32>
    %cst_86 = arith.constant 5.000000e-01 : f32
    %187 = vector.broadcast %cst_86 : f32 to vector<8x128xf32>
    %188 = arith.mulf %187, %186 : vector<8x128xf32>
    %189 = arith.mulf %176, %188 : vector<8x128xf32>
    %190 = arith.truncf %189 : vector<8x128xf32> to vector<8x128xbf16>
    %c0_87 = arith.constant 0 : index
    %c0_88 = arith.constant 0 : index
    %c0_89 = arith.constant 0 : index
    %191 = vector.load %arg18[%c0_87, %c0_88, %c0_89] : memref<1x128x32xf32, #tpu.memory_space<vmem>>, vector<1x128x32xf32>
    %192 = vector.shape_cast %191 : vector<1x128x32xf32> to vector<128x32xf32>
    %193 = arith.truncf %192 : vector<128x32xf32> to vector<128x32xbf16>
    %cst_90 = arith.constant dense<0.000000e+00> : vector<8x32xf32>
    %194 = tpu.matmul %190, %193, %cst_90 {dimension_numbers = #tpu.dot_dimension_numbers<[1], [0], [0], [1], [0, 0, 1, 1], [], []>} : vector<8x128xbf16>, vector<128x32xbf16>, vector<8x32xf32> -> vector<8x32xf32>
    %c0_91 = arith.constant 0 : index
    %c0_92 = arith.constant 0 : index
    %c0_93 = arith.constant 0 : index
    %195 = vector.load %arg19[%c0_91, %c0_92, %c0_93] : memref<1x1x32xf32, #tpu.memory_space<vmem>>, vector<1x1x32xf32>
    %196 = vector.shape_cast %195 : vector<1x1x32xf32> to vector<1x32xf32>
    %197 = vector.broadcast %196 : vector<1x32xf32> to vector<8x32xf32>
    %198 = arith.addf %194, %197 : vector<8x32xf32>
    %199 = arith.addf %143, %198 : vector<8x32xf32>
    %c0_94 = arith.constant 0 : index
    %c0_95 = arith.constant 0 : index
    %c0_96 = arith.constant 0 : index
    %200 = vector.load %arg20[%c0_94, %c0_95, %c0_96] : memref<1x8x32xf32, #tpu.memory_space<vmem>>, vector<1x8x32xf32>
    %201 = vector.shape_cast %200 : vector<1x8x32xf32> to vector<8x32xf32>
    %202 = vector.shape_cast %199 : vector<8x32xf32> to vector<1x8x32xf32>
    tpu.vector_store %arg20[%c0_94, %c0_95, %c0_96], %202 {strides = array<i32>} : memref<1x8x32xf32, #tpu.memory_space<vmem>>, vector<1x8x32xf32>,
    return
  }
  func.func @transform_0(%arg0: i32, %arg1: i32) -> (i32, i32, i32) {
    %c0_i32 = arith.constant 0 : i32
    %c0_i32_0 = arith.constant 0 : i32
    %c0_i32_1 = arith.constant 0 : i32
    return %arg0, %c0_i32, %c0_i32_0 : i32, i32, i32
  }
  func.func @transform_1(%arg0: i32, %arg1: i32) -> (i32, i32) {
    %c0_i32 = arith.constant 0 : i32
    %c0_i32_0 = arith.constant 0 : i32
    %c0_i32_1 = arith.constant 0 : i32
    return %c0_i32, %c0_i32_0 : i32, i32
  }
  func.func @transform_2(%arg0: i32, %arg1: i32) -> (i32, i32, i32) {
    %c0_i32 = arith.constant 0 : i32
    %c0_i32_0 = arith.constant 0 : i32
    %c0_i32_1 = arith.constant 0 : i32
    return %arg1, %c0_i32, %c0_i32_0 : i32, i32, i32
  }
  func.func @transform_3(%arg0: i32, %arg1: i32) -> (i32, i32, i32) {
    %c0_i32 = arith.constant 0 : i32
    %c0_i32_0 = arith.constant 0 : i32
    %c0_i32_1 = arith.constant 0 : i32
    return %arg1, %c0_i32, %c0_i32_0 : i32, i32, i32
  }
  func.func @transform_4(%arg0: i32, %arg1: i32) -> (i32, i32, i32) {
    %c0_i32 = arith.constant 0 : i32
    %c0_i32_0 = arith.constant 0 : i32
    %c0_i32_1 = arith.constant 0 : i32
    return %arg1, %c0_i32, %c0_i32_0 : i32, i32, i32
  }
  func.func @transform_5(%arg0: i32, %arg1: i32) -> (i32, i32, i32) {
    %c0_i32 = arith.constant 0 : i32
    %c0_i32_0 = arith.constant 0 : i32
    %c0_i32_1 = arith.constant 0 : i32
    return %arg1, %c0_i32, %c0_i32_0 : i32, i32, i32
  }
  func.func @transform_6(%arg0: i32, %arg1: i32) -> (i32, i32, i32) {
    %c0_i32 = arith.constant 0 : i32
    %c0_i32_0 = arith.constant 0 : i32
    %c0_i32_1 = arith.constant 0 : i32
    return %arg1, %c0_i32, %c0_i32_0 : i32, i32, i32
  }
  func.func @transform_7(%arg0: i32, %arg1: i32) -> (i32, i32, i32) {
    %c0_i32 = arith.constant 0 : i32
    %c0_i32_0 = arith.constant 0 : i32
    %c0_i32_1 = arith.constant 0 : i32
    return %arg1, %c0_i32, %c0_i32_0 : i32, i32, i32
  }
  func.func @transform_8(%arg0: i32, %arg1: i32) -> (i32, i32, i32) {
    %c0_i32 = arith.constant 0 : i32
    %c0_i32_0 = arith.constant 0 : i32
    %c0_i32_1 = arith.constant 0 : i32
    return %arg1, %c0_i32, %c0_i32_0 : i32, i32, i32
  }
  func.func @transform_9(%arg0: i32, %arg1: i32) -> (i32, i32, i32) {
    %c0_i32 = arith.constant 0 : i32
    %c0_i32_0 = arith.constant 0 : i32
    %c0_i32_1 = arith.constant 0 : i32
    return %arg1, %c0_i32, %c0_i32_0 : i32, i32, i32
  }
  func.func @transform_10(%arg0: i32, %arg1: i32) -> (i32, i32, i32) {
    %c0_i32 = arith.constant 0 : i32
    %c0_i32_0 = arith.constant 0 : i32
    %c0_i32_1 = arith.constant 0 : i32
    return %arg1, %c0_i32, %c0_i32_0 : i32, i32, i32
  }
  func.func @transform_11(%arg0: i32, %arg1: i32) -> (i32, i32, i32) {
    %c0_i32 = arith.constant 0 : i32
    %c0_i32_0 = arith.constant 0 : i32
    %c0_i32_1 = arith.constant 0 : i32
    return %arg1, %c0_i32, %c0_i32_0 : i32, i32, i32
  }
  func.func @transform_12(%arg0: i32, %arg1: i32) -> (i32, i32, i32) {
    %c0_i32 = arith.constant 0 : i32
    %c0_i32_0 = arith.constant 0 : i32
    %c0_i32_1 = arith.constant 0 : i32
    return %arg1, %c0_i32, %c0_i32_0 : i32, i32, i32
  }
  func.func @transform_13(%arg0: i32, %arg1: i32) -> (i32, i32, i32) {
    %c0_i32 = arith.constant 0 : i32
    %c0_i32_0 = arith.constant 0 : i32
    %c0_i32_1 = arith.constant 0 : i32
    return %arg1, %c0_i32, %c0_i32_0 : i32, i32, i32
  }
  func.func @transform_14(%arg0: i32, %arg1: i32) -> (i32, i32, i32) {
    %c0_i32 = arith.constant 0 : i32
    %c0_i32_0 = arith.constant 0 : i32
    %c0_i32_1 = arith.constant 0 : i32
    return %arg1, %c0_i32, %c0_i32_0 : i32, i32, i32
  }
  func.func @transform_15(%arg0: i32, %arg1: i32) -> (i32, i32, i32) {
    %c0_i32 = arith.constant 0 : i32
    %c0_i32_0 = arith.constant 0 : i32
    %c0_i32_1 = arith.constant 0 : i32
    return %arg1, %c0_i32, %c0_i32_0 : i32, i32, i32
  }
  func.func @transform_16(%arg0: i32, %arg1: i32) -> (i32, i32, i32) {
    %c0_i32 = arith.constant 0 : i32
    %c0_i32_0 = arith.constant 0 : i32
    %c0_i32_1 = arith.constant 0 : i32
    return %arg1, %c0_i32, %c0_i32_0 : i32, i32, i32
  }
  func.func @transform_17(%arg0: i32, %arg1: i32) -> (i32, i32, i32) {
    %c0_i32 = arith.constant 0 : i32
    %c0_i32_0 = arith.constant 0 : i32
    %c0_i32_1 = arith.constant 0 : i32
    return %arg1, %c0_i32, %c0_i32_0 : i32, i32, i32
  }
  func.func @transform_18(%arg0: i32, %arg1: i32) -> (i32, i32, i32) {
    %c0_i32 = arith.constant 0 : i32
    %c0_i32_0 = arith.constant 0 : i32
    %c0_i32_1 = arith.constant 0 : i32
    return %arg0, %c0_i32, %c0_i32_0 : i32, i32, i32
  }
}

</mosaic_0001>

<llo_original>
// kernel: clip_forward.5
$region0: #{clip_forward.5}
  #allocation0 [shape = 'u32[]', space=smem, size = 0x4, offset = 0x4, fixed_abs, tag = 'smem constant byte address 0x4 - core index']
  #allocation1 [shape = 'u32[144,128]{1,0:T(1,128)}', space=vmem, size = 0x12000, scoped, tag = 'internal scratch']
  %s0 = inlined_call_operand.vmem [shape: f32[32,48], index: 0, kind: input, shape index: {}]
  %s1 = inlined_call_operand.vmem [shape: f32[48,32], index: 1, kind: input, shape index: {}]
  %s2 = inlined_call_operand.vmem [shape: f32[1,32], index: 2, kind: input, shape index: {}]
  %s3 = inlined_call_operand.vmem [shape: f32[32,32], index: 3, kind: output, shape index: {}]
  %s4 = sld [smem:[#allocation0]]
  $region22: #{clip_forward.5} parent=0
    _
  %s6 = ssub.s32 1, %s4
  %s7 = scalar_select 0, %s6, %s4
  // Predicated region
  $region2: #{clip_forward.5} parent=0 // pred_check
    _
  $region3: #{clip_forward.5} parent=0 // pred_check_branch
    %9 = sbr.rel (0) target = $region5
  $region4: #{clip_forward.5} parent=0 // pred_region
    _
  $region5: #{clip_forward.5} parent=0 // pred_fallthru
    _
  // Predicated region
  $region6: #{clip_forward.5} parent=0 // pred_check
    _
  $region7: #{clip_forward.5} parent=0 // pred_check_branch
    %11 = sbr.rel (0) target = $region9
  $region8: #{clip_forward.5} parent=0 // pred_region
    _
  $region9: #{clip_forward.5} parent=0 // pred_fallthru
    _
  // Predicated region
  $region10: #{clip_forward.5} parent=0 // pred_check
    _
  $region11: #{clip_forward.5} parent=0 // pred_check_branch
    %13 = sbr.rel (0) target = $region13
  $region12: #{clip_forward.5} parent=0 // pred_region
    _
  $region13: #{clip_forward.5} parent=0 // pred_fallthru
    _
  %v15 = vld [vmem:[%s0] sm:$0xff]
  %v16 = vld [vmem:[%s0 + $0x8] sm:$0xff]
  %v17 = vld [vmem:[%s0 + $0x10] sm:$0xff]
  %v18 = vld [vmem:[%s0 + $0x18] sm:$0xff]
  %v19 = vpack.c.bf16 %v16, %v15
  %v20 = vpack.c.bf16 %v18, %v17
  %v21 = vld [vmem:[%s1] sm:$0xff]
  %v22 = vld [vmem:[%s1 + $0x8] sm:$0xff]
  %v23 = vld [vmem:[%s1 + $0x10] sm:$0xff]
  %v24 = vld [vmem:[%s1 + $0x18] sm:$0xff]
  %v25 = vld [vmem:[%s1 + $0x20] sm:$0xff]
  %v26 = vld [vmem:[%s1 + $0x28] sm:$0xff]
  %v27 = vpack.c.bf16 %v22, %v21
  %v28 = vpack.c.bf16 %v24, %v23
  %v29 = vpack.c.bf16 %v26, %v25
  %v30 = vld [vmem:[%s2] sm:$0x1]
  %v32 = vlaneseq
  %v33 = vshrl.u32 %v32, 7
  %v34 = vsub.s32 0, %v33
  %v35 = vrot.slane %v30, %v34
  %vm37 = vcmask 392192
  %v39 = vsel %vm37, %v19, 0
  %v42 = vsel %vm37, %v20, 0
  %44 = vmatprep.subr.bf16.mxu0 0
  %45 = vmatpush1.bf16.msra.mxu0 %v27
  %46 = vmatprep.subr.bf16.mxu0 0
  %47 = vmatpush1.bf16.msra.mxu0 %v28
  %48 = vmatprep.subr.bf16.mxu0 0
  %49 = vmatpush1.bf16.msra.mxu0 %v29
  %50 = vmatprep.subr.bf16.mxu0 0
  %51 = vmatpush1.bf16.msra.mxu0 0
  %52 = vmatprep.subr.bf16.mxu0 0
  %53 = vmatpush1.bf16.msra.mxu0 0
  %54 = vmatprep.subr.bf16.mxu0 0
  %55 = vmatpush1.bf16.msra.mxu0 0
  %56 = vmatprep.subr.bf16.mxu0 0
  %57 = vmatpush1.bf16.msra.mxu0 0
  %58 = vmatprep.subr.bf16.mxu0 0
  %59 = vmatpush1.bf16.msra.mxu0 0
  %60 = vmatprep.subr.bf16.mxu0 0
  %61 = vmatpush1.bf16.msra.mxu0 0
  %62 = vmatprep.subr.bf16.mxu0 0
  %63 = vmatpush1.bf16.msra.mxu0 0
  %64 = vmatprep.subr.bf16.mxu0 0
  %65 = vmatpush1.bf16.msra.mxu0 0
  %66 = vmatprep.subr.bf16.mxu0 0
  %67 = vmatpush1.bf16.msra.mxu0 0
  %68 = vmatprep.subr.bf16.mxu0 0
  %69 = vmatpush1.bf16.msra.mxu0 0
  %70 = vmatprep.subr.bf16.mxu0 0
  %71 = vmatpush1.bf16.msra.mxu0 0
  %72 = vmatprep.subr.bf16.mxu0 0
  %73 = vmatpush1.bf16.msra.mxu0 0
  %74 = vmatprep.subr.bf16.mxu0 0
  %75 = vmatpush1.bf16.msra.mxu0 0
  %76 = vmatprep.mubr.bf16.mxu0 0
  %77 = vmatmul.mubr.bf16.gmra.mrb[0].mxu0 %v39
  %v78 = vpop.f32.mrb[0].mxu0
  %v79 = vadd.f32 %v35, %v78
  %v80 = vpop.f32.mrb[0].mxu0
  %v81 = vpop.f32.mrb[0].mxu0
  %v82 = vadd.f32 %v35, %v81
  %v83 = vpop.f32.mrb[0].mxu0
  %84 = vmatprep.mubr.bf16.mxu0 0
  %85 = vmatmul.mubr.bf16.gmra.mrb[0].mxu0 %v42
  %v86 = vpop.f32.mrb[0].mxu0
  %v87 = vadd.f32 %v35, %v86
  %v88 = vpop.f32.mrb[0].mxu0
  %v89 = vpop.f32.mrb[0].mxu0
  %v90 = vadd.f32 %v35, %v89
  %v91 = vpop.f32.mrb[0].mxu0
  %92 = vdwg.mxu0
  %vm93 = vcmask 261120
  %94 = vst.msk [vmem:[%s3] sm:$0xff] %vm93, %v79
  %95 = vst.msk [vmem:[%s3 + $0x8] sm:$0xff] %vm93, %v82
  %96 = vst.msk [vmem:[%s3 + $0x10] sm:$0xff] %vm93, %v87
  %97 = vst.msk [vmem:[%s3 + $0x18] sm:$0xff] %vm93, %v90
  // Predicated region
  $region14: #{clip_forward.5} parent=0 // pred_check
    _
  $region15: #{clip_forward.5} parent=0 // pred_check_branch
    %99 = sbr.rel (0) target = $region17
  $region16: #{clip_forward.5} parent=0 // pred_region
    _
  $region17: #{clip_forward.5} parent=0 // pred_fallthru
    _
  // Predicated region
  $region18: #{clip_forward.5} parent=0 // pred_check
    _
  $region19: #{clip_forward.5} parent=0 // pred_check_branch
    %101 = sbr.rel (0) target = $region21
  $region20: #{clip_forward.5} parent=0 // pred_region
    _
  $region21: #{clip_forward.5} parent=0 // pred_fallthru
    _

// kernel: clip_forward.7
$region0: #{clip_forward.7}
  #allocation0 [shape = 'u32[]', space=smem, size = 0x4, offset = 0x4, fixed_abs, tag = 'smem constant byte address 0x4 - core index']
  #allocation1 [shape = 'u32[144,128]{1,0:T(1,128)}', space=vmem, size = 0x12000, scoped, tag = 'internal scratch']
  %s0 = inlined_call_operand.vmem [shape: f32[2,32], index: 0, kind: input, shape index: {}]
  %s1 = inlined_call_operand.vmem [shape: f32[1,32], index: 1, kind: input, shape index: {}]
  %s2 = inlined_call_operand.vmem [shape: f32[1,32], index: 2, kind: input, shape index: {}]
  %s3 = inlined_call_operand.vmem [shape: f32[32,32], index: 3, kind: input, shape index: {}]
  %s4 = inlined_call_operand.vmem [shape: f32[1,32], index: 4, kind: input, shape index: {}]
  %s5 = inlined_call_operand.hbm [shape: f32[2,32], index: 5, kind: output, shape index: {}]
  %s6 = sld [smem:[#allocation0]]
  $region30: #{clip_forward.7} parent=0
    _
  %s8 = ssub.s32 1, %s6
  %s9 = scalar_select 0, %s8, %s6
  $region1: #{clip_forward.7} parent=0
    #allocation2 [shape = 'u8[1024]{0}', space=vmem, size = 0x400, scoped, tag = 'output window, operand 0, single buffered']
    #allocation3 [shape = 's32[1]{0}', space=sflag, size = 0x4, scoped, tag = 'scoped memory for clip_forward.7']
    %10 = vsyncpa [#allocation3], 0
    // Predicated region
    $region2: #{clip_forward.7} parent=1 // pred_check
      _
    $region3: #{clip_forward.7} parent=1 // pred_check_branch
      %12 = sbr.rel (0) target = $region5
    $region4: #{clip_forward.7} parent=1 // pred_region
      _
    $region5: #{clip_forward.7} parent=1 // pred_fallthru
      _
    // Predicated region
    $region6: #{clip_forward.7} parent=1 // pred_check
      _
    $region7: #{clip_forward.7} parent=1 // pred_check_branch
      %14 = sbr.rel (0) target = $region9
    $region8: #{clip_forward.7} parent=1 // pred_region
      _
    $region9: #{clip_forward.7} parent=1 // pred_fallthru
      _
    // Predicated region
    $region10: #{clip_forward.7} parent=1 // pred_check
      _
    $region11: #{clip_forward.7} parent=1 // pred_check_branch
      %16 = sbr.rel (0) target = $region13
    $region12: #{clip_forward.7} parent=1 // pred_region
      _
    $region13: #{clip_forward.7} parent=1 // pred_fallthru
      _
    // Predicated region
    $region14: #{clip_forward.7} parent=1 // pred_check
      _
    $region15: #{clip_forward.7} parent=1 // pred_check_branch
      %18 = sbr.rel (0) target = $region17
    $region16: #{clip_forward.7} parent=1 // pred_region
      _
    $region17: #{clip_forward.7} parent=1 // pred_fallthru
      _
    // Predicated region
    $region18: #{clip_forward.7} parent=1 // pred_check
      _
    $region19: #{clip_forward.7} parent=1 // pred_check_branch
      %20 = sbr.rel (0) target = $region21
    $region20: #{clip_forward.7} parent=1 // pred_region
      _
    $region21: #{clip_forward.7} parent=1 // pred_fallthru
      _
    %v21 = vld [vmem:[%s0] sm:$0x3]
    %v22 = vld [vmem:[%s1] sm:$0x1]
    %v23 = vld [vmem:[%s2] sm:$0x1]
    %vm24 = vcmask 254976
    %v25 = vsel %vm24, %v21, 0.0
    %26 = vadd.xlane.f32.xlu0 %v25
    %v27 = vpop.xlane.xlu0 %26
    %v28 = vrcp.pop 32.0
    %v29 = vmul.f32 %v27, %v28
    %v30 = vsub.f32 %v21, %v29
    %v31 = vmul.f32 %v30, %v30
    %v32 = vsel %vm24, %v31, 0.0
    %33 = vadd.xlane.f32.xlu0 %v32
    %v34 = vpop.xlane.xlu0 %33
    %v35 = vmul.f32 %v34, %v28
    %v36 = vadd.f32 %v35, 1e-05
    %v37 = vrsqrt.pop %v36
    %v38 = vmul.f32 %v30, %v37
    %v40 = vlaneseq
    %v41 = vshrl.u32 %v40, 7
    %v42 = vsub.s32 0, %v41
    %v43 = vrot.slane %v22, %v42
    %v45 = vmul.f32 %v38, %v43
    %v47 = vlaneseq
    %v48 = vshrl.u32 %v47, 7
    %v49 = vsub.s32 0, %v48
    %v50 = vrot.slane %v23, %v49
    %v52 = vadd.f32 %v45, %v50
    %v53 = vld [vmem:[%s3] sm:$0xff]
    %v54 = vld [vmem:[%s3 + $0x8] sm:$0xff]
    %v55 = vld [vmem:[%s3 + $0x10] sm:$0xff]
    %v56 = vld [vmem:[%s3 + $0x18] sm:$0xff]
    %v57 = vld [vmem:[%s4] sm:$0x1]
    %v59 = vlaneseq
    %v60 = vshrl.u32 %v59, 7
    %v61 = vsub.s32 0, %v60
    %v62 = vrot.slane %v57, %v61
    %vm64 = vcmask 261120
    %v66 = vsel %vm64, %v52, 0
    %68 = vmatprep.subr.mxu0 0.0
    %69 = vmatpush1.msra.mxu0 %v53
    %70 = vmatprep.subr.mxu0 0.0
    %71 = vmatpush1.msra.mxu0 %v54
    %72 = vmatprep.subr.mxu0 0.0
    %73 = vmatpush1.msra.mxu0 %v55
    %74 = vmatprep.subr.mxu0 0.0
    %75 = vmatpush1.msra.mxu0 %v56
    %76 = vmatprep.subr.mxu0 0.0
    %77 = vmatpush1.msra.mxu0 0.0
    %78 = vmatprep.subr.mxu0 0.0
    %79 = vmatpush1.msra.mxu0 0.0
    %80 = vmatprep.subr.mxu0 0.0
    %81 = vmatpush1.msra.mxu0 0.0
    %82 = vmatprep.subr.mxu0 0.0
    %83 = vmatpush1.msra.mxu0 0.0
    %84 = vmatprep.subr.mxu0 0.0
    %85 = vmatpush1.msra.mxu0 0.0
    %86 = vmatprep.subr.mxu0 0.0
    %87 = vmatpush1.msra.mxu0 0.0
    %88 = vmatprep.subr.mxu0 0.0
    %89 = vmatpush1.msra.mxu0 0.0
    %90 = vmatprep.subr.mxu0 0.0
    %91 = vmatpush1.msra.mxu0 0.0
    %92 = vmatprep.subr.mxu0 0.0
    %93 = vmatpush1.msra.mxu0 0.0
    %94 = vmatprep.subr.mxu0 0.0
    %95 = vmatpush1.msra.mxu0 0.0
    %96 = vmatprep.subr.mxu0 0.0
    %97 = vmatpush1.msra.mxu0 0.0
    %98 = vmatprep.subr.mxu0 0.0
    %99 = vmatpush1.msra.mxu0 0.0
    %100 = vmatprep.subr.mxu0 0.0
    %101 = vmatpush1.msra.mxu0 0.0
    %102 = vmatprep.subr.mxu0 0.0
    %103 = vmatpush1.msra.mxu0 0.0
    %104 = vmatprep.subr.mxu0 0.0
    %105 = vmatpush1.msra.mxu0 0.0
    %106 = vmatprep.subr.mxu0 0.0
    %107 = vmatpush1.msra.mxu0 0.0
    %108 = vmatprep.subr.mxu0 0.0
    %109 = vmatpush1.msra.mxu0 0.0
    %110 = vmatprep.subr.mxu0 0.0
    %111 = vmatpush1.msra.mxu0 0.0
    %112 = vmatprep.subr.mxu0 0.0
    %113 = vmatpush1.msra.mxu0 0.0
    %114 = vmatprep.subr.mxu0 0.0
    %115 = vmatpush1.msra.mxu0 0.0
    %116 = vmatprep.subr.mxu0 0.0
    %117 = vmatpush1.msra.mxu0 0.0
    %118 = vmatprep.subr.mxu0 0.0
    %119 = vmatpush1.msra.mxu0 0.0
    %120 = vmatprep.subr.mxu0 0.0
    %121 = vmatpush1.msra.mxu0 0.0
    %122 = vmatprep.subr.mxu0 0.0
    %123 = vmatpush1.msra.mxu0 0.0
    %124 = vmatprep.subr.mxu0 0.0
    %125 = vmatpush1.msra.mxu0 0.0
    %126 = vmatprep.subr.mxu0 0.0
    %127 = vmatpush1.msra.mxu0 0.0
    %128 = vmatprep.subr.mxu0 0.0
    %129 = vmatpush1.msra.mxu0 0.0
    %130 = vmatprep.subr.mxu0 0.0
    %131 = vmatpush1.msra.mxu0 0.0
    %132 = vmatprep.mubr.f32.mxu0 0.0
    %133 = vmatmul.mubr.f32.gmra.mrb[0].mxu0 %v66
    %v134 = vpop.f32.mrb[0].mxu0
    %v135 = vadd.f32 %v62, %v134
    %v136 = vpop.f32.mrb[0].mxu0
    %137 = vdwg.mxu0
    %v138 = vmul.f32 %v135, %v135
    %v139 = vsel %vm24, %v138, 0.0
    %140 = vadd.xlane.f32.xlu0 %v139
    %v141 = vpop.xlane.xlu0 %140
    %v142 = vmax.f32 %v141, 1e-24
    %v143 = vrsqrt.pop %v142
    %v144 = vmul.f32 %v135, %v143
    %145 = vst.msk [vmem:[#allocation2] sm:$0x3] %vm24, %v144
    // Predicated region
    $region22: #{clip_forward.7} parent=1 // pred_check
      _
    $region23: #{clip_forward.7} parent=1 // pred_check_branch
      %147 = sbr.rel (0) target = $region25
    $region24: #{clip_forward.7} parent=1 // pred_region
      %s149 = ssub.s32 32, 32
      %150 = vsyncadd [#allocation3], %s149
      %s152 = sshll.u32 [#allocation2], 4
      %s153 = int_to_ptr.vmem [resolvable:$true] %s152
      %155 = dma.vmem_to_hbm [thread:$0]  %s153, 32, %s5, [#allocation3]
    $region25: #{clip_forward.7} parent=1 // pred_fallthru
      _
    // Predicated region
    $region26: #{clip_forward.7} parent=1 // pred_check
      _
    $region27: #{clip_forward.7} parent=1 // pred_check_branch
      %157 = sbr.rel (0) target = $region29
    $region28: #{clip_forward.7} parent=1 // pred_region
      %158 = dma.done [#allocation3], 32
    $region29: #{clip_forward.7} parent=1 // pred_fallthru
      _
    %159 = vsyncpa [#allocation3], 1

// kernel: clip_forward.6
$region0: #{clip_forward.6}
  #allocation0 [shape = 'u32[]', space=smem, size = 0x4, offset = 0x4, fixed_abs, tag = 'smem constant byte address 0x4 - core index']
  #allocation1 [shape = 'u32[144,128]{1,0:T(1,128)}', space=vmem, size = 0x12000, scoped, tag = 'internal scratch']
  %s0 = inlined_call_operand.vmem [shape: f32[2,17,32], index: 0, kind: input, shape index: {}]
  %s1 = inlined_call_operand.vmem [shape: f32[17,32], index: 1, kind: input, shape index: {}]
  %s2 = inlined_call_operand.vmem [shape: f32[2,1,32], index: 2, kind: input, shape index: {}]
  %s3 = inlined_call_operand.vmem [shape: f32[2,1,32], index: 3, kind: input, shape index: {}]
  %s4 = inlined_call_operand.vmem [shape: f32[2,32,32], index: 4, kind: input, shape index: {}]
  %s5 = inlined_call_operand.vmem [shape: f32[2,32,32], index: 5, kind: input, shape index: {}]
  %s6 = inlined_call_operand.vmem [shape: f32[2,32,32], index: 6, kind: input, shape index: {}]
  %s7 = inlined_call_operand.vmem [shape: f32[2,1,32], index: 7, kind: input, shape index: {}]
  %s8 = inlined_call_operand.vmem [shape: f32[2,1,32], index: 8, kind: input, shape index: {}]
  %s9 = inlined_call_operand.vmem [shape: f32[2,1,32], index: 9, kind: input, shape index: {}]
  %s10 = inlined_call_operand.vmem [shape: f32[2,32,32], index: 10, kind: input, shape index: {}]
  %s11 = inlined_call_operand.vmem [shape: f32[2,1,32], index: 11, kind: input, shape index: {}]
  %s12 = inlined_call_operand.vmem [shape: f32[2,1,32], index: 12, kind: input, shape index: {}]
  %s13 = inlined_call_operand.vmem [shape: f32[2,1,32], index: 13, kind: input, shape index: {}]
  %s14 = inlined_call_operand.vmem [shape: f32[2,32,128], index: 14, kind: input, shape index: {}]
  %s15 = inlined_call_operand.vmem [shape: f32[2,1,128], index: 15, kind: input, shape index: {}]
  %s16 = inlined_call_operand.vmem [shape: f32[2,128,32], index: 16, kind: input, shape index: {}]
  %s17 = inlined_call_operand.vmem [shape: f32[2,1,32], index: 17, kind: input, shape index: {}]
  %s18 = inlined_call_operand.vmem [shape: f32[2,17,32], index: 18, kind: output, shape index: {}]
  %s19 = sld [smem:[#allocation0]]
  $region109: #{clip_forward.6} parent=0
    _
  %s21 = ssub.s32 1, %s19
  %s22 = scalar_select 0, %s21, %s19
  loop: start=0, step=1, limit=6
  $region2: #{clip_forward.6} parent=0 // loop_pre_header
    _
  $region3: #{clip_forward.6} parent=0 // loop_header
    %s24 = sphi 0, %s28
    %p25 = scmp.ge.s32.totalorder %s24, 6
    %s31 = sphi 0, %s43
    %s32 = sphi 0, %s39
    %s33 = sphi 0, %s31
    %s34 = sphi 0, %s32
    %s35 = sphi 0, %s33
    %s36 = sphi 0, %s34
    %s46 = sphi 0, %s48
    %s49 = sphi 0, %s46
    %s50 = sphi 0, %s49
    %s66 = sphi 0, %s50
    %s70 = sphi 0, %s70
    %s72 = sphi 0, %s70
    %s73 = sphi 0, %s72
    %s87 = sphi 0, %s73
    %s93 = sphi 0, %s95
    %s96 = sphi 0, %s93
    %s97 = sphi 0, %s96
    %s113 = sphi 0, %s97
    %s119 = sphi 0, %s121
    %s122 = sphi 0, %s119
    %s123 = sphi 0, %s122
    %s139 = sphi 0, %s123
    %s145 = sphi 0, %s147
    %s148 = sphi 0, %s145
    %s149 = sphi 0, %s148
    %s165 = sphi 0, %s149
    %s171 = sphi 0, %s173
    %s174 = sphi 0, %s171
    %s175 = sphi 0, %s174
    %s191 = sphi 0, %s175
    %s197 = sphi 0, %s199
    %s200 = sphi 0, %s197
    %s201 = sphi 0, %s200
    %s217 = sphi 0, %s201
    %s223 = sphi 0, %s225
    %s226 = sphi 0, %s223
    %s227 = sphi 0, %s226
    %s243 = sphi 0, %s227
    %s249 = sphi 0, %s251
    %s252 = sphi 0, %s249
    %s253 = sphi 0, %s252
    %s269 = sphi 0, %s253
    %s275 = sphi 0, %s277
    %s278 = sphi 0, %s275
    %s279 = sphi 0, %s278
    %s295 = sphi 0, %s279
    %s301 = sphi 0, %s303
    %s304 = sphi 0, %s301
    %s305 = sphi 0, %s304
    %s321 = sphi 0, %s305
    %s327 = sphi 0, %s329
    %s330 = sphi 0, %s327
    %s331 = sphi 0, %s330
    %s347 = sphi 0, %s331
    %s353 = sphi 0, %s355
    %s356 = sphi 0, %s353
    %s357 = sphi 0, %s356
    %s373 = sphi 0, %s357
    %s379 = sphi 0, %s381
    %s382 = sphi 0, %s379
    %s383 = sphi 0, %s382
    %s399 = sphi 0, %s383
    %s405 = sphi 0, %s407
    %s408 = sphi 0, %s405
    %s409 = sphi 0, %s408
    %s425 = sphi 0, %s409
    %s431 = sphi 0, %s433
    %s434 = sphi 0, %s431
    %s435 = sphi 0, %s434
    %s451 = sphi 0, %s435
    %s457 = sphi 0, %s459
    %s460 = sphi 0, %s457
    %s461 = sphi 0, %s460
    %s477 = sphi 0, %s461
    %s483 = sphi 0, %s485
    %s486 = sphi 0, %s483
    %s487 = sphi 0, %s486
    %s503 = sphi 0, %s487
    %s509 = sphi 0, %s511
    %s512 = sphi 0, %s509
    %s513 = sphi 0, %s512
    %s529 = sphi 0, %s513
  $region4: #{clip_forward.6} parent=0 // loop_header_branch
    %27 = sbr.rel (%p25) target = $region8
  $region5: #{clip_forward.6} parent=0 // loop_body
    %s29 = ssub.s32 %s24, 1
    %s30 = ssub.s32 %s24, 2
    %s37 = sadd.s32 1, %s32
    %p38 = scmp.ge.s32.totalorder %s37, 2
    %s39 = scalar_select %p38, 0, %s37
    %s40 = sadd.s32 1, %s31
    %s41 = scalar_select %p38, %s40, %s31
    %p42 = scmp.ge.s32.totalorder %s41, 2
    %s43 = scalar_select %p42, 0, %s41
    %s44 = ssub.s32 %s31, %s43
    %p45 = scmp.eq.s32.totalorder %s44, 0
    %s47 = sadd.s32 %s46, 1
    %s48 = scalar_select %p45, %s46, %s47
    %p51 = pneg %p45
    %p52 = scmp.eq.s32.totalorder %s24, 3
    %p53 = por %p51, %p52
    %p54 = scmp.ne.s32.totalorder %s46, %s49
    %p55 = scmp.eq.s32.totalorder %s24, 0
    %p56 = por %p54, %p55
    %p57 = scmp.ne.s32.totalorder %s46, %s49
    %p58 = scmp.eq.s32.totalorder %s29, 3
    %p59 = por %p57, %p58
    %p60 = scmp.ne.s32.totalorder %s49, %s50
    %p61 = scmp.eq.s32.totalorder %s29, 0
    %p62 = por %p60, %p61
    %p63 = scmp.ne.s32.totalorder %s49, %s50
    %p64 = scmp.eq.s32.totalorder %s30, 3
    %p65 = por %p63, %p64
    %p67 = scmp.ne.s32.totalorder %s50, %s66
    %p68 = scmp.eq.s32.totalorder %s30, 0
    %p69 = por %p67, %p68
    %s71 = sadd.s32 %s70, 1
    %p74 = scmp.eq.s32.totalorder %s24, 3
    %p75 = scmp.ne.s32.totalorder %s70, %s72
    %p76 = scmp.eq.s32.totalorder %s24, 0
    %p77 = por %p75, %p76
    %p78 = scmp.ne.s32.totalorder %s70, %s72
    %p79 = scmp.eq.s32.totalorder %s29, 3
    %p80 = por %p78, %p79
    %p81 = scmp.ne.s32.totalorder %s72, %s73
    %p82 = scmp.eq.s32.totalorder %s29, 0
    %p83 = por %p81, %p82
    %p84 = scmp.ne.s32.totalorder %s72, %s73
    %p85 = scmp.eq.s32.totalorder %s30, 3
    %p86 = por %p84, %p85
    %p88 = scmp.ne.s32.totalorder %s73, %s87
    %p89 = scmp.eq.s32.totalorder %s30, 0
    %p90 = por %p88, %p89
    %s91 = ssub.s32 %s32, %s39
    %p92 = scmp.eq.s32.totalorder %s91, 0
    %s94 = sadd.s32 %s93, 1
    %s95 = scalar_select %p92, %s93, %s94
    %p98 = pneg %p92
    %p99 = scmp.eq.s32.totalorder %s24, 3
    %p100 = por %p98, %p99
    %p101 = scmp.ne.s32.totalorder %s93, %s96
    %p102 = scmp.eq.s32.totalorder %s24, 0
    %p103 = por %p101, %p102
    %p104 = scmp.ne.s32.totalorder %s93, %s96
    %p105 = scmp.eq.s32.totalorder %s29, 3
    %p106 = por %p104, %p105
    %p107 = scmp.ne.s32.totalorder %s96, %s97
    %p108 = scmp.eq.s32.totalorder %s29, 0
    %p109 = por %p107, %p108
    %p110 = scmp.ne.s32.totalorder %s96, %s97
    %p111 = scmp.eq.s32.totalorder %s30, 3
    %p112 = por %p110, %p111
    %p114 = scmp.ne.s32.totalorder %s97, %s113
    %p115 = scmp.eq.s32.totalorder %s30, 0
    %p116 = por %p114, %p115
    %s117 = ssub.s32 %s32, %s39
    %p118 = scmp.eq.s32.totalorder %s117, 0
    %s120 = sadd.s32 %s119, 1
    %s121 = scalar_select %p118, %s119, %s120
    %p124 = pneg %p118
    %p125 = scmp.eq.s32.totalorder %s24, 3
    %p126 = por %p124, %p125
    %p127 = scmp.ne.s32.totalorder %s119, %s122
    %p128 = scmp.eq.s32.totalorder %s24, 0
    %p129 = por %p127, %p128
    %p130 = scmp.ne.s32.totalorder %s119, %s122
    %p131 = scmp.eq.s32.totalorder %s29, 3
    %p132 = por %p130, %p131
    %p133 = scmp.ne.s32.totalorder %s122, %s123
    %p134 = scmp.eq.s32.totalorder %s29, 0
    %p135 = por %p133, %p134
    %p136 = scmp.ne.s32.totalorder %s122, %s123
    %p137 = scmp.eq.s32.totalorder %s30, 3
    %p138 = por %p136, %p137
    %p140 = scmp.ne.s32.totalorder %s123, %s139
    %p141 = scmp.eq.s32.totalorder %s30, 0
    %p142 = por %p140, %p141
    %s143 = ssub.s32 %s32, %s39
    %p144 = scmp.eq.s32.totalorder %s143, 0
    %s146 = sadd.s32 %s145, 1
    %s147 = scalar_select %p144, %s145, %s146
    %p150 = pneg %p144
    %p151 = scmp.eq.s32.totalorder %s24, 3
    %p152 = por %p150, %p151
    %p153 = scmp.ne.s32.totalorder %s145, %s148
    %p154 = scmp.eq.s32.totalorder %s24, 0
    %p155 = por %p153, %p154
    %p156 = scmp.ne.s32.totalorder %s145, %s148
    %p157 = scmp.eq.s32.totalorder %s29, 3
    %p158 = por %p156, %p157
    %p159 = scmp.ne.s32.totalorder %s148, %s149
    %p160 = scmp.eq.s32.totalorder %s29, 0
    %p161 = por %p159, %p160
    %p162 = scmp.ne.s32.totalorder %s148, %s149
    %p163 = scmp.eq.s32.totalorder %s30, 3
    %p164 = por %p162, %p163
    %p166 = scmp.ne.s32.totalorder %s149, %s165
    %p167 = scmp.eq.s32.totalorder %s30, 0
    %p168 = por %p166, %p167
    %s169 = ssub.s32 %s32, %s39
    %p170 = scmp.eq.s32.totalorder %s169, 0
    %s172 = sadd.s32 %s171, 1
    %s173 = scalar_select %p170, %s171, %s172
    %p176 = pneg %p170
    %p177 = scmp.eq.s32.totalorder %s24, 3
    %p178 = por %p176, %p177
    %p179 = scmp.ne.s32.totalorder %s171, %s174
    %p180 = scmp.eq.s32.totalorder %s24, 0
    %p181 = por %p179, %p180
    %p182 = scmp.ne.s32.totalorder %s171, %s174
    %p183 = scmp.eq.s32.totalorder %s29, 3
    %p184 = por %p182, %p183
    %p185 = scmp.ne.s32.totalorder %s174, %s175
    %p186 = scmp.eq.s32.totalorder %s29, 0
    %p187 = por %p185, %p186
    %p188 = scmp.ne.s32.totalorder %s174, %s175
    %p189 = scmp.eq.s32.totalorder %s30, 3
    %p190 = por %p188, %p189
    %p192 = scmp.ne.s32.totalorder %s175, %s191
    %p193 = scmp.eq.s32.totalorder %s30, 0
    %p194 = por %p192, %p193
    %s195 = ssub.s32 %s32, %s39
    %p196 = scmp.eq.s32.totalorder %s195, 0
    %s198 = sadd.s32 %s197, 1
    %s199 = scalar_select %p196, %s197, %s198
    %p202 = pneg %p196
    %p203 = scmp.eq.s32.totalorder %s24, 3
    %p204 = por %p202, %p203
    %p205 = scmp.ne.s32.totalorder %s197, %s200
    %p206 = scmp.eq.s32.totalorder %s24, 0
    %p207 = por %p205, %p206
    %p208 = scmp.ne.s32.totalorder %s197, %s200
    %p209 = scmp.eq.s32.totalorder %s29, 3
    %p210 = por %p208, %p209
    %p211 = scmp.ne.s32.totalorder %s200, %s201
    %p212 = scmp.eq.s32.totalorder %s29, 0
    %p213 = por %p211, %p212
    %p214 = scmp.ne.s32.totalorder %s200, %s201
    %p215 = scmp.eq.s32.totalorder %s30, 3
    %p216 = por %p214, %p215
    %p218 = scmp.ne.s32.totalorder %s201, %s217
    %p219 = scmp.eq.s32.totalorder %s30, 0
    %p220 = por %p218, %p219
    %s221 = ssub.s32 %s32, %s39
    %p222 = scmp.eq.s32.totalorder %s221, 0
    %s224 = sadd.s32 %s223, 1
    %s225 = scalar_select %p222, %s223, %s224
    %p228 = pneg %p222
    %p229 = scmp.eq.s32.totalorder %s24, 3
    %p230 = por %p228, %p229
    %p231 = scmp.ne.s32.totalorder %s223, %s226
    %p232 = scmp.eq.s32.totalorder %s24, 0
    %p233 = por %p231, %p232
    %p234 = scmp.ne.s32.totalorder %s223, %s226
    %p235 = scmp.eq.s32.totalorder %s29, 3
    %p236 = por %p234, %p235
    %p237 = scmp.ne.s32.totalorder %s226, %s227
    %p238 = scmp.eq.s32.totalorder %s29, 0
    %p239 = por %p237, %p238
    %p240 = scmp.ne.s32.totalorder %s226, %s227
    %p241 = scmp.eq.s32.totalorder %s30, 3
    %p242 = por %p240, %p241
    %p244 = scmp.ne.s32.totalorder %s227, %s243
    %p245 = scmp.eq.s32.totalorder %s30, 0
    %p246 = por %p244, %p245
    %s247 = ssub.s32 %s32, %s39
    %p248 = scmp.eq.s32.totalorder %s247, 0
    %s250 = sadd.s32 %s249, 1
    %s251 = scalar_select %p248, %s249, %s250
    %p254 = pneg %p248
    %p255 = scmp.eq.s32.totalorder %s24, 3
    %p256 = por %p254, %p255
    %p257 = scmp.ne.s32.totalorder %s249, %s252
    %p258 = scmp.eq.s32.totalorder %s24, 0
    %p259 = por %p257, %p258
    %p260 = scmp.ne.s32.totalorder %s249, %s252
    %p261 = scmp.eq.s32.totalorder %s29, 3
    %p262 = por %p260, %p261
    %p263 = scmp.ne.s32.totalorder %s252, %s253
    %p264 = scmp.eq.s32.totalorder %s29, 0
    %p265 = por %p263, %p264
    %p266 = scmp.ne.s32.totalorder %s252, %s253
    %p267 = scmp.eq.s32.totalorder %s30, 3
    %p268 = por %p266, %p267
    %p270 = scmp.ne.s32.totalorder %s253, %s269
    %p271 = scmp.eq.s32.totalorder %s30, 0
    %p272 = por %p270, %p271
    %s273 = ssub.s32 %s32, %s39
    %p274 = scmp.eq.s32.totalorder %s273, 0
    %s276 = sadd.s32 %s275, 1
    %s277 = scalar_select %p274, %s275, %s276
    %p280 = pneg %p274
    %p281 = scmp.eq.s32.totalorder %s24, 3
    %p282 = por %p280, %p281
    %p283 = scmp.ne.s32.totalorder %s275, %s278
    %p284 = scmp.eq.s32.totalorder %s24, 0
    %p285 = por %p283, %p284
    %p286 = scmp.ne.s32.totalorder %s275, %s278
    %p287 = scmp.eq.s32.totalorder %s29, 3
    %p288 = por %p286, %p287
    %p289 = scmp.ne.s32.totalorder %s278, %s279
    %p290 = scmp.eq.s32.totalorder %s29, 0
    %p291 = por %p289, %p290
    %p292 = scmp.ne.s32.totalorder %s278, %s279
    %p293 = scmp.eq.s32.totalorder %s30, 3
    %p294 = por %p292, %p293
    %p296 = scmp.ne.s32.totalorder %s279, %s295
    %p297 = scmp.eq.s32.totalorder %s30, 0
    %p298 = por %p296, %p297
    %s299 = ssub.s32 %s32, %s39
    %p300 = scmp.eq.s32.totalorder %s299, 0
    %s302 = sadd.s32 %s301, 1
    %s303 = scalar_select %p300, %s301, %s302
    %p306 = pneg %p300
    %p307 = scmp.eq.s32.totalorder %s24, 3
    %p308 = por %p306, %p307
    %p309 = scmp.ne.s32.totalorder %s301, %s304
    %p310 = scmp.eq.s32.totalorder %s24, 0
    %p311 = por %p309, %p310
    %p312 = scmp.ne.s32.totalorder %s301, %s304
    %p313 = scmp.eq.s32.totalorder %s29, 3
    %p314 = por %p312, %p313
    %p315 = scmp.ne.s32.totalorder %s304, %s305
    %p316 = scmp.eq.s32.totalorder %s29, 0
    %p317 = por %p315, %p316
    %p318 = scmp.ne.s32.totalorder %s304, %s305
    %p319 = scmp.eq.s32.totalorder %s30, 3
    %p320 = por %p318, %p319
    %p322 = scmp.ne.s32.totalorder %s305, %s321
    %p323 = scmp.eq.s32.totalorder %s30, 0
    %p324 = por %p322, %p323
    %s325 = ssub.s32 %s32, %s39
    %p326 = scmp.eq.s32.totalorder %s325, 0
    %s328 = sadd.s32 %s327, 1
    %s329 = scalar_select %p326, %s327, %s328
    %p332 = pneg %p326
    %p333 = scmp.eq.s32.totalorder %s24, 3
    %p334 = por %p332, %p333
    %p335 = scmp.ne.s32.totalorder %s327, %s330
    %p336 = scmp.eq.s32.totalorder %s24, 0
    %p337 = por %p335, %p336
    %p338 = scmp.ne.s32.totalorder %s327, %s330
    %p339 = scmp.eq.s32.totalorder %s29, 3
    %p340 = por %p338, %p339
    %p341 = scmp.ne.s32.totalorder %s330, %s331
    %p342 = scmp.eq.s32.totalorder %s29, 0
    %p343 = por %p341, %p342
    %p344 = scmp.ne.s32.totalorder %s330, %s331
    %p345 = scmp.eq.s32.totalorder %s30, 3
    %p346 = por %p344, %p345
    %p348 = scmp.ne.s32.totalorder %s331, %s347
    %p349 = scmp.eq.s32.totalorder %s30, 0
    %p350 = por %p348, %p349
    %s351 = ssub.s32 %s32, %s39
    %p352 = scmp.eq.s32.totalorder %s351, 0
    %s354 = sadd.s32 %s353, 1
    %s355 = scalar_select %p352, %s353, %s354
    %p358 = pneg %p352
    %p359 = scmp.eq.s32.totalorder %s24, 3
    %p360 = por %p358, %p359
    %p361 = scmp.ne.s32.totalorder %s353, %s356
    %p362 = scmp.eq.s32.totalorder %s24, 0
    %p363 = por %p361, %p362
    %p364 = scmp.ne.s32.totalorder %s353, %s356
    %p365 = scmp.eq.s32.totalorder %s29, 3
    %p366 = por %p364, %p365
    %p367 = scmp.ne.s32.totalorder %s356, %s357
    %p368 = scmp.eq.s32.totalorder %s29, 0
    %p369 = por %p367, %p368
    %p370 = scmp.ne.s32.totalorder %s356, %s357
    %p371 = scmp.eq.s32.totalorder %s30, 3
    %p372 = por %p370, %p371
    %p374 = scmp.ne.s32.totalorder %s357, %s373
    %p375 = scmp.eq.s32.totalorder %s30, 0
    %p376 = por %p374, %p375
    %s377 = ssub.s32 %s32, %s39
    %p378 = scmp.eq.s32.totalorder %s377, 0
    %s380 = sadd.s32 %s379, 1
    %s381 = scalar_select %p378, %s379, %s380
    %p384 = pneg %p378
    %p385 = scmp.eq.s32.totalorder %s24, 3
    %p386 = por %p384, %p385
    %p387 = scmp.ne.s32.totalorder %s379, %s382
    %p388 = scmp.eq.s32.totalorder %s24, 0
    %p389 = por %p387, %p388
    %p390 = scmp.ne.s32.totalorder %s379, %s382
    %p391 = scmp.eq.s32.totalorder %s29, 3
    %p392 = por %p390, %p391
    %p393 = scmp.ne.s32.totalorder %s382, %s383
    %p394 = scmp.eq.s32.totalorder %s29, 0
    %p395 = por %p393, %p394
    %p396 = scmp.ne.s32.totalorder %s382, %s383
    %p397 = scmp.eq.s32.totalorder %s30, 3
    %p398 = por %p396, %p397
    %p400 = scmp.ne.s32.totalorder %s383, %s399
    %p401 = scmp.eq.s32.totalorder %s30, 0
    %p402 = por %p400, %p401
    %s403 = ssub.s32 %s32, %s39
    %p404 = scmp.eq.s32.totalorder %s403, 0
    %s406 = sadd.s32 %s405, 1
    %s407 = scalar_select %p404, %s405, %s406
    %p410 = pneg %p404
    %p411 = scmp.eq.s32.totalorder %s24, 3
    %p412 = por %p410, %p411
    %p413 = scmp.ne.s32.totalorder %s405, %s408
    %p414 = scmp.eq.s32.totalorder %s24, 0
    %p415 = por %p413, %p414
    %p416 = scmp.ne.s32.totalorder %s405, %s408
    %p417 = scmp.eq.s32.totalorder %s29, 3
    %p418 = por %p416, %p417
    %p419 = scmp.ne.s32.totalorder %s408, %s409
    %p420 = scmp.eq.s32.totalorder %s29, 0
    %p421 = por %p419, %p420
    %p422 = scmp.ne.s32.totalorder %s408, %s409
    %p423 = scmp.eq.s32.totalorder %s30, 3
    %p424 = por %p422, %p423
    %p426 = scmp.ne.s32.totalorder %s409, %s425
    %p427 = scmp.eq.s32.totalorder %s30, 0
    %p428 = por %p426, %p427
    %s429 = ssub.s32 %s32, %s39
    %p430 = scmp.eq.s32.totalorder %s429, 0
    %s432 = sadd.s32 %s431, 1
    %s433 = scalar_select %p430, %s431, %s432
    %p436 = pneg %p430
    %p437 = scmp.eq.s32.totalorder %s24, 3
    %p438 = por %p436, %p437
    %p439 = scmp.ne.s32.totalorder %s431, %s434
    %p440 = scmp.eq.s32.totalorder %s24, 0
    %p441 = por %p439, %p440
    %p442 = scmp.ne.s32.totalorder %s431, %s434
    %p443 = scmp.eq.s32.totalorder %s29, 3
    %p444 = por %p442, %p443
    %p445 = scmp.ne.s32.totalorder %s434, %s435
    %p446 = scmp.eq.s32.totalorder %s29, 0
    %p447 = por %p445, %p446
    %p448 = scmp.ne.s32.totalorder %s434, %s435
    %p449 = scmp.eq.s32.totalorder %s30, 3
    %p450 = por %p448, %p449
    %p452 = scmp.ne.s32.totalorder %s435, %s451
    %p453 = scmp.eq.s32.totalorder %s30, 0
    %p454 = por %p452, %p453
    %s455 = ssub.s32 %s32, %s39
    %p456 = scmp.eq.s32.totalorder %s455, 0
    %s458 = sadd.s32 %s457, 1
    %s459 = scalar_select %p456, %s457, %s458
    %p462 = pneg %p456
    %p463 = scmp.eq.s32.totalorder %s24, 3
    %p464 = por %p462, %p463
    %p465 = scmp.ne.s32.totalorder %s457, %s460
    %p466 = scmp.eq.s32.totalorder %s24, 0
    %p467 = por %p465, %p466
    %p468 = scmp.ne.s32.totalorder %s457, %s460
    %p469 = scmp.eq.s32.totalorder %s29, 3
    %p470 = por %p468, %p469
    %p471 = scmp.ne.s32.totalorder %s460, %s461
    %p472 = scmp.eq.s32.totalorder %s29, 0
    %p473 = por %p471, %p472
    %p474 = scmp.ne.s32.totalorder %s460, %s461
    %p475 = scmp.eq.s32.totalorder %s30, 3
    %p476 = por %p474, %p475
    %p478 = scmp.ne.s32.totalorder %s461, %s477
    %p479 = scmp.eq.s32.totalorder %s30, 0
    %p480 = por %p478, %p479
    %s481 = ssub.s32 %s32, %s39
    %p482 = scmp.eq.s32.totalorder %s481, 0
    %s484 = sadd.s32 %s483, 1
    %s485 = scalar_select %p482, %s483, %s484
    %p488 = pneg %p482
    %p489 = scmp.eq.s32.totalorder %s24, 3
    %p490 = por %p488, %p489
    %p491 = scmp.ne.s32.totalorder %s483, %s486
    %p492 = scmp.eq.s32.totalorder %s24, 0
    %p493 = por %p491, %p492
    %p494 = scmp.ne.s32.totalorder %s483, %s486
    %p495 = scmp.eq.s32.totalorder %s29, 3
    %p496 = por %p494, %p495
    %p497 = scmp.ne.s32.totalorder %s486, %s487
    %p498 = scmp.eq.s32.totalorder %s29, 0
    %p499 = por %p497, %p498
    %p500 = scmp.ne.s32.totalorder %s486, %s487
    %p501 = scmp.eq.s32.totalorder %s30, 3
    %p502 = por %p500, %p501
    %p504 = scmp.ne.s32.totalorder %s487, %s503
    %p505 = scmp.eq.s32.totalorder %s30, 0
    %p506 = por %p504, %p505
    %s507 = ssub.s32 %s31, %s43
    %p508 = scmp.eq.s32.totalorder %s507, 0
    %s510 = sadd.s32 %s509, 1
    %s511 = scalar_select %p508, %s509, %s510
    %p514 = pneg %p508
    %p515 = scmp.eq.s32.totalorder %s24, 3
    %p516 = por %p514, %p515
    %p517 = scmp.ne.s32.totalorder %s509, %s512
    %p518 = scmp.eq.s32.totalorder %s24, 0
    %p519 = por %p517, %p518
    %p520 = scmp.ne.s32.totalorder %s509, %s512
    %p521 = scmp.eq.s32.totalorder %s29, 3
    %p522 = por %p520, %p521
    %p523 = scmp.ne.s32.totalorder %s512, %s513
    %p524 = scmp.eq.s32.totalorder %s29, 0
    %p525 = por %p523, %p524
    %p526 = scmp.ne.s32.totalorder %s512, %s513
    %p527 = scmp.eq.s32.totalorder %s30, 3
    %p528 = por %p526, %p527
    %p530 = scmp.ne.s32.totalorder %s513, %s529
    %p531 = scmp.eq.s32.totalorder %s30, 0
    %p532 = por %p530, %p531
    %p533 = scmp.le.s32.totalorder 1, %s24
    %p534 = scmp.lt.s32.totalorder %s24, 5
    %p535 = pnand %p533, %p534
    %p536 = pneg %p535
    // Predicated region
    $region9: #{clip_forward.6} parent=5 // pred_check
      _
    $region10: #{clip_forward.6} parent=5 // pred_check_branch
      %538 = sbr.rel (%p535) target = $region12
    $region11: #{clip_forward.6} parent=5 // pred_region
      %s539 = ssub.s32 %s24, 1
      // Predicated region
      $region13: #{clip_forward.6} parent=11 // pred_check
        %p540 = pneg %p83
      $region14: #{clip_forward.6} parent=11 // pred_check_branch
        %542 = sbr.rel (%p540) target = $region16
      $region15: #{clip_forward.6} parent=11 // pred_region
        _
      $region16: #{clip_forward.6} parent=11 // pred_fallthru
        _
    $region12: #{clip_forward.6} parent=5 // pred_fallthru
      _
    %p543 = scmp.lt.s32.totalorder %s24, 4
    // Predicated region
    $region17: #{clip_forward.6} parent=5 // pred_check
      %p544 = pneg %p543
    $region18: #{clip_forward.6} parent=5 // pred_check_branch
      %546 = sbr.rel (%p544) target = $region20
    $region19: #{clip_forward.6} parent=5 // pred_region
      // Predicated region
      $region21: #{clip_forward.6} parent=19 // pred_check
        %p547 = pneg %p56
      $region22: #{clip_forward.6} parent=19 // pred_check_branch
        %549 = sbr.rel (%p547) target = $region24
      $region23: #{clip_forward.6} parent=19 // pred_region
        %p550 = scmp.lt.s32.totalorder %s31, 1
        %s551 = scalar_select %p550, %s31, 1
        %s552 = smul.addr %s551, 3
        %s553 = smul.addr %s552, 8
        %s554 = scalar_lea.vmem %s0, %s553
      $region24: #{clip_forward.6} parent=19 // pred_fallthru
        _
      // Predicated region
      $region25: #{clip_forward.6} parent=19 // pred_check
        %p555 = pneg %p103
      $region26: #{clip_forward.6} parent=19 // pred_check_branch
        %557 = sbr.rel (%p555) target = $region28
      $region27: #{clip_forward.6} parent=19 // pred_region
        %p558 = scmp.lt.s32.totalorder %s32, 1
        %s559 = scalar_select %p558, %s32, 1
        %s560 = scalar_lea.vmem %s2, %s559
      $region28: #{clip_forward.6} parent=19 // pred_fallthru
        _
      // Predicated region
      $region29: #{clip_forward.6} parent=19 // pred_check
        %p561 = pneg %p129
      $region30: #{clip_forward.6} parent=19 // pred_check_branch
        %563 = sbr.rel (%p561) target = $region32
      $region31: #{clip_forward.6} parent=19 // pred_region
        %p564 = scmp.lt.s32.totalorder %s32, 1
        %s565 = scalar_select %p564, %s32, 1
        %s566 = scalar_lea.vmem %s3, %s565
      $region32: #{clip_forward.6} parent=19 // pred_fallthru
        _
      // Predicated region
      $region33: #{clip_forward.6} parent=19 // pred_check
        %p567 = pneg %p155
      $region34: #{clip_forward.6} parent=19 // pred_check_branch
        %569 = sbr.rel (%p567) target = $region36
      $region35: #{clip_forward.6} parent=19 // pred_region
        %p570 = scmp.lt.s32.totalorder %s32, 1
        %s571 = scalar_select %p570, %s32, 1
        %s572 = smul.addr %s571, 4
        %s573 = smul.addr %s572, 8
        %s574 = scalar_lea.vmem %s4, %s573
      $region36: #{clip_forward.6} parent=19 // pred_fallthru
        _
      // Predicated region
      $region37: #{clip_forward.6} parent=19 // pred_check
        %p575 = pneg %p181
      $region38: #{clip_forward.6} parent=19 // pred_check_branch
        %577 = sbr.rel (%p575) target = $region40
      $region39: #{clip_forward.6} parent=19 // pred_region
        %p578 = scmp.lt.s32.totalorder %s32, 1
        %s579 = scalar_select %p578, %s32, 1
        %s580 = smul.addr %s579, 4
        %s581 = smul.addr %s580, 8
        %s582 = scalar_lea.vmem %s5, %s581
      $region40: #{clip_forward.6} parent=19 // pred_fallthru
        _
      // Predicated region
      $region41: #{clip_forward.6} parent=19 // pred_check
        %p583 = pneg %p207
      $region42: #{clip_forward.6} parent=19 // pred_check_branch
        %585 = sbr.rel (%p583) target = $region44
      $region43: #{clip_forward.6} parent=19 // pred_region
        %p586 = scmp.lt.s32.totalorder %s32, 1
        %s587 = scalar_select %p586, %s32, 1
        %s588 = smul.addr %s587, 4
        %s589 = smul.addr %s588, 8
        %s590 = scalar_lea.vmem %s6, %s589
      $region44: #{clip_forward.6} parent=19 // pred_fallthru
        _
      // Predicated region
      $region45: #{clip_forward.6} parent=19 // pred_check
        %p591 = pneg %p233
      $region46: #{clip_forward.6} parent=19 // pred_check_branch
        %593 = sbr.rel (%p591) target = $region48
      $region47: #{clip_forward.6} parent=19 // pred_region
        %p594 = scmp.lt.s32.totalorder %s32, 1
        %s595 = scalar_select %p594, %s32, 1
        %s596 = scalar_lea.vmem %s7, %s595
      $region48: #{clip_forward.6} parent=19 // pred_fallthru
        _
      // Predicated region
      $region49: #{clip_forward.6} parent=19 // pred_check
        %p597 = pneg %p259
      $region50: #{clip_forward.6} parent=19 // pred_check_branch
        %599 = sbr.rel (%p597) target = $region52
      $region51: #{clip_forward.6} parent=19 // pred_region
        %p600 = scmp.lt.s32.totalorder %s32, 1
        %s601 = scalar_select %p600, %s32, 1
        %s602 = scalar_lea.vmem %s8, %s601
      $region52: #{clip_forward.6} parent=19 // pred_fallthru
        _
      // Predicated region
      $region53: #{clip_forward.6} parent=19 // pred_check
        %p603 = pneg %p285
      $region54: #{clip_forward.6} parent=19 // pred_check_branch
        %605 = sbr.rel (%p603) target = $region56
      $region55: #{clip_forward.6} parent=19 // pred_region
        %p606 = scmp.lt.s32.totalorder %s32, 1
        %s607 = scalar_select %p606, %s32, 1
        %s608 = scalar_lea.vmem %s9, %s607
      $region56: #{clip_forward.6} parent=19 // pred_fallthru
        _
      // Predicated region
      $region57: #{clip_forward.6} parent=19 // pred_check
        %p609 = pneg %p311
      $region58: #{clip_forward.6} parent=19 // pred_check_branch
        %611 = sbr.rel (%p609) target = $region60
      $region59: #{clip_forward.6} parent=19 // pred_region
        %p612 = scmp.lt.s32.totalorder %s32, 1
        %s613 = scalar_select %p612, %s32, 1
        %s614 = smul.addr %s613, 4
        %s615 = smul.addr %s614, 8
        %s616 = scalar_lea.vmem %s10, %s615
      $region60: #{clip_forward.6} parent=19 // pred_fallthru
        _
      // Predicated region
      $region61: #{clip_forward.6} parent=19 // pred_check
        %p617 = pneg %p337
      $region62: #{clip_forward.6} parent=19 // pred_check_branch
        %619 = sbr.rel (%p617) target = $region64
      $region63: #{clip_forward.6} parent=19 // pred_region
        %p620 = scmp.lt.s32.totalorder %s32, 1
        %s621 = scalar_select %p620, %s32, 1
        %s622 = scalar_lea.vmem %s11, %s621
      $region64: #{clip_forward.6} parent=19 // pred_fallthru
        _
      // Predicated region
      $region65: #{clip_forward.6} parent=19 // pred_check
        %p623 = pneg %p363
      $region66: #{clip_forward.6} parent=19 // pred_check_branch
        %625 = sbr.rel (%p623) target = $region68
      $region67: #{clip_forward.6} parent=19 // pred_region
        %p626 = scmp.lt.s32.totalorder %s32, 1
        %s627 = scalar_select %p626, %s32, 1
        %s628 = scalar_lea.vmem %s12, %s627
      $region68: #{clip_forward.6} parent=19 // pred_fallthru
        _
      // Predicated region
      $region69: #{clip_forward.6} parent=19 // pred_check
        %p629 = pneg %p389
      $region70: #{clip_forward.6} parent=19 // pred_check_branch
        %631 = sbr.rel (%p629) target = $region72
      $region71: #{clip_forward.6} parent=19 // pred_region
        %p632 = scmp.lt.s32.totalorder %s32, 1
        %s633 = scalar_select %p632, %s32, 1
        %s634 = scalar_lea.vmem %s13, %s633
      $region72: #{clip_forward.6} parent=19 // pred_fallthru
        _
      // Predicated region
      $region73: #{clip_forward.6} parent=19 // pred_check
        %p635 = pneg %p415
      $region74: #{clip_forward.6} parent=19 // pred_check_branch
        %637 = sbr.rel (%p635) target = $region76
      $region75: #{clip_forward.6} parent=19 // pred_region
        %p638 = scmp.lt.s32.totalorder %s32, 1
        %s639 = scalar_select %p638, %s32, 1
        %s640 = smul.addr %s639, 4
        %s641 = smul.addr %s640, 8
        %s642 = scalar_lea.vmem %s14, %s641
      $region76: #{clip_forward.6} parent=19 // pred_fallthru
        _
      // Predicated region
      $region77: #{clip_forward.6} parent=19 // pred_check
        %p643 = pneg %p441
      $region78: #{clip_forward.6} parent=19 // pred_check_branch
        %645 = sbr.rel (%p643) target = $region80
      $region79: #{clip_forward.6} parent=19 // pred_region
        %p646 = scmp.lt.s32.totalorder %s32, 1
        %s647 = scalar_select %p646, %s32, 1
        %s648 = scalar_lea.vmem %s15, %s647
      $region80: #{clip_forward.6} parent=19 // pred_fallthru
        _
      // Predicated region
      $region81: #{clip_forward.6} parent=19 // pred_check
        %p649 = pneg %p467
      $region82: #{clip_forward.6} parent=19 // pred_check_branch
        %651 = sbr.rel (%p649) target = $region84
      $region83: #{clip_forward.6} parent=19 // pred_region
        %p652 = scmp.lt.s32.totalorder %s32, 1
        %s653 = scalar_select %p652, %s32, 1
        %s654 = smul.addr %s653, 16
        %s655 = smul.addr %s654, 8
        %s656 = scalar_lea.vmem %s16, %s655
      $region84: #{clip_forward.6} parent=19 // pred_fallthru
        _
      // Predicated region
      $region85: #{clip_forward.6} parent=19 // pred_check
        %p657 = pneg %p493
      $region86: #{clip_forward.6} parent=19 // pred_check_branch
        %659 = sbr.rel (%p657) target = $region88
      $region87: #{clip_forward.6} parent=19 // pred_region
        %p660 = scmp.lt.s32.totalorder %s32, 1
        %s661 = scalar_select %p660, %s32, 1
        %s662 = scalar_lea.vmem %s17, %s661
      $region88: #{clip_forward.6} parent=19 // pred_fallthru
        _
    $region20: #{clip_forward.6} parent=5 // pred_fallthru
      _
    %p663 = scmp.le.s32.totalorder 1, %s24
    %p664 = scmp.lt.s32.totalorder %s24, 5
    %p665 = pnand %p663, %p664
    %p666 = pneg %p665
    // Predicated region
    $region89: #{clip_forward.6} parent=5 // pred_check
      _
    $region90: #{clip_forward.6} parent=5 // pred_check_branch
      %668 = sbr.rel (%p665) target = $region92
    $region91: #{clip_forward.6} parent=5 // pred_region
      %s669 = ssub.s32 %s24, 1
      %p670 = scmp.lt.s32.totalorder %s33, 1
      %s671 = scalar_select %p670, %s33, 1
      %s672 = smul.addr %s671, 3
      %s673 = smul.addr %s672, 8
      %s674 = scalar_lea.vmem %s0, %s673
      %p675 = pneg %p62
      %p676 = pneg %p59
      %p677 = pneg %p83
      %p678 = pneg %p80
      %p679 = scmp.lt.s32.totalorder %s34, 1
      %s680 = scalar_select %p679, %s34, 1
      %s681 = scalar_lea.vmem %s2, %s680
      %p682 = pneg %p109
      %p683 = pneg %p106
      %p684 = scmp.lt.s32.totalorder %s34, 1
      %s685 = scalar_select %p684, %s34, 1
      %s686 = scalar_lea.vmem %s3, %s685
      %p687 = pneg %p135
      %p688 = pneg %p132
      %p689 = scmp.lt.s32.totalorder %s34, 1
      %s690 = scalar_select %p689, %s34, 1
      %s691 = smul.addr %s690, 4
      %s692 = smul.addr %s691, 8
      %s693 = scalar_lea.vmem %s4, %s692
      %p694 = pneg %p161
      %p695 = pneg %p158
      %p696 = scmp.lt.s32.totalorder %s34, 1
      %s697 = scalar_select %p696, %s34, 1
      %s698 = smul.addr %s697, 4
      %s699 = smul.addr %s698, 8
      %s700 = scalar_lea.vmem %s5, %s699
      %p701 = pneg %p187
      %p702 = pneg %p184
      %p703 = scmp.lt.s32.totalorder %s34, 1
      %s704 = scalar_select %p703, %s34, 1
      %s705 = smul.addr %s704, 4
      %s706 = smul.addr %s705, 8
      %s707 = scalar_lea.vmem %s6, %s706
      %p708 = pneg %p213
      %p709 = pneg %p210
      %p710 = scmp.lt.s32.totalorder %s34, 1
      %s711 = scalar_select %p710, %s34, 1
      %s712 = scalar_lea.vmem %s7, %s711
      %p713 = pneg %p239
      %p714 = pneg %p236
      %p715 = scmp.lt.s32.totalorder %s34, 1
      %s716 = scalar_select %p715, %s34, 1
      %s717 = scalar_lea.vmem %s8, %s716
      %p718 = pneg %p265
      %p719 = pneg %p262
      %p720 = scmp.lt.s32.totalorder %s34, 1
      %s721 = scalar_select %p720, %s34, 1
      %s722 = scalar_lea.vmem %s9, %s721
      %p723 = pneg %p291
      %p724 = pneg %p288
      %p725 = scmp.lt.s32.totalorder %s34, 1
      %s726 = scalar_select %p725, %s34, 1
      %s727 = smul.addr %s726, 4
      %s728 = smul.addr %s727, 8
      %s729 = scalar_lea.vmem %s10, %s728
      %p730 = pneg %p317
      %p731 = pneg %p314
      %p732 = scmp.lt.s32.totalorder %s34, 1
      %s733 = scalar_select %p732, %s34, 1
      %s734 = scalar_lea.vmem %s11, %s733
      %p735 = pneg %p343
      %p736 = pneg %p340
      %p737 = scmp.lt.s32.totalorder %s34, 1
      %s738 = scalar_select %p737, %s34, 1
      %s739 = scalar_lea.vmem %s12, %s738
      %p740 = pneg %p369
      %p741 = pneg %p366
      %p742 = scmp.lt.s32.totalorder %s34, 1
      %s743 = scalar_select %p742, %s34, 1
      %s744 = scalar_lea.vmem %s13, %s743
      %p745 = pneg %p395
      %p746 = pneg %p392
      %p747 = scmp.lt.s32.totalorder %s34, 1
      %s748 = scalar_select %p747, %s34, 1
      %s749 = smul.addr %s748, 4
      %s750 = smul.addr %s749, 8
      %s751 = scalar_lea.vmem %s14, %s750
      %p752 = pneg %p421
      %p753 = pneg %p418
      %p754 = scmp.lt.s32.totalorder %s34, 1
      %s755 = scalar_select %p754, %s34, 1
      %s756 = scalar_lea.vmem %s15, %s755
      %p757 = pneg %p447
      %p758 = pneg %p444
      %p759 = scmp.lt.s32.totalorder %s34, 1
      %s760 = scalar_select %p759, %s34, 1
      %s761 = smul.addr %s760, 16
      %s762 = smul.addr %s761, 8
      %s763 = scalar_lea.vmem %s16, %s762
      %p764 = pneg %p473
      %p765 = pneg %p470
      %p766 = scmp.lt.s32.totalorder %s34, 1
      %s767 = scalar_select %p766, %s34, 1
      %s768 = scalar_lea.vmem %s17, %s767
      %p769 = pneg %p499
      %p770 = pneg %p496
      %p771 = pneg %p525
      %p772 = pneg %p522
      %p773 = scmp.lt.s32.totalorder %s33, 1
      %s774 = scalar_select %p773, %s33, 1
      %s775 = smul.addr %s774, 3
      %s776 = smul.addr %s775, 8
      %s777 = scalar_lea.vmem %s18, %s776
      %p778 = scmp.lt.s32.totalorder %s33, 1
      %s779 = scalar_select %p778, %s33, 1
      %s780 = smul.addr %s779, 3
      %s781 = smul.addr %s780, 8
      %s782 = scalar_lea.vmem %s0, %s781
      %p783 = scmp.lt.s32.totalorder %s34, 1
      %s784 = scalar_select %p783, %s34, 1
      %s785 = scalar_lea.vmem %s2, %s784
      %p786 = scmp.lt.s32.totalorder %s34, 1
      %s787 = scalar_select %p786, %s34, 1
      %s788 = scalar_lea.vmem %s3, %s787
      %p789 = scmp.lt.s32.totalorder %s34, 1
      %s790 = scalar_select %p789, %s34, 1
      %s791 = smul.addr %s790, 4
      %s792 = smul.addr %s791, 8
      %s793 = scalar_lea.vmem %s4, %s792
      %p794 = scmp.lt.s32.totalorder %s34, 1
      %s795 = scalar_select %p794, %s34, 1
      %s796 = smul.addr %s795, 4
      %s797 = smul.addr %s796, 8
      %s798 = scalar_lea.vmem %s5, %s797
      %p799 = scmp.lt.s32.totalorder %s34, 1
      %s800 = scalar_select %p799, %s34, 1
      %s801 = smul.addr %s800, 4
      %s802 = smul.addr %s801, 8
      %s803 = scalar_lea.vmem %s6, %s802
      %p804 = scmp.lt.s32.totalorder %s34, 1
      %s805 = scalar_select %p804, %s34, 1
      %s806 = scalar_lea.vmem %s7, %s805
      %p807 = scmp.lt.s32.totalorder %s34, 1
      %s808 = scalar_select %p807, %s34, 1
      %s809 = scalar_lea.vmem %s8, %s808
      %p810 = scmp.lt.s32.totalorder %s34, 1
      %s811 = scalar_select %p810, %s34, 1
      %s812 = scalar_lea.vmem %s9, %s811
      %p813 = scmp.lt.s32.totalorder %s34, 1
      %s814 = scalar_select %p813, %s34, 1
      %s815 = smul.addr %s814, 4
      %s816 = smul.addr %s815, 8
      %s817 = scalar_lea.vmem %s10, %s816
      %p818 = scmp.lt.s32.totalorder %s34, 1
      %s819 = scalar_select %p818, %s34, 1
      %s820 = scalar_lea.vmem %s11, %s819
      %p821 = scmp.lt.s32.totalorder %s34, 1
      %s822 = scalar_select %p821, %s34, 1
      %s823 = scalar_lea.vmem %s12, %s822
      %p824 = scmp.lt.s32.totalorder %s34, 1
      %s825 = scalar_select %p824, %s34, 1
      %s826 = scalar_lea.vmem %s13, %s825
      %p827 = scmp.lt.s32.totalorder %s34, 1
      %s828 = scalar_select %p827, %s34, 1
      %s829 = smul.addr %s828, 4
      %s830 = smul.addr %s829, 8
      %s831 = scalar_lea.vmem %s14, %s830
      %p832 = scmp.lt.s32.totalorder %s34, 1
      %s833 = scalar_select %p832, %s34, 1
      %s834 = scalar_lea.vmem %s15, %s833
      %p835 = scmp.lt.s32.totalorder %s34, 1
      %s836 = scalar_select %p835, %s34, 1
      %s837 = smul.addr %s836, 16
      %s838 = smul.addr %s837, 8
      %s839 = scalar_lea.vmem %s16, %s838
      %p840 = scmp.lt.s32.totalorder %s34, 1
      %s841 = scalar_select %p840, %s34, 1
      %s842 = scalar_lea.vmem %s17, %s841
      %p843 = scmp.lt.s32.totalorder %s33, 1
      %s844 = scalar_select %p843, %s33, 1
      %s845 = smul.addr %s844, 3
      %s846 = smul.addr %s845, 8
      %s847 = scalar_lea.vmem %s18, %s846
      %p849 = scmp.eq.s32.totalorder %s34, 0
      // Predicated region
      $region93: #{clip_forward.6} parent=91 // pred_check
        %p850 = pneg %p849
      $region94: #{clip_forward.6} parent=91 // pred_check_branch
        %852 = sbr.rel (%p850) target = $region96
      $region95: #{clip_forward.6} parent=91 // pred_region
        %v853 = vld [vmem:[%s782] sm:$0xff]
        %v854 = vld [vmem:[%s782 + $0x8] sm:$0xff]
        %v855 = vld [vmem:[%s782 + $0x10] sm:$0x1]
        %v856 = vld [vmem:[%s1] sm:$0xff]
        %v857 = vld [vmem:[%s1 + $0x8] sm:$0xff]
        %v858 = vld [vmem:[%s1 + $0x10] sm:$0x1]
        %v859 = vadd.f32 %v853, %v856
        %v860 = vadd.f32 %v854, %v857
        %v861 = vadd.f32 %v855, %v858
        %vm862 = vcmask 261120
        %863 = vst.msk [vmem:[%s847] sm:$0xff] %vm862, %v859
        %864 = vst.msk [vmem:[%s847 + $0x8] sm:$0xff] %vm862, %v860
        %vm865 = vcmask 253952
        %866 = vst.msk [vmem:[%s847 + $0x10] sm:$0x1] %vm865, %v861
      $region96: #{clip_forward.6} parent=91 // pred_fallthru
        _
      %v867 = vld [vmem:[%s847] sm:$0xff]
      %v868 = vld [vmem:[%s847 + $0x8] sm:$0xff]
      %v869 = vld [vmem:[%s847 + $0x10] sm:$0x1]
      %v870 = vld [vmem:[%s785] sm:$0x1]
      %v871 = vld [vmem:[%s788] sm:$0x1]
      %vm872 = vcmask 261120
      %v873 = vsel %vm872, %v867, 0.0
      %874 = vadd.xlane.f32.xlu0 %v873
      %v875 = vpop.xlane.xlu0 %874
      %v876 = vsel %vm872, %v868, 0.0
      %877 = vadd.xlane.f32.xlu0 %v876
      %v878 = vpop.xlane.xlu0 %877
      %vm879 = vcmask 253952
      %v880 = vsel %vm879, %v869, 0.0
      %881 = vadd.xlane.f32.xlu0 %v880
      %v882 = vpop.xlane.xlu0 %881
      %v883 = vrcp.pop 32.0
      %v884 = vmul.f32 %v875, %v883
      %v885 = vmul.f32 %v878, %v883
      %v886 = vmul.f32 %v882, %v883
      %v887 = vsub.f32 %v867, %v884
      %v888 = vsub.f32 %v868, %v885
      %v889 = vsub.f32 %v869, %v886
      %v890 = vmul.f32 %v887, %v887
      %v891 = vmul.f32 %v888, %v888
      %v892 = vmul.f32 %v889, %v889
      %v893 = vsel %vm872, %v890, 0.0
      %894 = vadd.xlane.f32.xlu0 %v893
      %v895 = vpop.xlane.xlu0 %894
      %v896 = vsel %vm872, %v891, 0.0
      %897 = vadd.xlane.f32.xlu0 %v896
      %v898 = vpop.xlane.xlu0 %897
      %v899 = vsel %vm879, %v892, 0.0
      %900 = vadd.xlane.f32.xlu0 %v899
      %v901 = vpop.xlane.xlu0 %900
      %v902 = vmul.f32 %v895, %v883
      %v903 = vmul.f32 %v898, %v883
      %v904 = vmul.f32 %v901, %v883
      %v905 = vadd.f32 %v902, 1e-05
      %v906 = vadd.f32 %v903, 1e-05
      %v907 = vadd.f32 %v904, 1e-05
      %v908 = vrsqrt.pop %v905
      %v909 = vrsqrt.pop %v906
      %v910 = vrsqrt.pop %v907
      %v911 = vmul.f32 %v887, %v908
      %v912 = vmul.f32 %v888, %v909
      %v913 = vmul.f32 %v889, %v910
      %v915 = vlaneseq
      %v916 = vshrl.u32 %v915, 7
      %v917 = vsub.s32 0, %v916
      %v918 = vrot.slane %v870, %v917
      %v920 = vmul.f32 %v911, %v918
      %v921 = vmul.f32 %v912, %v918
      %v922 = vmul.f32 %v913, %v918
      %v924 = vlaneseq
      %v925 = vshrl.u32 %v924, 7
      %v926 = vsub.s32 0, %v925
      %v927 = vrot.slane %v871, %v926
      %v929 = vadd.f32 %v920, %v927
      %v930 = vadd.f32 %v921, %v927
      %v931 = vadd.f32 %v922, %v927
      %v932 = vpack.c.bf16 %v930, %v929
      %v933 = vpack.c.bf16 %v931, %v931
      %v934 = vld [vmem:[%s793] sm:$0xff]
      %v935 = vld [vmem:[%s793 + $0x8] sm:$0xff]
      %v936 = vld [vmem:[%s793 + $0x10] sm:$0xff]
      %v937 = vld [vmem:[%s793 + $0x18] sm:$0xff]
      %v938 = vpack.c.bf16 %v935, %v934
      %v939 = vpack.c.bf16 %v937, %v936
      %v940 = vld [vmem:[%s806] sm:$0x1]
      %v942 = vlaneseq
      %v943 = vshrl.u32 %v942, 7
      %v944 = vsub.s32 0, %v943
      %v945 = vrot.slane %v940, %v944
      %v948 = vsel %vm872, %v932, 0
      %v951 = vsel %vm872, %v933, 0
      %953 = vmatprep.subr.bf16.mxu0 0
      %954 = vmatpush1.bf16.msra.mxu0 %v938
      %955 = vmatprep.subr.bf16.mxu0 0
      %956 = vmatpush1.bf16.msra.mxu0 %v939
      %957 = vmatprep.subr.bf16.mxu0 0
      %958 = vmatpush1.bf16.msra.mxu0 0
      %959 = vmatprep.subr.bf16.mxu0 0
      %960 = vmatpush1.bf16.msra.mxu0 0
      %961 = vmatprep.subr.bf16.mxu0 0
      %962 = vmatpush1.bf16.msra.mxu0 0
      %963 = vmatprep.subr.bf16.mxu0 0
      %964 = vmatpush1.bf16.msra.mxu0 0
      %965 = vmatprep.subr.bf16.mxu0 0
      %966 = vmatpush1.bf16.msra.mxu0 0
      %967 = vmatprep.subr.bf16.mxu0 0
      %968 = vmatpush1.bf16.msra.mxu0 0
      %969 = vmatprep.subr.bf16.mxu0 0
      %970 = vmatpush1.bf16.msra.mxu0 0
      %971 = vmatprep.subr.bf16.mxu0 0
      %972 = vmatpush1.bf16.msra.mxu0 0
      %973 = vmatprep.subr.bf16.mxu0 0
      %974 = vmatpush1.bf16.msra.mxu0 0
      %975 = vmatprep.subr.bf16.mxu0 0
      %976 = vmatpush1.bf16.msra.mxu0 0
      %977 = vmatprep.subr.bf16.mxu0 0
      %978 = vmatpush1.bf16.msra.mxu0 0
      %979 = vmatprep.subr.bf16.mxu0 0
      %980 = vmatpush1.bf16.msra.mxu0 0
      %981 = vmatprep.subr.bf16.mxu0 0
      %982 = vmatpush1.bf16.msra.mxu0 0
      %983 = vmatprep.subr.bf16.mxu0 0
      %984 = vmatpush1.bf16.msra.mxu0 0
      %985 = vmatprep.mubr.bf16.mxu0 0
      %986 = vmatmul.mubr.bf16.gmra.mrb[0].mxu0 %v948
      %v987 = vpop.f32.mrb[0].mxu0
      %v988 = vadd.f32 %v945, %v987
      %v989 = vpop.f32.mrb[0].mxu0
      %v990 = vpop.f32.mrb[0].mxu0
      %v991 = vadd.f32 %v945, %v990
      %v992 = vpop.f32.mrb[0].mxu0
      %993 = vmatprep.mubr.bf16.mxu0 0
      %994 = vmatmul.mubr.bf16.gmra.mrb[0].mxu0 %v951
      %v995 = vpop.f32.mrb[0].mxu0
      %v996 = vadd.f32 %v945, %v995
      %v997 = vpop.f32.mrb[0].mxu0
      %v998 = vpop.f32.mrb[0].mxu0
      %v999 = vpop.f32.mrb[0].mxu0
      %1000 = vdwg.mxu0
      %v1001 = vld [vmem:[%s798] sm:$0xff]
      %v1002 = vld [vmem:[%s798 + $0x8] sm:$0xff]
      %v1003 = vld [vmem:[%s798 + $0x10] sm:$0xff]
      %v1004 = vld [vmem:[%s798 + $0x18] sm:$0xff]
      %v1005 = vpack.c.bf16 %v1002, %v1001
      %v1006 = vpack.c.bf16 %v1004, %v1003
      %v1007 = vld [vmem:[%s809] sm:$0x1]
      %v1009 = vlaneseq
      %v1010 = vshrl.u32 %v1009, 7
      %v1011 = vsub.s32 0, %v1010
      %v1012 = vrot.slane %v1007, %v1011
      %1014 = vmatprep.subr.bf16.mxu0 0
      %1015 = vmatpush1.bf16.msra.mxu0 %v1005
      %1016 = vmatprep.subr.bf16.mxu0 0
      %1017 = vmatpush1.bf16.msra.mxu0 %v1006
      %1018 = vmatprep.subr.bf16.mxu0 0
      %1019 = vmatpush1.bf16.msra.mxu0 0
      %1020 = vmatprep.subr.bf16.mxu0 0
      %1021 = vmatpush1.bf16.msra.mxu0 0
      %1022 = vmatprep.subr.bf16.mxu0 0
      %1023 = vmatpush1.bf16.msra.mxu0 0
      %1024 = vmatprep.subr.bf16.mxu0 0
      %1025 = vmatpush1.bf16.msra.mxu0 0
      %1026 = vmatprep.subr.bf16.mxu0 0
      %1027 = vmatpush1.bf16.msra.mxu0 0
      %1028 = vmatprep.subr.bf16.mxu0 0
      %1029 = vmatpush1.bf16.msra.mxu0 0
      %1030 = vmatprep.subr.bf16.mxu0 0
      %1031 = vmatpush1.bf16.msra.mxu0 0
      %1032 = vmatprep.subr.bf16.mxu0 0
      %1033 = vmatpush1.bf16.msra.mxu0 0
      %1034 = vmatprep.subr.bf16.mxu0 0
      %1035 = vmatpush1.bf16.msra.mxu0 0
      %1036 = vmatprep.subr.bf16.mxu0 0
      %1037 = vmatpush1.bf16.msra.mxu0 0
      %1038 = vmatprep.subr.bf16.mxu0 0
      %1039 = vmatpush1.bf16.msra.mxu0 0
      %1040 = vmatprep.subr.bf16.mxu0 0
      %1041 = vmatpush1.bf16.msra.mxu0 0
      %1042 = vmatprep.subr.bf16.mxu0 0
      %1043 = vmatpush1.bf16.msra.mxu0 0
      %1044 = vmatprep.subr.bf16.mxu0 0
      %1045 = vmatpush1.bf16.msra.mxu0 0
      %1046 = vmatprep.mubr.bf16.mxu0 0
      %1047 = vmatmul.mubr.bf16.gmra.mrb[0].mxu0 %v948
      %v1048 = vpop.f32.mrb[0].mxu0
      %v1049 = vadd.f32 %v1012, %v1048
      %v1050 = vpop.f32.mrb[0].mxu0
      %v1051 = vpop.f32.mrb[0].mxu0
      %v1052 = vadd.f32 %v1012, %v1051
      %v1053 = vpop.f32.mrb[0].mxu0
      %1054 = vmatprep.mubr.bf16.mxu0 0
      %1055 = vmatmul.mubr.bf16.gmra.mrb[0].mxu0 %v951
      %v1056 = vpop.f32.mrb[0].mxu0
      %v1057 = vadd.f32 %v1012, %v1056
      %v1058 = vpop.f32.mrb[0].mxu0
      %v1059 = vpop.f32.mrb[0].mxu0
      %v1060 = vpop.f32.mrb[0].mxu0
      %1061 = vdwg.mxu0
      %v1062 = vld [vmem:[%s803] sm:$0xff]
      %v1063 = vld [vmem:[%s803 + $0x8] sm:$0xff]
      %v1064 = vld [vmem:[%s803 + $0x10] sm:$0xff]
      %v1065 = vld [vmem:[%s803 + $0x18] sm:$0xff]
      %v1066 = vpack.c.bf16 %v1063, %v1062
      %v1067 = vpack.c.bf16 %v1065, %v1064
      %v1068 = vld [vmem:[%s812] sm:$0x1]
      %v1070 = vlaneseq
      %v1071 = vshrl.u32 %v1070, 7
      %v1072 = vsub.s32 0, %v1071
      %v1073 = vrot.slane %v1068, %v1072
      %1075 = vmatprep.subr.bf16.mxu0 0
      %1076 = vmatpush1.bf16.msra.mxu0 %v1066
      %1077 = vmatprep.subr.bf16.mxu0 0
      %1078 = vmatpush1.bf16.msra.mxu0 %v1067
      %1079 = vmatprep.subr.bf16.mxu0 0
      %1080 = vmatpush1.bf16.msra.mxu0 0
      %1081 = vmatprep.subr.bf16.mxu0 0
      %1082 = vmatpush1.bf16.msra.mxu0 0
      %1083 = vmatprep.subr.bf16.mxu0 0
      %1084 = vmatpush1.bf16.msra.mxu0 0
      %1085 = vmatprep.subr.bf16.mxu0 0
      %1086 = vmatpush1.bf16.msra.mxu0 0
      %1087 = vmatprep.subr.bf16.mxu0 0
      %1088 = vmatpush1.bf16.msra.mxu0 0
      %1089 = vmatprep.subr.bf16.mxu0 0
      %1090 = vmatpush1.bf16.msra.mxu0 0
      %1091 = vmatprep.subr.bf16.mxu0 0
      %1092 = vmatpush1.bf16.msra.mxu0 0
      %1093 = vmatprep.subr.bf16.mxu0 0
      %1094 = vmatpush1.bf16.msra.mxu0 0
      %1095 = vmatprep.subr.bf16.mxu0 0
      %1096 = vmatpush1.bf16.msra.mxu0 0
      %1097 = vmatprep.subr.bf16.mxu0 0
      %1098 = vmatpush1.bf16.msra.mxu0 0
      %1099 = vmatprep.subr.bf16.mxu0 0
      %1100 = vmatpush1.bf16.msra.mxu0 0
      %1101 = vmatprep.subr.bf16.mxu0 0
      %1102 = vmatpush1.bf16.msra.mxu0 0
      %1103 = vmatprep.subr.bf16.mxu0 0
      %1104 = vmatpush1.bf16.msra.mxu0 0
      %1105 = vmatprep.subr.bf16.mxu0 0
      %1106 = vmatpush1.bf16.msra.mxu0 0
      %1107 = vmatprep.mubr.bf16.mxu0 0
      %1108 = vmatmul.mubr.bf16.gmra.mrb[0].mxu0 %v948
      %v1109 = vpop.f32.mrb[0].mxu0
      %v1110 = vadd.f32 %v1073, %v1109
      %v1111 = vpop.f32.mrb[0].mxu0
      %v1112 = vpop.f32.mrb[0].mxu0
      %v1113 = vadd.f32 %v1073, %v1112
      %v1114 = vpop.f32.mrb[0].mxu0
      %1115 = vmatprep.mubr.bf16.mxu0 0
      %1116 = vmatmul.mubr.bf16.gmra.mrb[0].mxu0 %v951
      %v1117 = vpop.f32.mrb[0].mxu0
      %v1118 = vadd.f32 %v1073, %v1117
      %v1119 = vpop.f32.mrb[0].mxu0
      %v1120 = vpop.f32.mrb[0].mxu0
      %v1121 = vpop.f32.mrb[0].mxu0
      %1122 = vdwg.mxu0
      %vm1123 = vcmask 64512
      %v1125 = vsel %vm1123, %v988, 0
      %v1128 = vsel %vm1123, %v991, 0
      %v1131 = vsel %vm1123, %v996, 0
      %v1134 = vsel %vm1123, %v1049, 0
      %v1137 = vsel %vm1123, %v1052, 0
      %v1140 = vsel %vm1123, %v1057, 0
      %1142 = vmatprep.subr.mxu0 0.0
      %1143 = vmatpush1.xpose.msra.mxu0 %v1134
      %1144 = vmatprep.subr.mxu0 0.0
      %1145 = vmatpush1.xpose.msra.mxu0 %v1137
      %1146 = vmatprep.subr.mxu0 0.0
      %1147 = vmatpush1.xpose.msra.mxu0 %v1140
      %1148 = vmatprep.subr.mxu0 0.0
      %1149 = vmatpush1.xpose.msra.mxu0 0.0
      %1150 = vmatprep.subr.mxu0 0.0
      %1151 = vmatpush1.xpose.msra.mxu0 0.0
      %1152 = vmatprep.subr.mxu0 0.0
      %1153 = vmatpush1.xpose.msra.mxu0 0.0
      %1154 = vmatprep.subr.mxu0 0.0
      %1155 = vmatpush1.xpose.msra.mxu0 0.0
      %1156 = vmatprep.subr.mxu0 0.0
      %1157 = vmatpush1.xpose.msra.mxu0 0.0
      %1158 = vmatprep.subr.mxu0 0.0
      %1159 = vmatpush1.xpose.msra.mxu0 0.0
      %1160 = vmatprep.subr.mxu0 0.0
      %1161 = vmatpush1.xpose.msra.mxu0 0.0
      %1162 = vmatprep.subr.mxu0 0.0
      %1163 = vmatpush1.xpose.msra.mxu0 0.0
      %1164 = vmatprep.subr.mxu0 0.0
      %1165 = vmatpush1.xpose.msra.mxu0 0.0
      %1166 = vmatprep.subr.mxu0 0.0
      %1167 = vmatpush1.xpose.msra.mxu0 0.0
      %1168 = vmatprep.subr.mxu0 0.0
      %1169 = vmatpush1.xpose.msra.mxu0 0.0
      %1170 = vmatprep.subr.mxu0 0.0
      %1171 = vmatpush1.xpose.msra.mxu0 0.0
      %1172 = vmatprep.subr.mxu0 0.0
      %1173 = vmatpush1.xpose.msra.mxu0 0.0
      %1174 = vmatprep.subr.mxu0 0.0
      %1175 = vmatpush1.xpose.msra.mxu0 0.0
      %1176 = vmatprep.subr.mxu0 0.0
      %1177 = vmatpush1.xpose.msra.mxu0 0.0
      %1178 = vmatprep.subr.mxu0 0.0
      %1179 = vmatpush1.xpose.msra.mxu0 0.0
      %1180 = vmatprep.subr.mxu0 0.0
      %1181 = vmatpush1.xpose.msra.mxu0 0.0
      %1182 = vmatprep.subr.mxu0 0.0
      %1183 = vmatpush1.xpose.msra.mxu0 0.0
      %1184 = vmatprep.subr.mxu0 0.0
      %1185 = vmatpush1.xpose.msra.mxu0 0.0
      %1186 = vmatprep.subr.mxu0 0.0
      %1187 = vmatpush1.xpose.msra.mxu0 0.0
      %1188 = vmatprep.subr.mxu0 0.0
      %1189 = vmatpush1.xpose.msra.mxu0 0.0
      %1190 = vmatprep.subr.mxu0 0.0
      %1191 = vmatpush1.xpose.msra.mxu0 0.0
      %1192 = vmatprep.subr.mxu0 0.0
      %1193 = vmatpush1.xpose.msra.mxu0 0.0
      %1194 = vmatprep.subr.mxu0 0.0
      %1195 = vmatpush1.xpose.msra.mxu0 0.0
      %1196 = vmatprep.subr.mxu0 0.0
      %1197 = vmatpush1.xpose.msra.mxu0 0.0
      %1198 = vmatprep.subr.mxu0 0.0
      %1199 = vmatpush1.xpose.msra.mxu0 0.0
      %1200 = vmatprep.subr.mxu0 0.0
      %1201 = vmatpush1.xpose.msra.mxu0 0.0
      %1202 = vmatprep.subr.mxu0 0.0
      %1203 = vmatpush1.xpose.msra.mxu0 0.0
      %1204 = vmatprep.subr.mxu0 0.0
      %1205 = vmatpush1.xpose.msra.mxu0 0.0
      %1206 = vmatprep.mubr.f32.mxu0 0.0
      %1207 = vmatmul.mubr.f32.gmra.mrb[0].mxu0 %v1125
      %v1208 = vpop.f32.mrb[0].mxu0
      %v1209 = vadd.f32 0.0, %v1208
      %v1210 = vpop.f32.mrb[0].mxu0
      %1211 = vmatprep.mubr.f32.mxu0 0.0
      %1212 = vmatmul.mubr.f32.gmra.mrb[0].mxu0 %v1128
      %v1213 = vpop.f32.mrb[0].mxu0
      %v1214 = vadd.f32 0.0, %v1213
      %v1215 = vpop.f32.mrb[0].mxu0
      %1216 = vmatprep.mubr.f32.mxu0 0.0
      %1217 = vmatmul.mubr.f32.gmra.mrb[0].mxu0 %v1131
      %v1218 = vpop.f32.mrb[0].mxu0
      %v1219 = vadd.f32 0.0, %v1218
      %v1220 = vpop.f32.mrb[0].mxu0
      %1221 = vdwg.mxu0
      %v1222 = vmul.f32 %v1209, 0.35355338
      %v1223 = vmul.f32 %v1214, 0.35355338
      %v1224 = vmul.f32 %v1219, 0.35355338
      %vm1225 = vcmask 138240
      %v1226 = vsel %vm1225, %v1222, -inf
      %1227 = vmax.xlane.f32.xlu0 %v1226
      %v1228 = vpop.xlane.xlu0 %1227
      %v1229 = vsel %vm1225, %v1223, -inf
      %1230 = vmax.xlane.f32.xlu0 %v1229
      %v1231 = vpop.xlane.xlu0 %1230
      %vm1232 = vcmask 131072
      %v1233 = vsel %vm1232, %v1224, -inf
      %1234 = vmax.xlane.f32.xlu0 %v1233
      %v1235 = vpop.xlane.xlu0 %1234
      %v1236 = vsub.f32 %v1222, %v1228
      %v1237 = vsub.f32 %v1223, %v1231
      %v1238 = vsub.f32 %v1224, %v1235
      %v1239 = vmul.f32 %v1236, 1.442695
      %v1240 = vpow.pop %v1239
      %v1241 = vmul.f32 %v1237, 1.442695
      %v1242 = vpow.pop %v1241
      %v1243 = vmul.f32 %v1238, 1.442695
      %v1244 = vpow.pop %v1243
      %v1245 = vsel %vm1225, %v1240, 0.0
      %1246 = vadd.xlane.f32.xlu0 %v1245
      %v1247 = vpop.xlane.xlu0 %1246
      %v1248 = vsel %vm1225, %v1242, 0.0
      %1249 = vadd.xlane.f32.xlu0 %v1248
      %v1250 = vpop.xlane.xlu0 %1249
      %v1251 = vsel %vm1232, %v1244, 0.0
      %1252 = vadd.xlane.f32.xlu0 %v1251
      %v1253 = vpop.xlane.xlu0 %1252
      %v1254 = vrcp.pop %v1247
      %v1255 = vrcp.pop %v1250
      %v1256 = vrcp.pop %v1253
      %v1257 = vmul.f32 %v1240, %v1254
      %v1258 = vmul.f32 %v1242, %v1255
      %v1259 = vmul.f32 %v1244, %v1256
      %v1261 = vsel %vm1225, %v1257, 0
      %v1264 = vsel %vm1225, %v1258, 0
      %v1267 = vsel %vm1225, %v1259, 0
      %vm1269 = vcmask 1040384
      %v1271 = vsel %vm1269, %v1118, 0
      %1273 = vmatprep.subr.mxu0 0.0
      %1274 = vmatpush1.msra.mxu0 %v1110
      %1275 = vmatprep.subr.mxu0 0.0
      %1276 = vmatpush1.msra.mxu0 %v1113
      %1277 = vmatprep.subr.mxu0 0.0
      %1278 = vmatpush1.msra.mxu0 %v1271
      %1279 = vmatprep.subr.mxu0 0.0
      %1280 = vmatpush1.msra.mxu0 0.0
      %1281 = vmatprep.subr.mxu0 0.0
      %1282 = vmatpush1.msra.mxu0 0.0
      %1283 = vmatprep.subr.mxu0 0.0
      %1284 = vmatpush1.msra.mxu0 0.0
      %1285 = vmatprep.subr.mxu0 0.0
      %1286 = vmatpush1.msra.mxu0 0.0
      %1287 = vmatprep.subr.mxu0 0.0
      %1288 = vmatpush1.msra.mxu0 0.0
      %1289 = vmatprep.subr.mxu0 0.0
      %1290 = vmatpush1.msra.mxu0 0.0
      %1291 = vmatprep.subr.mxu0 0.0
      %1292 = vmatpush1.msra.mxu0 0.0
      %1293 = vmatprep.subr.mxu0 0.0
      %1294 = vmatpush1.msra.mxu0 0.0
      %1295 = vmatprep.subr.mxu0 0.0
      %1296 = vmatpush1.msra.mxu0 0.0
      %1297 = vmatprep.subr.mxu0 0.0
      %1298 = vmatpush1.msra.mxu0 0.0
      %1299 = vmatprep.subr.mxu0 0.0
      %1300 = vmatpush1.msra.mxu0 0.0
      %1301 = vmatprep.subr.mxu0 0.0
      %1302 = vmatpush1.msra.mxu0 0.0
      %1303 = vmatprep.subr.mxu0 0.0
      %1304 = vmatpush1.msra.mxu0 0.0
      %1305 = vmatprep.subr.mxu0 0.0
      %1306 = vmatpush1.msra.mxu0 0.0
      %1307 = vmatprep.subr.mxu0 0.0
      %1308 = vmatpush1.msra.mxu0 0.0
      %1309 = vmatprep.subr.mxu0 0.0
      %1310 = vmatpush1.msra.mxu0 0.0
      %1311 = vmatprep.subr.mxu0 0.0
      %1312 = vmatpush1.msra.mxu0 0.0
      %1313 = vmatprep.subr.mxu0 0.0
      %1314 = vmatpush1.msra.mxu0 0.0
      %1315 = vmatprep.subr.mxu0 0.0
      %1316 = vmatpush1.msra.mxu0 0.0
      %1317 = vmatprep.subr.mxu0 0.0
      %1318 = vmatpush1.msra.mxu0 0.0
      %1319 = vmatprep.subr.mxu0 0.0
      %1320 = vmatpush1.msra.mxu0 0.0
      %1321 = vmatprep.subr.mxu0 0.0
      %1322 = vmatpush1.msra.mxu0 0.0
      %1323 = vmatprep.subr.mxu0 0.0
      %1324 = vmatpush1.msra.mxu0 0.0
      %1325 = vmatprep.subr.mxu0 0.0
      %1326 = vmatpush1.msra.mxu0 0.0
      %1327 = vmatprep.subr.mxu0 0.0
      %1328 = vmatpush1.msra.mxu0 0.0
      %1329 = vmatprep.subr.mxu0 0.0
      %1330 = vmatpush1.msra.mxu0 0.0
      %1331 = vmatprep.subr.mxu0 0.0
      %1332 = vmatpush1.msra.mxu0 0.0
      %1333 = vmatprep.subr.mxu0 0.0
      %1334 = vmatpush1.msra.mxu0 0.0
      %1335 = vmatprep.subr.mxu0 0.0
      %1336 = vmatpush1.msra.mxu0 0.0
      %1337 = vmatprep.mubr.f32.mxu0 0.0
      %1338 = vmatmul.mubr.f32.gmra.mrb[0].mxu0 %v1261
      %v1339 = vpop.f32.mrb[0].mxu0
      %v1340 = vadd.f32 0.0, %v1339
      %v1341 = vpop.f32.mrb[0].mxu0
      %1342 = vmatprep.mubr.f32.mxu0 0.0
      %1343 = vmatmul.mubr.f32.gmra.mrb[0].mxu0 %v1264
      %v1344 = vpop.f32.mrb[0].mxu0
      %v1345 = vadd.f32 0.0, %v1344
      %v1346 = vpop.f32.mrb[0].mxu0
      %1347 = vmatprep.mubr.f32.mxu0 0.0
      %1348 = vmatmul.mubr.f32.gmra.mrb[0].mxu0 %v1267
      %v1349 = vpop.f32.mrb[0].mxu0
      %v1350 = vadd.f32 0.0, %v1349
      %v1351 = vpop.f32.mrb[0].mxu0
      %1352 = vdwg.mxu0
      %1353 = vrot.lane.b32.xlu0 %v988, 120
      %v1354 = vpop.permute.xlu0 %1353
      %1355 = vrot.lane.b32.xlu0 %v991, 120
      %v1356 = vpop.permute.xlu0 %1355
      %1357 = vrot.lane.b32.xlu0 %v996, 120
      %v1358 = vpop.permute.xlu0 %1357
      %1359 = vrot.lane.b32.xlu0 %v1049, 120
      %v1360 = vpop.permute.xlu0 %1359
      %1361 = vrot.lane.b32.xlu0 %v1052, 120
      %v1362 = vpop.permute.xlu0 %1361
      %1363 = vrot.lane.b32.xlu0 %v1057, 120
      %v1364 = vpop.permute.xlu0 %1363
      %v1365 = vsel %vm1123, %v1354, 0
      %v1367 = vsel %vm1123, %v1356, 0
      %v1369 = vsel %vm1123, %v1358, 0
      %v1371 = vsel %vm1123, %v1360, 0
      %v1373 = vsel %vm1123, %v1362, 0
      %v1375 = vsel %vm1123, %v1364, 0
      %1377 = vmatprep.subr.mxu0 0.0
      %1378 = vmatpush1.xpose.msra.mxu0 %v1371
      %1379 = vmatprep.subr.mxu0 0.0
      %1380 = vmatpush1.xpose.msra.mxu0 %v1373
      %1381 = vmatprep.subr.mxu0 0.0
      %1382 = vmatpush1.xpose.msra.mxu0 %v1375
      %1383 = vmatprep.subr.mxu0 0.0
      %1384 = vmatpush1.xpose.msra.mxu0 0.0
      %1385 = vmatprep.subr.mxu0 0.0
      %1386 = vmatpush1.xpose.msra.mxu0 0.0
      %1387 = vmatprep.subr.mxu0 0.0
      %1388 = vmatpush1.xpose.msra.mxu0 0.0
      %1389 = vmatprep.subr.mxu0 0.0
      %1390 = vmatpush1.xpose.msra.mxu0 0.0
      %1391 = vmatprep.subr.mxu0 0.0
      %1392 = vmatpush1.xpose.msra.mxu0 0.0
      %1393 = vmatprep.subr.mxu0 0.0
      %1394 = vmatpush1.xpose.msra.mxu0 0.0
      %1395 = vmatprep.subr.mxu0 0.0
      %1396 = vmatpush1.xpose.msra.mxu0 0.0
      %1397 = vmatprep.subr.mxu0 0.0
      %1398 = vmatpush1.xpose.msra.mxu0 0.0
      %1399 = vmatprep.subr.mxu0 0.0
      %1400 = vmatpush1.xpose.msra.mxu0 0.0
      %1401 = vmatprep.subr.mxu0 0.0
      %1402 = vmatpush1.xpose.msra.mxu0 0.0
      %1403 = vmatprep.subr.mxu0 0.0
      %1404 = vmatpush1.xpose.msra.mxu0 0.0
      %1405 = vmatprep.subr.mxu0 0.0
      %1406 = vmatpush1.xpose.msra.mxu0 0.0
      %1407 = vmatprep.subr.mxu0 0.0
      %1408 = vmatpush1.xpose.msra.mxu0 0.0
      %1409 = vmatprep.subr.mxu0 0.0
      %1410 = vmatpush1.xpose.msra.mxu0 0.0
      %1411 = vmatprep.subr.mxu0 0.0
      %1412 = vmatpush1.xpose.msra.mxu0 0.0
      %1413 = vmatprep.subr.mxu0 0.0
      %1414 = vmatpush1.xpose.msra.mxu0 0.0
      %1415 = vmatprep.subr.mxu0 0.0
      %1416 = vmatpush1.xpose.msra.mxu0 0.0
      %1417 = vmatprep.subr.mxu0 0.0
      %1418 = vmatpush1.xpose.msra.mxu0 0.0
      %1419 = vmatprep.subr.mxu0 0.0
      %1420 = vmatpush1.xpose.msra.mxu0 0.0
      %1421 = vmatprep.subr.mxu0 0.0
      %1422 = vmatpush1.xpose.msra.mxu0 0.0
      %1423 = vmatprep.subr.mxu0 0.0
      %1424 = vmatpush1.xpose.msra.mxu0 0.0
      %1425 = vmatprep.subr.mxu0 0.0
      %1426 = vmatpush1.xpose.msra.mxu0 0.0
      %1427 = vmatprep.subr.mxu0 0.0
      %1428 = vmatpush1.xpose.msra.mxu0 0.0
      %1429 = vmatprep.subr.mxu0 0.0
      %1430 = vmatpush1.xpose.msra.mxu0 0.0
      %1431 = vmatprep.subr.mxu0 0.0
      %1432 = vmatpush1.xpose.msra.mxu0 0.0
      %1433 = vmatprep.subr.mxu0 0.0
      %1434 = vmatpush1.xpose.msra.mxu0 0.0
      %1435 = vmatprep.subr.mxu0 0.0
      %1436 = vmatpush1.xpose.msra.mxu0 0.0
      %1437 = vmatprep.subr.mxu0 0.0
      %1438 = vmatpush1.xpose.msra.mxu0 0.0
      %1439 = vmatprep.subr.mxu0 0.0
      %1440 = vmatpush1.xpose.msra.mxu0 0.0
      %1441 = vmatprep.mubr.f32.mxu0 0.0
      %1442 = vmatmul.mubr.f32.gmra.mrb[0].mxu0 %v1365
      %v1443 = vpop.f32.mrb[0].mxu0
      %v1444 = vadd.f32 0.0, %v1443
      %v1445 = vpop.f32.mrb[0].mxu0
      %1446 = vmatprep.mubr.f32.mxu0 0.0
      %1447 = vmatmul.mubr.f32.gmra.mrb[0].mxu0 %v1367
      %v1448 = vpop.f32.mrb[0].mxu0
      %v1449 = vadd.f32 0.0, %v1448
      %v1450 = vpop.f32.mrb[0].mxu0
      %1451 = vmatprep.mubr.f32.mxu0 0.0
      %1452 = vmatmul.mubr.f32.gmra.mrb[0].mxu0 %v1369
      %v1453 = vpop.f32.mrb[0].mxu0
      %v1454 = vadd.f32 0.0, %v1453
      %v1455 = vpop.f32.mrb[0].mxu0
      %1456 = vdwg.mxu0
      %v1457 = vmul.f32 %v1444, 0.35355338
      %v1458 = vmul.f32 %v1449, 0.35355338
      %v1459 = vmul.f32 %v1454, 0.35355338
      %v1460 = vsel %vm1225, %v1457, -inf
      %1461 = vmax.xlane.f32.xlu0 %v1460
      %v1462 = vpop.xlane.xlu0 %1461
      %v1463 = vsel %vm1225, %v1458, -inf
      %1464 = vmax.xlane.f32.xlu0 %v1463
      %v1465 = vpop.xlane.xlu0 %1464
      %v1466 = vsel %vm1232, %v1459, -inf
      %1467 = vmax.xlane.f32.xlu0 %v1466
      %v1468 = vpop.xlane.xlu0 %1467
      %v1469 = vsub.f32 %v1457, %v1462
      %v1470 = vsub.f32 %v1458, %v1465
      %v1471 = vsub.f32 %v1459, %v1468
      %v1472 = vmul.f32 %v1469, 1.442695
      %v1473 = vpow.pop %v1472
      %v1474 = vmul.f32 %v1470, 1.442695
      %v1475 = vpow.pop %v1474
      %v1476 = vmul.f32 %v1471, 1.442695
      %v1477 = vpow.pop %v1476
      %v1478 = vsel %vm1225, %v1473, 0.0
      %1479 = vadd.xlane.f32.xlu0 %v1478
      %v1480 = vpop.xlane.xlu0 %1479
      %v1481 = vsel %vm1225, %v1475, 0.0
      %1482 = vadd.xlane.f32.xlu0 %v1481
      %v1483 = vpop.xlane.xlu0 %1482
      %v1484 = vsel %vm1232, %v1477, 0.0
      %1485 = vadd.xlane.f32.xlu0 %v1484
      %v1486 = vpop.xlane.xlu0 %1485
      %v1487 = vrcp.pop %v1480
      %v1488 = vrcp.pop %v1483
      %v1489 = vrcp.pop %v1486
      %v1490 = vmul.f32 %v1473, %v1487
      %v1491 = vmul.f32 %v1475, %v1488
      %v1492 = vmul.f32 %v1477, %v1489
      %1495 = vrot.lane.b32.xlu0 %v1110, 120
      %v1496 = vpop.permute.xlu0 %1495
      %1497 = vrot.lane.b32.xlu0 %v1113, 120
      %v1498 = vpop.permute.xlu0 %1497
      %1499 = vrot.lane.b32.xlu0 %v1118, 120
      %v1500 = vpop.permute.xlu0 %1499
      %v1504 = vsel %vm1225, %v1490, 0
      %v1507 = vsel %vm1225, %v1491, 0
      %v1510 = vsel %vm1225, %v1492, 0
      %v1512 = vsel %vm1269, %v1500, 0
      %1514 = vmatprep.subr.mxu0 0.0
      %1515 = vmatpush1.msra.mxu0 %v1496
      %1516 = vmatprep.subr.mxu0 0.0
      %1517 = vmatpush1.msra.mxu0 %v1498
      %1518 = vmatprep.subr.mxu0 0.0
      %1519 = vmatpush1.msra.mxu0 %v1512
      %1520 = vmatprep.subr.mxu0 0.0
      %1521 = vmatpush1.msra.mxu0 0.0
      %1522 = vmatprep.subr.mxu0 0.0
      %1523 = vmatpush1.msra.mxu0 0.0
      %1524 = vmatprep.subr.mxu0 0.0
      %1525 = vmatpush1.msra.mxu0 0.0
      %1526 = vmatprep.subr.mxu0 0.0
      %1527 = vmatpush1.msra.mxu0 0.0
      %1528 = vmatprep.subr.mxu0 0.0
      %1529 = vmatpush1.msra.mxu0 0.0
      %1530 = vmatprep.subr.mxu0 0.0
      %1531 = vmatpush1.msra.mxu0 0.0
      %1532 = vmatprep.subr.mxu0 0.0
      %1533 = vmatpush1.msra.mxu0 0.0
      %1534 = vmatprep.subr.mxu0 0.0
      %1535 = vmatpush1.msra.mxu0 0.0
      %1536 = vmatprep.subr.mxu0 0.0
      %1537 = vmatpush1.msra.mxu0 0.0
      %1538 = vmatprep.subr.mxu0 0.0
      %1539 = vmatpush1.msra.mxu0 0.0
      %1540 = vmatprep.subr.mxu0 0.0
      %1541 = vmatpush1.msra.mxu0 0.0
      %1542 = vmatprep.subr.mxu0 0.0
      %1543 = vmatpush1.msra.mxu0 0.0
      %1544 = vmatprep.subr.mxu0 0.0
      %1545 = vmatpush1.msra.mxu0 0.0
      %1546 = vmatprep.subr.mxu0 0.0
      %1547 = vmatpush1.msra.mxu0 0.0
      %1548 = vmatprep.subr.mxu0 0.0
      %1549 = vmatpush1.msra.mxu0 0.0
      %1550 = vmatprep.subr.mxu0 0.0
      %1551 = vmatpush1.msra.mxu0 0.0
      %1552 = vmatprep.subr.mxu0 0.0
      %1553 = vmatpush1.msra.mxu0 0.0
      %1554 = vmatprep.subr.mxu0 0.0
      %1555 = vmatpush1.msra.mxu0 0.0
      %1556 = vmatprep.subr.mxu0 0.0
      %1557 = vmatpush1.msra.mxu0 0.0
      %1558 = vmatprep.subr.mxu0 0.0
      %1559 = vmatpush1.msra.mxu0 0.0
      %1560 = vmatprep.subr.mxu0 0.0
      %1561 = vmatpush1.msra.mxu0 0.0
      %1562 = vmatprep.subr.mxu0 0.0
      %1563 = vmatpush1.msra.mxu0 0.0
      %1564 = vmatprep.subr.mxu0 0.0
      %1565 = vmatpush1.msra.mxu0 0.0
      %1566 = vmatprep.subr.mxu0 0.0
      %1567 = vmatpush1.msra.mxu0 0.0
      %1568 = vmatprep.subr.mxu0 0.0
      %1569 = vmatpush1.msra.mxu0 0.0
      %1570 = vmatprep.subr.mxu0 0.0
      %1571 = vmatpush1.msra.mxu0 0.0
      %1572 = vmatprep.subr.mxu0 0.0
      %1573 = vmatpush1.msra.mxu0 0.0
      %1574 = vmatprep.subr.mxu0 0.0
      %1575 = vmatpush1.msra.mxu0 0.0
      %1576 = vmatprep.subr.mxu0 0.0
      %1577 = vmatpush1.msra.mxu0 0.0
      %1578 = vmatprep.mubr.f32.mxu0 0.0
      %1579 = vmatmul.mubr.f32.gmra.mrb[0].mxu0 %v1504
      %v1580 = vpop.f32.mrb[0].mxu0
      %v1581 = vadd.f32 0.0, %v1580
      %v1582 = vpop.f32.mrb[0].mxu0
      %1583 = vmatprep.mubr.f32.mxu0 0.0
      %1584 = vmatmul.mubr.f32.gmra.mrb[0].mxu0 %v1507
      %v1585 = vpop.f32.mrb[0].mxu0
      %v1586 = vadd.f32 0.0, %v1585
      %v1587 = vpop.f32.mrb[0].mxu0
      %1588 = vmatprep.mubr.f32.mxu0 0.0
      %1589 = vmatmul.mubr.f32.gmra.mrb[0].mxu0 %v1510
      %v1590 = vpop.f32.mrb[0].mxu0
      %v1591 = vadd.f32 0.0, %v1590
      %v1592 = vpop.f32.mrb[0].mxu0
      %1593 = vdwg.mxu0
      %1594 = vrot.lane.b32.xlu0 %v988, 112
      %v1595 = vpop.permute.xlu0 %1594
      %1596 = vrot.lane.b32.xlu0 %v991, 112
      %v1597 = vpop.permute.xlu0 %1596
      %1598 = vrot.lane.b32.xlu0 %v996, 112
      %v1599 = vpop.permute.xlu0 %1598
      %1600 = vrot.lane.b32.xlu0 %v1049, 112
      %v1601 = vpop.permute.xlu0 %1600
      %1602 = vrot.lane.b32.xlu0 %v1052, 112
      %v1603 = vpop.permute.xlu0 %1602
      %1604 = vrot.lane.b32.xlu0 %v1057, 112
      %v1605 = vpop.permute.xlu0 %1604
      %v1606 = vsel %vm1123, %v1595, 0
      %v1608 = vsel %vm1123, %v1597, 0
      %v1610 = vsel %vm1123, %v1599, 0
      %v1612 = vsel %vm1123, %v1601, 0
      %v1614 = vsel %vm1123, %v1603, 0
      %v1616 = vsel %vm1123, %v1605, 0
      %1618 = vmatprep.subr.mxu0 0.0
      %1619 = vmatpush1.xpose.msra.mxu0 %v1612
      %1620 = vmatprep.subr.mxu0 0.0
      %1621 = vmatpush1.xpose.msra.mxu0 %v1614
      %1622 = vmatprep.subr.mxu0 0.0
      %1623 = vmatpush1.xpose.msra.mxu0 %v1616
      %1624 = vmatprep.subr.mxu0 0.0
      %1625 = vmatpush1.xpose.msra.mxu0 0.0
      %1626 = vmatprep.subr.mxu0 0.0
      %1627 = vmatpush1.xpose.msra.mxu0 0.0
      %1628 = vmatprep.subr.mxu0 0.0
      %1629 = vmatpush1.xpose.msra.mxu0 0.0
      %1630 = vmatprep.subr.mxu0 0.0
      %1631 = vmatpush1.xpose.msra.mxu0 0.0
      %1632 = vmatprep.subr.mxu0 0.0
      %1633 = vmatpush1.xpose.msra.mxu0 0.0
      %1634 = vmatprep.subr.mxu0 0.0
      %1635 = vmatpush1.xpose.msra.mxu0 0.0
      %1636 = vmatprep.subr.mxu0 0.0
      %1637 = vmatpush1.xpose.msra.mxu0 0.0
      %1638 = vmatprep.subr.mxu0 0.0
      %1639 = vmatpush1.xpose.msra.mxu0 0.0
      %1640 = vmatprep.subr.mxu0 0.0
      %1641 = vmatpush1.xpose.msra.mxu0 0.0
      %1642 = vmatprep.subr.mxu0 0.0
      %1643 = vmatpush1.xpose.msra.mxu0 0.0
      %1644 = vmatprep.subr.mxu0 0.0
      %1645 = vmatpush1.xpose.msra.mxu0 0.0
      %1646 = vmatprep.subr.mxu0 0.0
      %1647 = vmatpush1.xpose.msra.mxu0 0.0
      %1648 = vmatprep.subr.mxu0 0.0
      %1649 = vmatpush1.xpose.msra.mxu0 0.0
      %1650 = vmatprep.subr.mxu0 0.0
      %1651 = vmatpush1.xpose.msra.mxu0 0.0
      %1652 = vmatprep.subr.mxu0 0.0
      %1653 = vmatpush1.xpose.msra.mxu0 0.0
      %1654 = vmatprep.subr.mxu0 0.0
      %1655 = vmatpush1.xpose.msra.mxu0 0.0
      %1656 = vmatprep.subr.mxu0 0.0
      %1657 = vmatpush1.xpose.msra.mxu0 0.0
      %1658 = vmatprep.subr.mxu0 0.0
      %1659 = vmatpush1.xpose.msra.mxu0 0.0
      %1660 = vmatprep.subr.mxu0 0.0
      %1661 = vmatpush1.xpose.msra.mxu0 0.0
      %1662 = vmatprep.subr.mxu0 0.0
      %1663 = vmatpush1.xpose.msra.mxu0 0.0
      %1664 = vmatprep.subr.mxu0 0.0
      %1665 = vmatpush1.xpose.msra.mxu0 0.0
      %1666 = vmatprep.subr.mxu0 0.0
      %1667 = vmatpush1.xpose.msra.mxu0 0.0
      %1668 = vmatprep.subr.mxu0 0.0
      %1669 = vmatpush1.xpose.msra.mxu0 0.0
      %1670 = vmatprep.subr.mxu0 0.0
      %1671 = vmatpush1.xpose.msra.mxu0 0.0
      %1672 = vmatprep.subr.mxu0 0.0
      %1673 = vmatpush1.xpose.msra.mxu0 0.0
      %1674 = vmatprep.subr.mxu0 0.0
      %1675 = vmatpush1.xpose.msra.mxu0 0.0
      %1676 = vmatprep.subr.mxu0 0.0
      %1677 = vmatpush1.xpose.msra.mxu0 0.0
      %1678 = vmatprep.subr.mxu0 0.0
      %1679 = vmatpush1.xpose.msra.mxu0 0.0
      %1680 = vmatprep.subr.mxu0 0.0
      %1681 = vmatpush1.xpose.msra.mxu0 0.0
      %1682 = vmatprep.mubr.f32.mxu0 0.0
      %1683 = vmatmul.mubr.f32.gmra.mrb[0].mxu0 %v1606
      %v1684 = vpop.f32.mrb[0].mxu0
      %v1685 = vadd.f32 0.0, %v1684
      %v1686 = vpop.f32.mrb[0].mxu0
      %1687 = vmatprep.mubr.f32.mxu0 0.0
      %1688 = vmatmul.mubr.f32.gmra.mrb[0].mxu0 %v1608
      %v1689 = vpop.f32.mrb[0].mxu0
      %v1690 = vadd.f32 0.0, %v1689
      %v1691 = vpop.f32.mrb[0].mxu0
      %1692 = vmatprep.mubr.f32.mxu0 0.0
      %1693 = vmatmul.mubr.f32.gmra.mrb[0].mxu0 %v1610
      %v1694 = vpop.f32.mrb[0].mxu0
      %v1695 = vadd.f32 0.0, %v1694
      %v1696 = vpop.f32.mrb[0].mxu0
      %1697 = vdwg.mxu0
      %v1698 = vmul.f32 %v1685, 0.35355338
      %v1699 = vmul.f32 %v1690, 0.35355338
      %v1700 = vmul.f32 %v1695, 0.35355338
      %v1701 = vsel %vm1225, %v1698, -inf
      %1702 = vmax.xlane.f32.xlu0 %v1701
      %v1703 = vpop.xlane.xlu0 %1702
      %v1704 = vsel %vm1225, %v1699, -inf
      %1705 = vmax.xlane.f32.xlu0 %v1704
      %v1706 = vpop.xlane.xlu0 %1705
      %v1707 = vsel %vm1232, %v1700, -inf
      %1708 = vmax.xlane.f32.xlu0 %v1707
      %v1709 = vpop.xlane.xlu0 %1708
      %v1710 = vsub.f32 %v1698, %v1703
      %v1711 = vsub.f32 %v1699, %v1706
      %v1712 = vsub.f32 %v1700, %v1709
      %v1713 = vmul.f32 %v1710, 1.442695
      %v1714 = vpow.pop %v1713
      %v1715 = vmul.f32 %v1711, 1.442695
      %v1716 = vpow.pop %v1715
      %v1717 = vmul.f32 %v1712, 1.442695
      %v1718 = vpow.pop %v1717
      %v1719 = vsel %vm1225, %v1714, 0.0
      %1720 = vadd.xlane.f32.xlu0 %v1719
      %v1721 = vpop.xlane.xlu0 %1720
      %v1722 = vsel %vm1225, %v1716, 0.0
      %1723 = vadd.xlane.f32.xlu0 %v1722
      %v1724 = vpop.xlane.xlu0 %1723
      %v1725 = vsel %vm1232, %v1718, 0.0
      %1726 = vadd.xlane.f32.xlu0 %v1725
      %v1727 = vpop.xlane.xlu0 %1726
      %v1728 = vrcp.pop %v1721
      %v1729 = vrcp.pop %v1724
      %v1730 = vrcp.pop %v1727
      %v1731 = vmul.f32 %v1714, %v1728
      %v1732 = vmul.f32 %v1716, %v1729
      %v1733 = vmul.f32 %v1718, %v1730
      %1734 = vrot.lane.b32.xlu0 %v1110, 112
      %v1735 = vpop.permute.xlu0 %1734
      %1736 = vrot.lane.b32.xlu0 %v1113, 112
      %v1737 = vpop.permute.xlu0 %1736
      %1738 = vrot.lane.b32.xlu0 %v1118, 112
      %v1739 = vpop.permute.xlu0 %1738
      %v1743 = vsel %vm1225, %v1731, 0
      %v1746 = vsel %vm1225, %v1732, 0
      %v1749 = vsel %vm1225, %v1733, 0
      %v1751 = vsel %vm1269, %v1739, 0
      %1753 = vmatprep.subr.mxu0 0.0
      %1754 = vmatpush1.msra.mxu0 %v1735
      %1755 = vmatprep.subr.mxu0 0.0
      %1756 = vmatpush1.msra.mxu0 %v1737
      %1757 = vmatprep.subr.mxu0 0.0
      %1758 = vmatpush1.msra.mxu0 %v1751
      %1759 = vmatprep.subr.mxu0 0.0
      %1760 = vmatpush1.msra.mxu0 0.0
      %1761 = vmatprep.subr.mxu0 0.0
      %1762 = vmatpush1.msra.mxu0 0.0
      %1763 = vmatprep.subr.mxu0 0.0
      %1764 = vmatpush1.msra.mxu0 0.0
      %1765 = vmatprep.subr.mxu0 0.0
      %1766 = vmatpush1.msra.mxu0 0.0
      %1767 = vmatprep.subr.mxu0 0.0
      %1768 = vmatpush1.msra.mxu0 0.0
      %1769 = vmatprep.subr.mxu0 0.0
      %1770 = vmatpush1.msra.mxu0 0.0
      %1771 = vmatprep.subr.mxu0 0.0
      %1772 = vmatpush1.msra.mxu0 0.0
      %1773 = vmatprep.subr.mxu0 0.0
      %1774 = vmatpush1.msra.mxu0 0.0
      %1775 = vmatprep.subr.mxu0 0.0
      %1776 = vmatpush1.msra.mxu0 0.0
      %1777 = vmatprep.subr.mxu0 0.0
      %1778 = vmatpush1.msra.mxu0 0.0
      %1779 = vmatprep.subr.mxu0 0.0
      %1780 = vmatpush1.msra.mxu0 0.0
      %1781 = vmatprep.subr.mxu0 0.0
      %1782 = vmatpush1.msra.mxu0 0.0
      %1783 = vmatprep.subr.mxu0 0.0
      %1784 = vmatpush1.msra.mxu0 0.0
      %1785 = vmatprep.subr.mxu0 0.0
      %1786 = vmatpush1.msra.mxu0 0.0
      %1787 = vmatprep.subr.mxu0 0.0
      %1788 = vmatpush1.msra.mxu0 0.0
      %1789 = vmatprep.subr.mxu0 0.0
      %1790 = vmatpush1.msra.mxu0 0.0
      %1791 = vmatprep.subr.mxu0 0.0
      %1792 = vmatpush1.msra.mxu0 0.0
      %1793 = vmatprep.subr.mxu0 0.0
      %1794 = vmatpush1.msra.mxu0 0.0
      %1795 = vmatprep.subr.mxu0 0.0
      %1796 = vmatpush1.msra.mxu0 0.0
      %1797 = vmatprep.subr.mxu0 0.0
      %1798 = vmatpush1.msra.mxu0 0.0
      %1799 = vmatprep.subr.mxu0 0.0
      %1800 = vmatpush1.msra.mxu0 0.0
      %1801 = vmatprep.subr.mxu0 0.0
      %1802 = vmatpush1.msra.mxu0 0.0
      %1803 = vmatprep.subr.mxu0 0.0
      %1804 = vmatpush1.msra.mxu0 0.0
      %1805 = vmatprep.subr.mxu0 0.0
      %1806 = vmatpush1.msra.mxu0 0.0
      %1807 = vmatprep.subr.mxu0 0.0
      %1808 = vmatpush1.msra.mxu0 0.0
      %1809 = vmatprep.subr.mxu0 0.0
      %1810 = vmatpush1.msra.mxu0 0.0
      %1811 = vmatprep.subr.mxu0 0.0
      %1812 = vmatpush1.msra.mxu0 0.0
      %1813 = vmatprep.subr.mxu0 0.0
      %1814 = vmatpush1.msra.mxu0 0.0
      %1815 = vmatprep.subr.mxu0 0.0
      %1816 = vmatpush1.msra.mxu0 0.0
      %1817 = vmatprep.mubr.f32.mxu0 0.0
      %1818 = vmatmul.mubr.f32.gmra.mrb[0].mxu0 %v1743
      %v1819 = vpop.f32.mrb[0].mxu0
      %v1820 = vadd.f32 0.0, %v1819
      %v1821 = vpop.f32.mrb[0].mxu0
      %1822 = vmatprep.mubr.f32.mxu0 0.0
      %1823 = vmatmul.mubr.f32.gmra.mrb[0].mxu0 %v1746
      %v1824 = vpop.f32.mrb[0].mxu0
      %v1825 = vadd.f32 0.0, %v1824
      %v1826 = vpop.f32.mrb[0].mxu0
      %1827 = vmatprep.mubr.f32.mxu0 0.0
      %1828 = vmatmul.mubr.f32.gmra.mrb[0].mxu0 %v1749
      %v1829 = vpop.f32.mrb[0].mxu0
      %v1830 = vadd.f32 0.0, %v1829
      %v1831 = vpop.f32.mrb[0].mxu0
      %1832 = vdwg.mxu0
      %1833 = vrot.lane.b32.xlu0 %v988, 104
      %v1834 = vpop.permute.xlu0 %1833
      %1835 = vrot.lane.b32.xlu0 %v991, 104
      %v1836 = vpop.permute.xlu0 %1835
      %1837 = vrot.lane.b32.xlu0 %v996, 104
      %v1838 = vpop.permute.xlu0 %1837
      %1839 = vrot.lane.b32.xlu0 %v1049, 104
      %v1840 = vpop.permute.xlu0 %1839
      %1841 = vrot.lane.b32.xlu0 %v1052, 104
      %v1842 = vpop.permute.xlu0 %1841
      %1843 = vrot.lane.b32.xlu0 %v1057, 104
      %v1844 = vpop.permute.xlu0 %1843
      %v1845 = vsel %vm1123, %v1834, 0
      %v1847 = vsel %vm1123, %v1836, 0
      %v1849 = vsel %vm1123, %v1838, 0
      %v1851 = vsel %vm1123, %v1840, 0
      %v1853 = vsel %vm1123, %v1842, 0
      %v1855 = vsel %vm1123, %v1844, 0
      %1857 = vmatprep.subr.mxu0 0.0
      %1858 = vmatpush1.xpose.msra.mxu0 %v1851
      %1859 = vmatprep.subr.mxu0 0.0
      %1860 = vmatpush1.xpose.msra.mxu0 %v1853
      %1861 = vmatprep.subr.mxu0 0.0
      %1862 = vmatpush1.xpose.msra.mxu0 %v1855
      %1863 = vmatprep.subr.mxu0 0.0
      %1864 = vmatpush1.xpose.msra.mxu0 0.0
      %1865 = vmatprep.subr.mxu0 0.0
      %1866 = vmatpush1.xpose.msra.mxu0 0.0
      %1867 = vmatprep.subr.mxu0 0.0
      %1868 = vmatpush1.xpose.msra.mxu0 0.0
      %1869 = vmatprep.subr.mxu0 0.0
      %1870 = vmatpush1.xpose.msra.mxu0 0.0
      %1871 = vmatprep.subr.mxu0 0.0
      %1872 = vmatpush1.xpose.msra.mxu0 0.0
      %1873 = vmatprep.subr.mxu0 0.0
      %1874 = vmatpush1.xpose.msra.mxu0 0.0
      %1875 = vmatprep.subr.mxu0 0.0
      %1876 = vmatpush1.xpose.msra.mxu0 0.0
      %1877 = vmatprep.subr.mxu0 0.0
      %1878 = vmatpush1.xpose.msra.mxu0 0.0
      %1879 = vmatprep.subr.mxu0 0.0
      %1880 = vmatpush1.xpose.msra.mxu0 0.0
      %1881 = vmatprep.subr.mxu0 0.0
      %1882 = vmatpush1.xpose.msra.mxu0 0.0
      %1883 = vmatprep.subr.mxu0 0.0
      %1884 = vmatpush1.xpose.msra.mxu0 0.0
      %1885 = vmatprep.subr.mxu0 0.0
      %1886 = vmatpush1.xpose.msra.mxu0 0.0
      %1887 = vmatprep.subr.mxu0 0.0
      %1888 = vmatpush1.xpose.msra.mxu0 0.0
      %1889 = vmatprep.subr.mxu0 0.0
      %1890 = vmatpush1.xpose.msra.mxu0 0.0
      %1891 = vmatprep.subr.mxu0 0.0
      %1892 = vmatpush1.xpose.msra.mxu0 0.0
      %1893 = vmatprep.subr.mxu0 0.0
      %1894 = vmatpush1.xpose.msra.mxu0 0.0
      %1895 = vmatprep.subr.mxu0 0.0
      %1896 = vmatpush1.xpose.msra.mxu0 0.0
      %1897 = vmatprep.subr.mxu0 0.0
      %1898 = vmatpush1.xpose.msra.mxu0 0.0
      %1899 = vmatprep.subr.mxu0 0.0
      %1900 = vmatpush1.xpose.msra.mxu0 0.0
      %1901 = vmatprep.subr.mxu0 0.0
      %1902 = vmatpush1.xpose.msra.mxu0 0.0
      %1903 = vmatprep.subr.mxu0 0.0
      %1904 = vmatpush1.xpose.msra.mxu0 0.0
      %1905 = vmatprep.subr.mxu0 0.0
      %1906 = vmatpush1.xpose.msra.mxu0 0.0
      %1907 = vmatprep.subr.mxu0 0.0
      %1908 = vmatpush1.xpose.msra.mxu0 0.0
      %1909 = vmatprep.subr.mxu0 0.0
      %1910 = vmatpush1.xpose.msra.mxu0 0.0
      %1911 = vmatprep.subr.mxu0 0.0
      %1912 = vmatpush1.xpose.msra.mxu0 0.0
      %1913 = vmatprep.subr.mxu0 0.0
      %1914 = vmatpush1.xpose.msra.mxu0 0.0
      %1915 = vmatprep.subr.mxu0 0.0
      %1916 = vmatpush1.xpose.msra.mxu0 0.0
      %1917 = vmatprep.subr.mxu0 0.0
      %1918 = vmatpush1.xpose.msra.mxu0 0.0
      %1919 = vmatprep.subr.mxu0 0.0
      %1920 = vmatpush1.xpose.msra.mxu0 0.0
      %1921 = vmatprep.mubr.f32.mxu0 0.0
      %1922 = vmatmul.mubr.f32.gmra.mrb[0].mxu0 %v1845
      %v1923 = vpop.f32.mrb[0].mxu0
      %v1924 = vadd.f32 0.0, %v1923
      %v1925 = vpop.f32.mrb[0].mxu0
      %1926 = vmatprep.mubr.f32.mxu0 0.0
      %1927 = vmatmul.mubr.f32.gmra.mrb[0].mxu0 %v1847
      %v1928 = vpop.f32.mrb[0].mxu0
      %v1929 = vadd.f32 0.0, %v1928
      %v1930 = vpop.f32.mrb[0].mxu0
      %1931 = vmatprep.mubr.f32.mxu0 0.0
      %1932 = vmatmul.mubr.f32.gmra.mrb[0].mxu0 %v1849
      %v1933 = vpop.f32.mrb[0].mxu0
      %v1934 = vadd.f32 0.0, %v1933
      %v1935 = vpop.f32.mrb[0].mxu0
      %1936 = vdwg.mxu0
      %v1937 = vmul.f32 %v1924, 0.35355338
      %v1938 = vmul.f32 %v1929, 0.35355338
      %v1939 = vmul.f32 %v1934, 0.35355338
      %v1940 = vsel %vm1225, %v1937, -inf
      %1941 = vmax.xlane.f32.xlu0 %v1940
      %v1942 = vpop.xlane.xlu0 %1941
      %v1943 = vsel %vm1225, %v1938, -inf
      %1944 = vmax.xlane.f32.xlu0 %v1943
      %v1945 = vpop.xlane.xlu0 %1944
      %v1946 = vsel %vm1232, %v1939, -inf
      %1947 = vmax.xlane.f32.xlu0 %v1946
      %v1948 = vpop.xlane.xlu0 %1947
      %v1949 = vsub.f32 %v1937, %v1942
      %v1950 = vsub.f32 %v1938, %v1945
      %v1951 = vsub.f32 %v1939, %v1948
      %v1952 = vmul.f32 %v1949, 1.442695
      %v1953 = vpow.pop %v1952
      %v1954 = vmul.f32 %v1950, 1.442695
      %v1955 = vpow.pop %v1954
      %v1956 = vmul.f32 %v1951, 1.442695
      %v1957 = vpow.pop %v1956
      %v1958 = vsel %vm1225, %v1953, 0.0
      %1959 = vadd.xlane.f32.xlu0 %v1958
      %v1960 = vpop.xlane.xlu0 %1959
      %v1961 = vsel %vm1225, %v1955, 0.0
      %1962 = vadd.xlane.f32.xlu0 %v1961
      %v1963 = vpop.xlane.xlu0 %1962
      %v1964 = vsel %vm1232, %v1957, 0.0
      %1965 = vadd.xlane.f32.xlu0 %v1964
      %v1966 = vpop.xlane.xlu0 %1965
      %v1967 = vrcp.pop %v1960
      %v1968 = vrcp.pop %v1963
      %v1969 = vrcp.pop %v1966
      %v1970 = vmul.f32 %v1953, %v1967
      %v1971 = vmul.f32 %v1955, %v1968
      %v1972 = vmul.f32 %v1957, %v1969
      %1973 = vrot.lane.b32.xlu0 %v1110, 104
      %v1974 = vpop.permute.xlu0 %1973
      %1975 = vrot.lane.b32.xlu0 %v1113, 104
      %v1976 = vpop.permute.xlu0 %1975
      %1977 = vrot.lane.b32.xlu0 %v1118, 104
      %v1978 = vpop.permute.xlu0 %1977
      %v1982 = vsel %vm1225, %v1970, 0
      %v1985 = vsel %vm1225, %v1971, 0
      %v1988 = vsel %vm1225, %v1972, 0
      %v1990 = vsel %vm1269, %v1978, 0
      %1992 = vmatprep.subr.mxu0 0.0
      %1993 = vmatpush1.msra.mxu0 %v1974
      %1994 = vmatprep.subr.mxu0 0.0
      %1995 = vmatpush1.msra.mxu0 %v1976
      %1996 = vmatprep.subr.mxu0 0.0
      %1997 = vmatpush1.msra.mxu0 %v1990
      %1998 = vmatprep.subr.mxu0 0.0
      %1999 = vmatpush1.msra.mxu0 0.0
      %2000 = vmatprep.subr.mxu0 0.0
      %2001 = vmatpush1.msra.mxu0 0.0
      %2002 = vmatprep.subr.mxu0 0.0
      %2003 = vmatpush1.msra.mxu0 0.0
      %2004 = vmatprep.subr.mxu0 0.0
      %2005 = vmatpush1.msra.mxu0 0.0
      %2006 = vmatprep.subr.mxu0 0.0
      %2007 = vmatpush1.msra.mxu0 0.0
      %2008 = vmatprep.subr.mxu0 0.0
      %2009 = vmatpush1.msra.mxu0 0.0
      %2010 = vmatprep.subr.mxu0 0.0
      %2011 = vmatpush1.msra.mxu0 0.0
      %2012 = vmatprep.subr.mxu0 0.0
      %2013 = vmatpush1.msra.mxu0 0.0
      %2014 = vmatprep.subr.mxu0 0.0
      %2015 = vmatpush1.msra.mxu0 0.0
      %2016 = vmatprep.subr.mxu0 0.0
      %2017 = vmatpush1.msra.mxu0 0.0
      %2018 = vmatprep.subr.mxu0 0.0
      %2019 = vmatpush1.msra.mxu0 0.0
      %2020 = vmatprep.subr.mxu0 0.0
      %2021 = vmatpush1.msra.mxu0 0.0
      %2022 = vmatprep.subr.mxu0 0.0
      %2023 = vmatpush1.msra.mxu0 0.0
      %2024 = vmatprep.subr.mxu0 0.0
      %2025 = vmatpush1.msra.mxu0 0.0
      %2026 = vmatprep.subr.mxu0 0.0
      %2027 = vmatpush1.msra.mxu0 0.0
      %2028 = vmatprep.subr.mxu0 0.0
      %2029 = vmatpush1.msra.mxu0 0.0
      %2030 = vmatprep.subr.mxu0 0.0
      %2031 = vmatpush1.msra.mxu0 0.0
      %2032 = vmatprep.subr.mxu0 0.0
      %2033 = vmatpush1.msra.mxu0 0.0
      %2034 = vmatprep.subr.mxu0 0.0
      %2035 = vmatpush1.msra.mxu0 0.0
      %2036 = vmatprep.subr.mxu0 0.0
      %2037 = vmatpush1.msra.mxu0 0.0
      %2038 = vmatprep.subr.mxu0 0.0
      %2039 = vmatpush1.msra.mxu0 0.0
      %2040 = vmatprep.subr.mxu0 0.0
      %2041 = vmatpush1.msra.mxu0 0.0
      %2042 = vmatprep.subr.mxu0 0.0
      %2043 = vmatpush1.msra.mxu0 0.0
      %2044 = vmatprep.subr.mxu0 0.0
      %2045 = vmatpush1.msra.mxu0 0.0
      %2046 = vmatprep.subr.mxu0 0.0
      %2047 = vmatpush1.msra.mxu0 0.0
      %2048 = vmatprep.subr.mxu0 0.0
      %2049 = vmatpush1.msra.mxu0 0.0
      %2050 = vmatprep.subr.mxu0 0.0
      %2051 = vmatpush1.msra.mxu0 0.0
      %2052 = vmatprep.subr.mxu0 0.0
      %2053 = vmatpush1.msra.mxu0 0.0
      %2054 = vmatprep.subr.mxu0 0.0
      %2055 = vmatpush1.msra.mxu0 0.0
      %2056 = vmatprep.mubr.f32.mxu0 0.0
      %2057 = vmatmul.mubr.f32.gmra.mrb[0].mxu0 %v1982
      %v2058 = vpop.f32.mrb[0].mxu0
      %v2059 = vadd.f32 0.0, %v2058
      %v2060 = vpop.f32.mrb[0].mxu0
      %2061 = vmatprep.mubr.f32.mxu0 0.0
      %2062 = vmatmul.mubr.f32.gmra.mrb[0].mxu0 %v1985
      %v2063 = vpop.f32.mrb[0].mxu0
      %v2064 = vadd.f32 0.0, %v2063
      %v2065 = vpop.f32.mrb[0].mxu0
      %2066 = vmatprep.mubr.f32.mxu0 0.0
      %2067 = vmatmul.mubr.f32.gmra.mrb[0].mxu0 %v1988
      %v2068 = vpop.f32.mrb[0].mxu0
      %v2069 = vadd.f32 0.0, %v2068
      %v2070 = vpop.f32.mrb[0].mxu0
      %2071 = vdwg.mxu0
      %2075 = vrot.lane.b32.xlu0 %v1581, 8
      %v2076 = vpop.permute.xlu0 %2075
      %2077 = vrot.lane.b32.xlu0 %v1586, 8
      %v2078 = vpop.permute.xlu0 %2077
      %2079 = vrot.lane.b32.xlu0 %v1591, 8
      %v2080 = vpop.permute.xlu0 %2079
      %2087 = vrot.lane.b32.xlu0 %v1820, 16
      %v2088 = vpop.permute.xlu0 %2087
      %2089 = vrot.lane.b32.xlu0 %v1825, 16
      %v2090 = vpop.permute.xlu0 %2089
      %2091 = vrot.lane.b32.xlu0 %v1830, 16
      %v2092 = vpop.permute.xlu0 %2091
      %2099 = vrot.lane.b32.xlu0 %v2059, 24
      %v2100 = vpop.permute.xlu0 %2099
      %2101 = vrot.lane.b32.xlu0 %v2064, 24
      %v2102 = vpop.permute.xlu0 %2101
      %2103 = vrot.lane.b32.xlu0 %v2069, 24
      %v2104 = vpop.permute.xlu0 %2103
      %v2108 = vsel %vm1123, %v1340, %v2076
      %v2109 = vsel %vm1123, %v1345, %v2078
      %v2110 = vsel %vm1123, %v1350, %v2080
      %vm2111 = vcmask 130048
      %v2112 = vsel %vm2111, %v2108, %v2088
      %v2113 = vsel %vm2111, %v2109, %v2090
      %v2114 = vsel %vm2111, %v2110, %v2092
      %vm2115 = vcmask 195584
      %v2116 = vsel %vm2115, %v2112, %v2100
      %v2117 = vsel %vm2115, %v2113, %v2102
      %v2118 = vsel %vm2115, %v2114, %v2104
      %v2119 = vpack.c.bf16 %v2117, %v2116
      %v2120 = vpack.c.bf16 %v2118, %v2118
      %v2121 = vld [vmem:[%s817] sm:$0xff]
      %v2122 = vld [vmem:[%s817 + $0x8] sm:$0xff]
      %v2123 = vld [vmem:[%s817 + $0x10] sm:$0xff]
      %v2124 = vld [vmem:[%s817 + $0x18] sm:$0xff]
      %v2125 = vpack.c.bf16 %v2122, %v2121
      %v2126 = vpack.c.bf16 %v2124, %v2123
      %v2127 = vld [vmem:[%s820] sm:$0x1]
      %v2129 = vlaneseq
      %v2130 = vshrl.u32 %v2129, 7
      %v2131 = vsub.s32 0, %v2130
      %v2132 = vrot.slane %v2127, %v2131
      %v2135 = vsel %vm872, %v2119, 0
      %v2138 = vsel %vm872, %v2120, 0
      %2140 = vmatprep.subr.bf16.mxu0 0
      %2141 = vmatpush1.bf16.msra.mxu0 %v2125
      %2142 = vmatprep.subr.bf16.mxu0 0
      %2143 = vmatpush1.bf16.msra.mxu0 %v2126
      %2144 = vmatprep.subr.bf16.mxu0 0
      %2145 = vmatpush1.bf16.msra.mxu0 0
      %2146 = vmatprep.subr.bf16.mxu0 0
      %2147 = vmatpush1.bf16.msra.mxu0 0
      %2148 = vmatprep.subr.bf16.mxu0 0
      %2149 = vmatpush1.bf16.msra.mxu0 0
      %2150 = vmatprep.subr.bf16.mxu0 0
      %2151 = vmatpush1.bf16.msra.mxu0 0
      %2152 = vmatprep.subr.bf16.mxu0 0
      %2153 = vmatpush1.bf16.msra.mxu0 0
      %2154 = vmatprep.subr.bf16.mxu0 0
      %2155 = vmatpush1.bf16.msra.mxu0 0
      %2156 = vmatprep.subr.bf16.mxu0 0
      %2157 = vmatpush1.bf16.msra.mxu0 0
      %2158 = vmatprep.subr.bf16.mxu0 0
      %2159 = vmatpush1.bf16.msra.mxu0 0
      %2160 = vmatprep.subr.bf16.mxu0 0
      %2161 = vmatpush1.bf16.msra.mxu0 0
      %2162 = vmatprep.subr.bf16.mxu0 0
      %2163 = vmatpush1.bf16.msra.mxu0 0
      %2164 = vmatprep.subr.bf16.mxu0 0
      %2165 = vmatpush1.bf16.msra.mxu0 0
      %2166 = vmatprep.subr.bf16.mxu0 0
      %2167 = vmatpush1.bf16.msra.mxu0 0
      %2168 = vmatprep.subr.bf16.mxu0 0
      %2169 = vmatpush1.bf16.msra.mxu0 0
      %2170 = vmatprep.subr.bf16.mxu0 0
      %2171 = vmatpush1.bf16.msra.mxu0 0
      %2172 = vmatprep.mubr.bf16.mxu0 0
      %2173 = vmatmul.mubr.bf16.gmra.mrb[0].mxu0 %v2135
      %v2174 = vpop.f32.mrb[0].mxu0
      %v2175 = vadd.f32 %v2132, %v2174
      %v2176 = vpop.f32.mrb[0].mxu0
      %v2177 = vpop.f32.mrb[0].mxu0
      %v2178 = vadd.f32 %v2132, %v2177
      %v2179 = vpop.f32.mrb[0].mxu0
      %2180 = vmatprep.mubr.bf16.mxu0 0
      %2181 = vmatmul.mubr.bf16.gmra.mrb[0].mxu0 %v2138
      %v2182 = vpop.f32.mrb[0].mxu0
      %v2183 = vadd.f32 %v2132, %v2182
      %v2184 = vpop.f32.mrb[0].mxu0
      %v2185 = vpop.f32.mrb[0].mxu0
      %v2186 = vpop.f32.mrb[0].mxu0
      %2187 = vdwg.mxu0
      %v2188 = vadd.f32 %v867, %v2175
      %v2189 = vadd.f32 %v868, %v2178
      %v2190 = vadd.f32 %v869, %v2183
      %v2191 = vld [vmem:[%s823] sm:$0x1]
      %v2192 = vld [vmem:[%s826] sm:$0x1]
      %v2193 = vsel %vm872, %v2188, 0.0
      %2194 = vadd.xlane.f32.xlu0 %v2193
      %v2195 = vpop.xlane.xlu0 %2194
      %v2196 = vsel %vm872, %v2189, 0.0
      %2197 = vadd.xlane.f32.xlu0 %v2196
      %v2198 = vpop.xlane.xlu0 %2197
      %v2199 = vsel %vm879, %v2190, 0.0
      %2200 = vadd.xlane.f32.xlu0 %v2199
      %v2201 = vpop.xlane.xlu0 %2200
      %v2202 = vmul.f32 %v2195, %v883
      %v2203 = vmul.f32 %v2198, %v883
      %v2204 = vmul.f32 %v2201, %v883
      %v2205 = vsub.f32 %v2188, %v2202
      %v2206 = vsub.f32 %v2189, %v2203
      %v2207 = vsub.f32 %v2190, %v2204
      %v2208 = vmul.f32 %v2205, %v2205
      %v2209 = vmul.f32 %v2206, %v2206
      %v2210 = vmul.f32 %v2207, %v2207
      %v2211 = vsel %vm872, %v2208, 0.0
      %2212 = vadd.xlane.f32.xlu0 %v2211
      %v2213 = vpop.xlane.xlu0 %2212
      %v2214 = vsel %vm872, %v2209, 0.0
      %2215 = vadd.xlane.f32.xlu0 %v2214
      %v2216 = vpop.xlane.xlu0 %2215
      %v2217 = vsel %vm879, %v2210, 0.0
      %2218 = vadd.xlane.f32.xlu0 %v2217
      %v2219 = vpop.xlane.xlu0 %2218
      %v2220 = vmul.f32 %v2213, %v883
      %v2221 = vmul.f32 %v2216, %v883
      %v2222 = vmul.f32 %v2219, %v883
      %v2223 = vadd.f32 %v2220, 1e-05
      %v2224 = vadd.f32 %v2221, 1e-05
      %v2225 = vadd.f32 %v2222, 1e-05
      %v2226 = vrsqrt.pop %v2223
      %v2227 = vrsqrt.pop %v2224
      %v2228 = vrsqrt.pop %v2225
      %v2229 = vmul.f32 %v2205, %v2226
      %v2230 = vmul.f32 %v2206, %v2227
      %v2231 = vmul.f32 %v2207, %v2228
      %v2233 = vlaneseq
      %v2234 = vshrl.u32 %v2233, 7
      %v2235 = vsub.s32 0, %v2234
      %v2236 = vrot.slane %v2191, %v2235
      %v2238 = vmul.f32 %v2229, %v2236
      %v2239 = vmul.f32 %v2230, %v2236
      %v2240 = vmul.f32 %v2231, %v2236
      %v2242 = vlaneseq
      %v2243 = vshrl.u32 %v2242, 7
      %v2244 = vsub.s32 0, %v2243
      %v2245 = vrot.slane %v2192, %v2244
      %v2247 = vadd.f32 %v2238, %v2245
      %v2248 = vadd.f32 %v2239, %v2245
      %v2249 = vadd.f32 %v2240, %v2245
      %v2250 = vpack.c.bf16 %v2248, %v2247
      %v2251 = vpack.c.bf16 %v2249, %v2249
      %v2252 = vld [vmem:[%s831] sm:$0xff]
      %v2253 = vld [vmem:[%s831 + $0x8] sm:$0xff]
      %v2254 = vld [vmem:[%s831 + $0x10] sm:$0xff]
      %v2255 = vld [vmem:[%s831 + $0x18] sm:$0xff]
      %v2256 = vpack.c.bf16 %v2253, %v2252
      %v2257 = vpack.c.bf16 %v2255, %v2254
      %v2258 = vld [vmem:[%s834] sm:$0x1]
      %v2260 = vlaneseq
      %v2261 = vshrl.u32 %v2260, 7
      %v2262 = vsub.s32 0, %v2261
      %v2263 = vrot.slane %v2258, %v2262
      %v2266 = vsel %vm872, %v2250, 0
      %v2269 = vsel %vm872, %v2251, 0
      %2271 = vmatprep.subr.bf16.mxu0 0
      %2272 = vmatpush1.bf16.msra.mxu0 %v2256
      %2273 = vmatprep.subr.bf16.mxu0 0
      %2274 = vmatpush1.bf16.msra.mxu0 %v2257
      %2275 = vmatprep.subr.bf16.mxu0 0
      %2276 = vmatpush1.bf16.msra.mxu0 0
      %2277 = vmatprep.subr.bf16.mxu0 0
      %2278 = vmatpush1.bf16.msra.mxu0 0
      %2279 = vmatprep.subr.bf16.mxu0 0
      %2280 = vmatpush1.bf16.msra.mxu0 0
      %2281 = vmatprep.subr.bf16.mxu0 0
      %2282 = vmatpush1.bf16.msra.mxu0 0
      %2283 = vmatprep.subr.bf16.mxu0 0
      %2284 = vmatpush1.bf16.msra.mxu0 0
      %2285 = vmatprep.subr.bf16.mxu0 0
      %2286 = vmatpush1.bf16.msra.mxu0 0
      %2287 = vmatprep.subr.bf16.mxu0 0
      %2288 = vmatpush1.bf16.msra.mxu0 0
      %2289 = vmatprep.subr.bf16.mxu0 0
      %2290 = vmatpush1.bf16.msra.mxu0 0
      %2291 = vmatprep.subr.bf16.mxu0 0
      %2292 = vmatpush1.bf16.msra.mxu0 0
      %2293 = vmatprep.subr.bf16.mxu0 0
      %2294 = vmatpush1.bf16.msra.mxu0 0
      %2295 = vmatprep.subr.bf16.mxu0 0
      %2296 = vmatpush1.bf16.msra.mxu0 0
      %2297 = vmatprep.subr.bf16.mxu0 0
      %2298 = vmatpush1.bf16.msra.mxu0 0
      %2299 = vmatprep.subr.bf16.mxu0 0
      %2300 = vmatpush1.bf16.msra.mxu0 0
      %2301 = vmatprep.subr.bf16.mxu0 0
      %2302 = vmatpush1.bf16.msra.mxu0 0
      %2303 = vmatprep.mubr.bf16.mxu0 0
      %2304 = vmatmul.mubr.bf16.gmra.mrb[0].mxu0 %v2266
      %v2305 = vpop.f32.mrb[0].mxu0
      %v2306 = vadd.f32 %v2263, %v2305
      %v2307 = vpop.f32.mrb[0].mxu0
      %v2308 = vpop.f32.mrb[0].mxu0
      %v2309 = vadd.f32 %v2263, %v2308
      %v2310 = vpop.f32.mrb[0].mxu0
      %2311 = vmatprep.mubr.bf16.mxu0 0
      %2312 = vmatmul.mubr.bf16.gmra.mrb[0].mxu0 %v2269
      %v2313 = vpop.f32.mrb[0].mxu0
      %v2314 = vadd.f32 %v2263, %v2313
      %v2315 = vpop.f32.mrb[0].mxu0
      %v2316 = vpop.f32.mrb[0].mxu0
      %v2317 = vpop.f32.mrb[0].mxu0
      %2318 = vdwg.mxu0
      %v2319 = vmul.f32 %v2306, %v2306
      %v2320 = vmul.f32 %v2309, %v2309
      %v2321 = vmul.f32 %v2314, %v2314
      %v2322 = vmul.f32 %v2306, %v2319
      %v2323 = vmul.f32 %v2309, %v2320
      %v2324 = vmul.f32 %v2314, %v2321
      %v2325 = vmul.f32 %v2322, 0.044715
      %v2326 = vmul.f32 %v2323, 0.044715
      %v2327 = vmul.f32 %v2324, 0.044715
      %v2328 = vadd.f32 %v2306, %v2325
      %v2329 = vadd.f32 %v2309, %v2326
      %v2330 = vadd.f32 %v2314, %v2327
      %v2331 = vmul.f32 %v2328, 0.7978846
      %v2332 = vmul.f32 %v2329, 0.7978846
      %v2333 = vmul.f32 %v2330, 0.7978846
      %v2334 = vtanh.pop %v2331
      %v2335 = vtanh.pop %v2332
      %v2336 = vtanh.pop %v2333
      %v2337 = vadd.f32 %v2334, 1.0
      %v2338 = vadd.f32 %v2335, 1.0
      %v2339 = vadd.f32 %v2336, 1.0
      %v2340 = vmul.f32 %v2337, 0.5
      %v2341 = vmul.f32 %v2338, 0.5
      %v2342 = vmul.f32 %v2339, 0.5
      %v2343 = vmul.f32 %v2306, %v2340
      %v2344 = vmul.f32 %v2309, %v2341
      %v2345 = vmul.f32 %v2314, %v2342
      %v2346 = vpack.c.bf16 %v2344, %v2343
      %v2347 = vpack.c.bf16 %v2345, %v2345
      %v2348 = vld [vmem:[%s839] sm:$0xff]
      %v2349 = vld [vmem:[%s839 + $0x8] sm:$0xff]
      %v2350 = vld [vmem:[%s839 + $0x10] sm:$0xff]
      %v2351 = vld [vmem:[%s839 + $0x18] sm:$0xff]
      %v2352 = vld [vmem:[%s839 + $0x20] sm:$0xff]
      %v2353 = vld [vmem:[%s839 + $0x28] sm:$0xff]
      %v2354 = vld [vmem:[%s839 + $0x30] sm:$0xff]
      %v2355 = vld [vmem:[%s839 + $0x38] sm:$0xff]
      %v2356 = vld [vmem:[%s839 + $0x40] sm:$0xff]
      %v2357 = vld [vmem:[%s839 + $0x48] sm:$0xff]
      %v2358 = vld [vmem:[%s839 + $0x50] sm:$0xff]
      %v2359 = vld [vmem:[%s839 + $0x58] sm:$0xff]
      %v2360 = vld [vmem:[%s839 + $0x60] sm:$0xff]
      %v2361 = vld [vmem:[%s839 + $0x68] sm:$0xff]
      %v2362 = vld [vmem:[%s839 + $0x70] sm:$0xff]
      %v2363 = vld [vmem:[%s839 + $0x78] sm:$0xff]
      %v2364 = vpack.c.bf16 %v2349, %v2348
      %v2365 = vpack.c.bf16 %v2351, %v2350
      %v2366 = vpack.c.bf16 %v2353, %v2352
      %v2367 = vpack.c.bf16 %v2355, %v2354
      %v2368 = vpack.c.bf16 %v2357, %v2356
      %v2369 = vpack.c.bf16 %v2359, %v2358
      %v2370 = vpack.c.bf16 %v2361, %v2360
      %v2371 = vpack.c.bf16 %v2363, %v2362
      %v2372 = vld [vmem:[%s842] sm:$0x1]
      %v2374 = vlaneseq
      %v2375 = vshrl.u32 %v2374, 7
      %v2376 = vsub.s32 0, %v2375
      %v2377 = vrot.slane %v2372, %v2376
      %2379 = vmatprep.subr.bf16.mxu0 0
      %2380 = vmatpush1.bf16.msra.mxu0 %v2364
      %2381 = vmatprep.subr.bf16.mxu0 0
      %2382 = vmatpush1.bf16.msra.mxu0 %v2365
      %2383 = vmatprep.subr.bf16.mxu0 0
      %2384 = vmatpush1.bf16.msra.mxu0 %v2366
      %2385 = vmatprep.subr.bf16.mxu0 0
      %2386 = vmatpush1.bf16.msra.mxu0 %v2367
      %2387 = vmatprep.subr.bf16.mxu0 0
      %2388 = vmatpush1.bf16.msra.mxu0 %v2368
      %2389 = vmatprep.subr.bf16.mxu0 0
      %2390 = vmatpush1.bf16.msra.mxu0 %v2369
      %2391 = vmatprep.subr.bf16.mxu0 0
      %2392 = vmatpush1.bf16.msra.mxu0 %v2370
      %2393 = vmatprep.subr.bf16.mxu0 0
      %2394 = vmatpush1.bf16.msra.mxu0 %v2371
      %2395 = vmatprep.subr.bf16.mxu0 0
      %2396 = vmatpush1.bf16.msra.mxu0 0
      %2397 = vmatprep.subr.bf16.mxu0 0
      %2398 = vmatpush1.bf16.msra.mxu0 0
      %2399 = vmatprep.subr.bf16.mxu0 0
      %2400 = vmatpush1.bf16.msra.mxu0 0
      %2401 = vmatprep.subr.bf16.mxu0 0
      %2402 = vmatpush1.bf16.msra.mxu0 0
      %2403 = vmatprep.subr.bf16.mxu0 0
      %2404 = vmatpush1.bf16.msra.mxu0 0
      %2405 = vmatprep.subr.bf16.mxu0 0
      %2406 = vmatpush1.bf16.msra.mxu0 0
      %2407 = vmatprep.subr.bf16.mxu0 0
      %2408 = vmatpush1.bf16.msra.mxu0 0
      %2409 = vmatprep.subr.bf16.mxu0 0
      %2410 = vmatpush1.bf16.msra.mxu0 0
      %2411 = vmatprep.mubr.bf16.mxu0 0
      %2412 = vmatmul.mubr.bf16.gmra.mrb[0].mxu0 %v2346
      %v2413 = vpop.f32.mrb[0].mxu0
      %v2414 = vadd.f32 %v2377, %v2413
      %v2415 = vpop.f32.mrb[0].mxu0
      %v2416 = vpop.f32.mrb[0].mxu0
      %v2417 = vadd.f32 %v2377, %v2416
      %v2418 = vpop.f32.mrb[0].mxu0
      %2419 = vmatprep.mubr.bf16.mxu0 0
      %2420 = vmatmul.mubr.bf16.gmra.mrb[0].mxu0 %v2347
      %v2421 = vpop.f32.mrb[0].mxu0
      %v2422 = vadd.f32 %v2377, %v2421
      %v2423 = vpop.f32.mrb[0].mxu0
      %v2424 = vpop.f32.mrb[0].mxu0
      %v2425 = vpop.f32.mrb[0].mxu0
      %2426 = vdwg.mxu0
      %v2427 = vadd.f32 %v2188, %v2414
      %v2428 = vadd.f32 %v2189, %v2417
      %v2429 = vadd.f32 %v2190, %v2422
      %2430 = vst.msk [vmem:[%s847] sm:$0xff] %vm872, %v2427
      %2431 = vst.msk [vmem:[%s847 + $0x8] sm:$0xff] %vm872, %v2428
      %2432 = vst.msk [vmem:[%s847 + $0x10] sm:$0x1] %vm879, %v2429
      %p2433 = scmp.lt.s32.totalorder %s33, 1
      %s2434 = scalar_select %p2433, %s33, 1
      %s2435 = smul.addr %s2434, 3
      %s2436 = smul.addr %s2435, 8
      %s2437 = scalar_lea.vmem %s18, %s2436
      // Predicated region
      $region97: #{clip_forward.6} parent=91 // pred_check
        %p2438 = pneg %p522
      $region98: #{clip_forward.6} parent=91 // pred_check_branch
        %2440 = sbr.rel (%p2438) target = $region100
      $region99: #{clip_forward.6} parent=91 // pred_region
        _
      $region100: #{clip_forward.6} parent=91 // pred_fallthru
        _
    $region92: #{clip_forward.6} parent=5 // pred_fallthru
      _
    %p2441 = scmp.le.s32.totalorder 2, %s24
    // Predicated region
    $region101: #{clip_forward.6} parent=5 // pred_check
      %p2442 = pneg %p2441
    $region102: #{clip_forward.6} parent=5 // pred_check_branch
      %2444 = sbr.rel (%p2442) target = $region104
    $region103: #{clip_forward.6} parent=5 // pred_region
      %s2445 = ssub.s32 %s24, 2
      // Predicated region
      $region105: #{clip_forward.6} parent=103 // pred_check
        %p2446 = pneg %p528
      $region106: #{clip_forward.6} parent=103 // pred_check_branch
        %2448 = sbr.rel (%p2446) target = $region108
      $region107: #{clip_forward.6} parent=103 // pred_region
        %p2449 = scmp.lt.s32.totalorder %s35, 1
        %s2450 = scalar_select %p2449, %s35, 1
        %s2451 = smul.addr %s2450, 3
        %s2452 = smul.addr %s2451, 8
        %s2453 = scalar_lea.vmem %s18, %s2452
      $region108: #{clip_forward.6} parent=103 // pred_fallthru
        _
    $region104: #{clip_forward.6} parent=5 // pred_fallthru
      _
  $region6: #{clip_forward.6} parent=0 // loop_footer
    %s28 = sadd.s32 1, %s24
  $region7: #{clip_forward.6} parent=0 // loop_footer_branch
    %23 = sbr.rel target = $region3
  $region8: #{clip_forward.6} parent=0 // loop_exit
    _

// kernel: clip_forward.8
$region0: #{clip_forward.8}
  #allocation0 [shape = 'u32[]', space=smem, size = 0x4, offset = 0x4, fixed_abs, tag = 'smem constant byte address 0x4 - core index']
  #allocation1 [shape = 'u32[144,128]{1,0:T(1,128)}', space=vmem, size = 0x12000, scoped, tag = 'internal scratch']
  %s0 = inlined_call_operand.vmem [shape: f32[2,8,32], index: 0, kind: input, shape index: {}]
  %s1 = inlined_call_operand.vmem [shape: f32[8,32], index: 1, kind: input, shape index: {}]
  %s2 = inlined_call_operand.vmem [shape: f32[2,1,32], index: 2, kind: input, shape index: {}]
  %s3 = inlined_call_operand.vmem [shape: f32[2,1,32], index: 3, kind: input, shape index: {}]
  %s4 = inlined_call_operand.vmem [shape: f32[2,32,32], index: 4, kind: input, shape index: {}]
  %s5 = inlined_call_operand.vmem [shape: f32[2,32,32], index: 5, kind: input, shape index: {}]
  %s6 = inlined_call_operand.vmem [shape: f32[2,32,32], index: 6, kind: input, shape index: {}]
  %s7 = inlined_call_operand.vmem [shape: f32[2,1,32], index: 7, kind: input, shape index: {}]
  %s8 = inlined_call_operand.vmem [shape: f32[2,1,32], index: 8, kind: input, shape index: {}]
  %s9 = inlined_call_operand.vmem [shape: f32[2,1,32], index: 9, kind: input, shape index: {}]
  %s10 = inlined_call_operand.vmem [shape: f32[2,32,32], index: 10, kind: input, shape index: {}]
  %s11 = inlined_call_operand.vmem [shape: f32[2,1,32], index: 11, kind: input, shape index: {}]
  %s12 = inlined_call_operand.vmem [shape: f32[2,1,32], index: 12, kind: input, shape index: {}]
  %s13 = inlined_call_operand.vmem [shape: f32[2,1,32], index: 13, kind: input, shape index: {}]
  %s14 = inlined_call_operand.vmem [shape: f32[2,32,128], index: 14, kind: input, shape index: {}]
  %s15 = inlined_call_operand.vmem [shape: f32[2,1,128], index: 15, kind: input, shape index: {}]
  %s16 = inlined_call_operand.vmem [shape: f32[2,128,32], index: 16, kind: input, shape index: {}]
  %s17 = inlined_call_operand.vmem [shape: f32[2,1,32], index: 17, kind: input, shape index: {}]
  %s18 = inlined_call_operand.vmem [shape: f32[2,8,32], index: 18, kind: output, shape index: {}]
  %s19 = sld [smem:[#allocation0]]
  $region109: #{clip_forward.8} parent=0
    _
  %s21 = ssub.s32 1, %s19
  %s22 = scalar_select 0, %s21, %s19
  loop: start=0, step=1, limit=6
  $region2: #{clip_forward.8} parent=0 // loop_pre_header
    _
  $region3: #{clip_forward.8} parent=0 // loop_header
    %s24 = sphi 0, %s28
    %p25 = scmp.ge.s32.totalorder %s24, 6
    %s31 = sphi 0, %s43
    %s32 = sphi 0, %s39
    %s33 = sphi 0, %s31
    %s34 = sphi 0, %s32
    %s35 = sphi 0, %s33
    %s36 = sphi 0, %s34
    %s46 = sphi 0, %s48
    %s49 = sphi 0, %s46
    %s50 = sphi 0, %s49
    %s66 = sphi 0, %s50
    %s70 = sphi 0, %s70
    %s72 = sphi 0, %s70
    %s73 = sphi 0, %s72
    %s87 = sphi 0, %s73
    %s93 = sphi 0, %s95
    %s96 = sphi 0, %s93
    %s97 = sphi 0, %s96
    %s113 = sphi 0, %s97
    %s119 = sphi 0, %s121
    %s122 = sphi 0, %s119
    %s123 = sphi 0, %s122
    %s139 = sphi 0, %s123
    %s145 = sphi 0, %s147
    %s148 = sphi 0, %s145
    %s149 = sphi 0, %s148
    %s165 = sphi 0, %s149
    %s171 = sphi 0, %s173
    %s174 = sphi 0, %s171
    %s175 = sphi 0, %s174
    %s191 = sphi 0, %s175
    %s197 = sphi 0, %s199
    %s200 = sphi 0, %s197
    %s201 = sphi 0, %s200
    %s217 = sphi 0, %s201
    %s223 = sphi 0, %s225
    %s226 = sphi 0, %s223
    %s227 = sphi 0, %s226
    %s243 = sphi 0, %s227
    %s249 = sphi 0, %s251
    %s252 = sphi 0, %s249
    %s253 = sphi 0, %s252
    %s269 = sphi 0, %s253
    %s275 = sphi 0, %s277
    %s278 = sphi 0, %s275
    %s279 = sphi 0, %s278
    %s295 = sphi 0, %s279
    %s301 = sphi 0, %s303
    %s304 = sphi 0, %s301
    %s305 = sphi 0, %s304
    %s321 = sphi 0, %s305
    %s327 = sphi 0, %s329
    %s330 = sphi 0, %s327
    %s331 = sphi 0, %s330
    %s347 = sphi 0, %s331
    %s353 = sphi 0, %s355
    %s356 = sphi 0, %s353
    %s357 = sphi 0, %s356
    %s373 = sphi 0, %s357
    %s379 = sphi 0, %s381
    %s382 = sphi 0, %s379
    %s383 = sphi 0, %s382
    %s399 = sphi 0, %s383
    %s405 = sphi 0, %s407
    %s408 = sphi 0, %s405
    %s409 = sphi 0, %s408
    %s425 = sphi 0, %s409
    %s431 = sphi 0, %s433
    %s434 = sphi 0, %s431
    %s435 = sphi 0, %s434
    %s451 = sphi 0, %s435
    %s457 = sphi 0, %s459
    %s460 = sphi 0, %s457
    %s461 = sphi 0, %s460
    %s477 = sphi 0, %s461
    %s483 = sphi 0, %s485
    %s486 = sphi 0, %s483
    %s487 = sphi 0, %s486
    %s503 = sphi 0, %s487
    %s509 = sphi 0, %s511
    %s512 = sphi 0, %s509
    %s513 = sphi 0, %s512
    %s529 = sphi 0, %s513
  $region4: #{clip_forward.8} parent=0 // loop_header_branch
    %27 = sbr.rel (%p25) target = $region8
  $region5: #{clip_forward.8} parent=0 // loop_body
    %s29 = ssub.s32 %s24, 1
    %s30 = ssub.s32 %s24, 2
    %s37 = sadd.s32 1, %s32
    %p38 = scmp.ge.s32.totalorder %s37, 2
    %s39 = scalar_select %p38, 0, %s37
    %s40 = sadd.s32 1, %s31
    %s41 = scalar_select %p38, %s40, %s31
    %p42 = scmp.ge.s32.totalorder %s41, 2
    %s43 = scalar_select %p42, 0, %s41
    %s44 = ssub.s32 %s31, %s43
    %p45 = scmp.eq.s32.totalorder %s44, 0
    %s47 = sadd.s32 %s46, 1
    %s48 = scalar_select %p45, %s46, %s47
    %p51 = pneg %p45
    %p52 = scmp.eq.s32.totalorder %s24, 3
    %p53 = por %p51, %p52
    %p54 = scmp.ne.s32.totalorder %s46, %s49
    %p55 = scmp.eq.s32.totalorder %s24, 0
    %p56 = por %p54, %p55
    %p57 = scmp.ne.s32.totalorder %s46, %s49
    %p58 = scmp.eq.s32.totalorder %s29, 3
    %p59 = por %p57, %p58
    %p60 = scmp.ne.s32.totalorder %s49, %s50
    %p61 = scmp.eq.s32.totalorder %s29, 0
    %p62 = por %p60, %p61
    %p63 = scmp.ne.s32.totalorder %s49, %s50
    %p64 = scmp.eq.s32.totalorder %s30, 3
    %p65 = por %p63, %p64
    %p67 = scmp.ne.s32.totalorder %s50, %s66
    %p68 = scmp.eq.s32.totalorder %s30, 0
    %p69 = por %p67, %p68
    %s71 = sadd.s32 %s70, 1
    %p74 = scmp.eq.s32.totalorder %s24, 3
    %p75 = scmp.ne.s32.totalorder %s70, %s72
    %p76 = scmp.eq.s32.totalorder %s24, 0
    %p77 = por %p75, %p76
    %p78 = scmp.ne.s32.totalorder %s70, %s72
    %p79 = scmp.eq.s32.totalorder %s29, 3
    %p80 = por %p78, %p79
    %p81 = scmp.ne.s32.totalorder %s72, %s73
    %p82 = scmp.eq.s32.totalorder %s29, 0
    %p83 = por %p81, %p82
    %p84 = scmp.ne.s32.totalorder %s72, %s73
    %p85 = scmp.eq.s32.totalorder %s30, 3
    %p86 = por %p84, %p85
    %p88 = scmp.ne.s32.totalorder %s73, %s87
    %p89 = scmp.eq.s32.totalorder %s30, 0
    %p90 = por %p88, %p89
    %s91 = ssub.s32 %s32, %s39
    %p92 = scmp.eq.s32.totalorder %s91, 0
    %s94 = sadd.s32 %s93, 1
    %s95 = scalar_select %p92, %s93, %s94
    %p98 = pneg %p92
    %p99 = scmp.eq.s32.totalorder %s24, 3
    %p100 = por %p98, %p99
    %p101 = scmp.ne.s32.totalorder %s93, %s96
    %p102 = scmp.eq.s32.totalorder %s24, 0
    %p103 = por %p101, %p102
    %p104 = scmp.ne.s32.totalorder %s93, %s96
    %p105 = scmp.eq.s32.totalorder %s29, 3
    %p106 = por %p104, %p105
    %p107 = scmp.ne.s32.totalorder %s96, %s97
    %p108 = scmp.eq.s32.totalorder %s29, 0
    %p109 = por %p107, %p108
    %p110 = scmp.ne.s32.totalorder %s96, %s97
    %p111 = scmp.eq.s32.totalorder %s30, 3
    %p112 = por %p110, %p111
    %p114 = scmp.ne.s32.totalorder %s97, %s113
    %p115 = scmp.eq.s32.totalorder %s30, 0
    %p116 = por %p114, %p115
    %s117 = ssub.s32 %s32, %s39
    %p118 = scmp.eq.s32.totalorder %s117, 0
    %s120 = sadd.s32 %s119, 1
    %s121 = scalar_select %p118, %s119, %s120
    %p124 = pneg %p118
    %p125 = scmp.eq.s32.totalorder %s24, 3
    %p126 = por %p124, %p125
    %p127 = scmp.ne.s32.totalorder %s119, %s122
    %p128 = scmp.eq.s32.totalorder %s24, 0
    %p129 = por %p127, %p128
    %p130 = scmp.ne.s32.totalorder %s119, %s122
    %p131 = scmp.eq.s32.totalorder %s29, 3
    %p132 = por %p130, %p131
    %p133 = scmp.ne.s32.totalorder %s122, %s123
    %p134 = scmp.eq.s32.totalorder %s29, 0
    %p135 = por %p133, %p134
    %p136 = scmp.ne.s32.totalorder %s122, %s123
    %p137 = scmp.eq.s32.totalorder %s30, 3
    %p138 = por %p136, %p137
    %p140 = scmp.ne.s32.totalorder %s123, %s139
    %p141 = scmp.eq.s32.totalorder %s30, 0
    %p142 = por %p140, %p141
    %s143 = ssub.s32 %s32, %s39
    %p144 = scmp.eq.s32.totalorder %s143, 0
    %s146 = sadd.s32 %s145, 1
    %s147 = scalar_select %p144, %s145, %s146
    %p150 = pneg %p144
    %p151 = scmp.eq.s32.totalorder %s24, 3
    %p152 = por %p150, %p151
    %p153 = scmp.ne.s32.totalorder %s145, %s148
    %p154 = scmp.eq.s32.totalorder %s24, 0
    %p155 = por %p153, %p154
    %p156 = scmp.ne.s32.totalorder %s145, %s148
    %p157 = scmp.eq.s32.totalorder %s29, 3
    %p158 = por %p156, %p157
    %p159 = scmp.ne.s32.totalorder %s148, %s149
    %p160 = scmp.eq.s32.totalorder %s29, 0
    %p161 = por %p159, %p160
    %p162 = scmp.ne.s32.totalorder %s148, %s149
    %p163 = scmp.eq.s32.totalorder %s30, 3
    %p164 = por %p162, %p163
    %p166 = scmp.ne.s32.totalorder %s149, %s165
    %p167 = scmp.eq.s32.totalorder %s30, 0
    %p168 = por %p166, %p167
    %s169 = ssub.s32 %s32, %s39
    %p170 = scmp.eq.s32.totalorder %s169, 0
    %s172 = sadd.s32 %s171, 1
    %s173 = scalar_select %p170, %s171, %s172
    %p176 = pneg %p170
    %p177 = scmp.eq.s32.totalorder %s24, 3
    %p178 = por %p176, %p177
    %p179 = scmp.ne.s32.totalorder %s171, %s174
    %p180 = scmp.eq.s32.totalorder %s24, 0
    %p181 = por %p179, %p180
    %p182 = scmp.ne.s32.totalorder %s171, %s174
    %p183 = scmp.eq.s32.totalorder %s29, 3
    %p184 = por %p182, %p183
    %p185 = scmp.ne.s32.totalorder %s174, %s175
    %p186 = scmp.eq.s32.totalorder %s29, 0
    %p187 = por %p185, %p186
    %p188 = scmp.ne.s32.totalorder %s174, %s175
    %p189 = scmp.eq.s32.totalorder %s30, 3
    %p190 = por %p188, %p189
    %p192 = scmp.ne.s32.totalorder %s175, %s191
    %p193 = scmp.eq.s32.totalorder %s30, 0
    %p194 = por %p192, %p193
    %s195 = ssub.s32 %s32, %s39
    %p196 = scmp.eq.s32.totalorder %s195, 0
    %s198 = sadd.s32 %s197, 1
    %s199 = scalar_select %p196, %s197, %s198
    %p202 = pneg %p196
    %p203 = scmp.eq.s32.totalorder %s24, 3
    %p204 = por %p202, %p203
    %p205 = scmp.ne.s32.totalorder %s197, %s200
    %p206 = scmp.eq.s32.totalorder %s24, 0
    %p207 = por %p205, %p206
    %p208 = scmp.ne.s32.totalorder %s197, %s200
    %p209 = scmp.eq.s32.totalorder %s29, 3
    %p210 = por %p208, %p209
    %p211 = scmp.ne.s32.totalorder %s200, %s201
    %p212 = scmp.eq.s32.totalorder %s29, 0
    %p213 = por %p211, %p212
    %p214 = scmp.ne.s32.totalorder %s200, %s201
    %p215 = scmp.eq.s32.totalorder %s30, 3
    %p216 = por %p214, %p215
    %p218 = scmp.ne.s32.totalorder %s201, %s217
    %p219 = scmp.eq.s32.totalorder %s30, 0
    %p220 = por %p218, %p219
    %s221 = ssub.s32 %s32, %s39
    %p222 = scmp.eq.s32.totalorder %s221, 0
    %s224 = sadd.s32 %s223, 1
    %s225 = scalar_select %p222, %s223, %s224
    %p228 = pneg %p222
    %p229 = scmp.eq.s32.totalorder %s24, 3
    %p230 = por %p228, %p229
    %p231 = scmp.ne.s32.totalorder %s223, %s226
    %p232 = scmp.eq.s32.totalorder %s24, 0
    %p233 = por %p231, %p232
    %p234 = scmp.ne.s32.totalorder %s223, %s226
    %p235 = scmp.eq.s32.totalorder %s29, 3
    %p236 = por %p234, %p235
    %p237 = scmp.ne.s32.totalorder %s226, %s227
    %p238 = scmp.eq.s32.totalorder %s29, 0
    %p239 = por %p237, %p238
    %p240 = scmp.ne.s32.totalorder %s226, %s227
    %p241 = scmp.eq.s32.totalorder %s30, 3
    %p242 = por %p240, %p241
    %p244 = scmp.ne.s32.totalorder %s227, %s243
    %p245 = scmp.eq.s32.totalorder %s30, 0
    %p246 = por %p244, %p245
    %s247 = ssub.s32 %s32, %s39
    %p248 = scmp.eq.s32.totalorder %s247, 0
    %s250 = sadd.s32 %s249, 1
    %s251 = scalar_select %p248, %s249, %s250
    %p254 = pneg %p248
    %p255 = scmp.eq.s32.totalorder %s24, 3
    %p256 = por %p254, %p255
    %p257 = scmp.ne.s32.totalorder %s249, %s252
    %p258 = scmp.eq.s32.totalorder %s24, 0
    %p259 = por %p257, %p258
    %p260 = scmp.ne.s32.totalorder %s249, %s252
    %p261 = scmp.eq.s32.totalorder %s29, 3
    %p262 = por %p260, %p261
    %p263 = scmp.ne.s32.totalorder %s252, %s253
    %p264 = scmp.eq.s32.totalorder %s29, 0
    %p265 = por %p263, %p264
    %p266 = scmp.ne.s32.totalorder %s252, %s253
    %p267 = scmp.eq.s32.totalorder %s30, 3
    %p268 = por %p266, %p267
    %p270 = scmp.ne.s32.totalorder %s253, %s269
    %p271 = scmp.eq.s32.totalorder %s30, 0
    %p272 = por %p270, %p271
    %s273 = ssub.s32 %s32, %s39
    %p274 = scmp.eq.s32.totalorder %s273, 0
    %s276 = sadd.s32 %s275, 1
    %s277 = scalar_select %p274, %s275, %s276
    %p280 = pneg %p274
    %p281 = scmp.eq.s32.totalorder %s24, 3
    %p282 = por %p280, %p281
    %p283 = scmp.ne.s32.totalorder %s275, %s278
    %p284 = scmp.eq.s32.totalorder %s24, 0
    %p285 = por %p283, %p284
    %p286 = scmp.ne.s32.totalorder %s275, %s278
    %p287 = scmp.eq.s32.totalorder %s29, 3
    %p288 = por %p286, %p287
    %p289 = scmp.ne.s32.totalorder %s278, %s279
    %p290 = scmp.eq.s32.totalorder %s29, 0
    %p291 = por %p289, %p290
    %p292 = scmp.ne.s32.totalorder %s278, %s279
    %p293 = scmp.eq.s32.totalorder %s30, 3
    %p294 = por %p292, %p293
    %p296 = scmp.ne.s32.totalorder %s279, %s295
    %p297 = scmp.eq.s32.totalorder %s30, 0
    %p298 = por %p296, %p297
    %s299 = ssub.s32 %s32, %s39
    %p300 = scmp.eq.s32.totalorder %s299, 0
    %s302 = sadd.s32 %s301, 1
    %s303 = scalar_select %p300, %s301, %s302
    %p306 = pneg %p300
    %p307 = scmp.eq.s32.totalorder %s24, 3
    %p308 = por %p306, %p307
    %p309 = scmp.ne.s32.totalorder %s301, %s304
    %p310 = scmp.eq.s32.totalorder %s24, 0
    %p311 = por %p309, %p310
    %p312 = scmp.ne.s32.totalorder %s301, %s304
    %p313 = scmp.eq.s32.totalorder %s29, 3
    %p314 = por %p312, %p313
    %p315 = scmp.ne.s32.totalorder %s304, %s305
    %p316 = scmp.eq.s32.totalorder %s29, 0
    %p317 = por %p315, %p316
    %p318 = scmp.ne.s32.totalorder %s304, %s305
    %p319 = scmp.eq.s32.totalorder %s30, 3
    %p320 = por %p318, %p319
    %p322 = scmp.ne.s32.totalorder %s305, %s321
    %p323 = scmp.eq.s32.totalorder %s30, 0
    %p324 = por %p322, %p323
    %s325 = ssub.s32 %s32, %s39
    %p326 = scmp.eq.s32.totalorder %s325, 0
    %s328 = sadd.s32 %s327, 1
    %s329 = scalar_select %p326, %s327, %s328
    %p332 = pneg %p326
    %p333 = scmp.eq.s32.totalorder %s24, 3
    %p334 = por %p332, %p333
    %p335 = scmp.ne.s32.totalorder %s327, %s330
    %p336 = scmp.eq.s32.totalorder %s24, 0
    %p337 = por %p335, %p336
    %p338 = scmp.ne.s32.totalorder %s327, %s330
    %p339 = scmp.eq.s32.totalorder %s29, 3
    %p340 = por %p338, %p339
    %p341 = scmp.ne.s32.totalorder %s330, %s331
    %p342 = scmp.eq.s32.totalorder %s29, 0
    %p343 = por %p341, %p342
    %p344 = scmp.ne.s32.totalorder %s330, %s331
    %p345 = scmp.eq.s32.totalorder %s30, 3
    %p346 = por %p344, %p345
    %p348 = scmp.ne.s32.totalorder %s331, %s347
    %p349 = scmp.eq.s32.totalorder %s30, 0
    %p350 = por %p348, %p349
    %s351 = ssub.s32 %s32, %s39
    %p352 = scmp.eq.s32.totalorder %s351, 0
    %s354 = sadd.s32 %s353, 1
    %s355 = scalar_select %p352, %s353, %s354
    %p358 = pneg %p352
    %p359 = scmp.eq.s32.totalorder %s24, 3
    %p360 = por %p358, %p359
    %p361 = scmp.ne.s32.totalorder %s353, %s356
    %p362 = scmp.eq.s32.totalorder %s24, 0
    %p363 = por %p361, %p362
    %p364 = scmp.ne.s32.totalorder %s353, %s356
    %p365 = scmp.eq.s32.totalorder %s29, 3
    %p366 = por %p364, %p365
    %p367 = scmp.ne.s32.totalorder %s356, %s357
    %p368 = scmp.eq.s32.totalorder %s29, 0
    %p369 = por %p367, %p368
    %p370 = scmp.ne.s32.totalorder %s356, %s357
    %p371 = scmp.eq.s32.totalorder %s30, 3
    %p372 = por %p370, %p371
    %p374 = scmp.ne.s32.totalorder %s357, %s373
    %p375 = scmp.eq.s32.totalorder %s30, 0
    %p376 = por %p374, %p375
    %s377 = ssub.s32 %s32, %s39
    %p378 = scmp.eq.s32.totalorder %s377, 0
    %s380 = sadd.s32 %s379, 1
    %s381 = scalar_select %p378, %s379, %s380
    %p384 = pneg %p378
    %p385 = scmp.eq.s32.totalorder %s24, 3
    %p386 = por %p384, %p385
    %p387 = scmp.ne.s32.totalorder %s379, %s382
    %p388 = scmp.eq.s32.totalorder %s24, 0
    %p389 = por %p387, %p388
    %p390 = scmp.ne.s32.totalorder %s379, %s382
    %p391 = scmp.eq.s32.totalorder %s29, 3
    %p392 = por %p390, %p391
    %p393 = scmp.ne.s32.totalorder %s382, %s383
    %p394 = scmp.eq.s32.totalorder %s29, 0
    %p395 = por %p393, %p394
    %p396 = scmp.ne.s32.totalorder %s382, %s383
    %p397 = scmp.eq.s32.totalorder %s30, 3
    %p398 = por %p396, %p397
    %p400 = scmp.ne.s32.totalorder %s383, %s399
    %p401 = scmp.eq.s32.totalorder %s30, 0
    %p402 = por %p400, %p401
    %s403 = ssub.s32 %s32, %s39
    %p404 = scmp.eq.s32.totalorder %s403, 0
    %s406 = sadd.s32 %s405, 1
    %s407 = scalar_select %p404, %s405, %s406
    %p410 = pneg %p404
    %p411 = scmp.eq.s32.totalorder %s24, 3
    %p412 = por %p410, %p411
    %p413 = scmp.ne.s32.totalorder %s405, %s408
    %p414 = scmp.eq.s32.totalorder %s24, 0
    %p415 = por %p413, %p414
    %p416 = scmp.ne.s32.totalorder %s405, %s408
    %p417 = scmp.eq.s32.totalorder %s29, 3
    %p418 = por %p416, %p417
    %p419 = scmp.ne.s32.totalorder %s408, %s409
    %p420 = scmp.eq.s32.totalorder %s29, 0
    %p421 = por %p419, %p420
    %p422 = scmp.ne.s32.totalorder %s408, %s409
    %p423 = scmp.eq.s32.totalorder %s30, 3
    %p424 = por %p422, %p423
    %p426 = scmp.ne.s32.totalorder %s409, %s425
    %p427 = scmp.eq.s32.totalorder %s30, 0
    %p428 = por %p426, %p427
    %s429 = ssub.s32 %s32, %s39
    %p430 = scmp.eq.s32.totalorder %s429, 0
    %s432 = sadd.s32 %s431, 1
    %s433 = scalar_select %p430, %s431, %s432
    %p436 = pneg %p430
    %p437 = scmp.eq.s32.totalorder %s24, 3
    %p438 = por %p436, %p437
    %p439 = scmp.ne.s32.totalorder %s431, %s434
    %p440 = scmp.eq.s32.totalorder %s24, 0
    %p441 = por %p439, %p440
    %p442 = scmp.ne.s32.totalorder %s431, %s434
    %p443 = scmp.eq.s32.totalorder %s29, 3
    %p444 = por %p442, %p443
    %p445 = scmp.ne.s32.totalorder %s434, %s435
    %p446 = scmp.eq.s32.totalorder %s29, 0
    %p447 = por %p445, %p446
    %p448 = scmp.ne.s32.totalorder %s434, %s435
    %p449 = scmp.eq.s32.totalorder %s30, 3
    %p450 = por %p448, %p449
    %p452 = scmp.ne.s32.totalorder %s435, %s451
    %p453 = scmp.eq.s32.totalorder %s30, 0
    %p454 = por %p452, %p453
    %s455 = ssub.s32 %s32, %s39
    %p456 = scmp.eq.s32.totalorder %s455, 0
    %s458 = sadd.s32 %s457, 1
    %s459 = scalar_select %p456, %s457, %s458
    %p462 = pneg %p456
    %p463 = scmp.eq.s32.totalorder %s24, 3
    %p464 = por %p462, %p463
    %p465 = scmp.ne.s32.totalorder %s457, %s460
    %p466 = scmp.eq.s32.totalorder %s24, 0
    %p467 = por %p465, %p466
    %p468 = scmp.ne.s32.totalorder %s457, %s460
    %p469 = scmp.eq.s32.totalorder %s29, 3
    %p470 = por %p468, %p469
    %p471 = scmp.ne.s32.totalorder %s460, %s461
    %p472 = scmp.eq.s32.totalorder %s29, 0
    %p473 = por %p471, %p472
    %p474 = scmp.ne.s32.totalorder %s460, %s461
    %p475 = scmp.eq.s32.totalorder %s30, 3
    %p476 = por %p474, %p475
    %p478 = scmp.ne.s32.totalorder %s461, %s477
    %p479 = scmp.eq.s32.totalorder %s30, 0
    %p480 = por %p478, %p479
    %s481 = ssub.s32 %s32, %s39
    %p482 = scmp.eq.s32.totalorder %s481, 0
    %s484 = sadd.s32 %s483, 1
    %s485 = scalar_select %p482, %s483, %s484
    %p488 = pneg %p482
    %p489 = scmp.eq.s32.totalorder %s24, 3
    %p490 = por %p488, %p489
    %p491 = scmp.ne.s32.totalorder %s483, %s486
    %p492 = scmp.eq.s32.totalorder %s24, 0
    %p493 = por %p491, %p492
    %p494 = scmp.ne.s32.totalorder %s483, %s486
    %p495 = scmp.eq.s32.totalorder %s29, 3
    %p496 = por %p494, %p495
    %p497 = scmp.ne.s32.totalorder %s486, %s487
    %p498 = scmp.eq.s32.totalorder %s29, 0
    %p499 = por %p497, %p498
    %p500 = scmp.ne.s32.totalorder %s486, %s487
    %p501 = scmp.eq.s32.totalorder %s30, 3
    %p502 = por %p500, %p501
    %p504 = scmp.ne.s32.totalorder %s487, %s503
    %p505 = scmp.eq.s32.totalorder %s30, 0
    %p506 = por %p504, %p505
    %s507 = ssub.s32 %s31, %s43
    %p508 = scmp.eq.s32.totalorder %s507, 0
    %s510 = sadd.s32 %s509, 1
    %s511 = scalar_select %p508, %s509, %s510
    %p514 = pneg %p508
    %p515 = scmp.eq.s32.totalorder %s24, 3
    %p516 = por %p514, %p515
    %p517 = scmp.ne.s32.totalorder %s509, %s512
    %p518 = scmp.eq.s32.totalorder %s24, 0
    %p519 = por %p517, %p518
    %p520 = scmp.ne.s32.totalorder %s509, %s512
    %p521 = scmp.eq.s32.totalorder %s29, 3
    %p522 = por %p520, %p521
    %p523 = scmp.ne.s32.totalorder %s512, %s513
    %p524 = scmp.eq.s32.totalorder %s29, 0
    %p525 = por %p523, %p524
    %p526 = scmp.ne.s32.totalorder %s512, %s513
    %p527 = scmp.eq.s32.totalorder %s30, 3
    %p528 = por %p526, %p527
    %p530 = scmp.ne.s32.totalorder %s513, %s529
    %p531 = scmp.eq.s32.totalorder %s30, 0
    %p532 = por %p530, %p531
    %p533 = scmp.le.s32.totalorder 1, %s24
    %p534 = scmp.lt.s32.totalorder %s24, 5
    %p535 = pnand %p533, %p534
    %p536 = pneg %p535
    // Predicated region
    $region9: #{clip_forward.8} parent=5 // pred_check
      _
    $region10: #{clip_forward.8} parent=5 // pred_check_branch
      %538 = sbr.rel (%p535) target = $region12
    $region11: #{clip_forward.8} parent=5 // pred_region
      %s539 = ssub.s32 %s24, 1
      // Predicated region
      $region13: #{clip_forward.8} parent=11 // pred_check
        %p540 = pneg %p83
      $region14: #{clip_forward.8} parent=11 // pred_check_branch
        %542 = sbr.rel (%p540) target = $region16
      $region15: #{clip_forward.8} parent=11 // pred_region
        _
      $region16: #{clip_forward.8} parent=11 // pred_fallthru
        _
    $region12: #{clip_forward.8} parent=5 // pred_fallthru
      _
    %p543 = scmp.lt.s32.totalorder %s24, 4
    // Predicated region
    $region17: #{clip_forward.8} parent=5 // pred_check
      %p544 = pneg %p543
    $region18: #{clip_forward.8} parent=5 // pred_check_branch
      %546 = sbr.rel (%p544) target = $region20
    $region19: #{clip_forward.8} parent=5 // pred_region
      // Predicated region
      $region21: #{clip_forward.8} parent=19 // pred_check
        %p547 = pneg %p56
      $region22: #{clip_forward.8} parent=19 // pred_check_branch
        %549 = sbr.rel (%p547) target = $region24
      $region23: #{clip_forward.8} parent=19 // pred_region
        %p550 = scmp.lt.s32.totalorder %s31, 1
        %s551 = scalar_select %p550, %s31, 1
        %s552 = smul.addr %s551, 8
        %s553 = scalar_lea.vmem %s0, %s552
      $region24: #{clip_forward.8} parent=19 // pred_fallthru
        _
      // Predicated region
      $region25: #{clip_forward.8} parent=19 // pred_check
        %p554 = pneg %p103
      $region26: #{clip_forward.8} parent=19 // pred_check_branch
        %556 = sbr.rel (%p554) target = $region28
      $region27: #{clip_forward.8} parent=19 // pred_region
        %p557 = scmp.lt.s32.totalorder %s32, 1
        %s558 = scalar_select %p557, %s32, 1
        %s559 = scalar_lea.vmem %s2, %s558
      $region28: #{clip_forward.8} parent=19 // pred_fallthru
        _
      // Predicated region
      $region29: #{clip_forward.8} parent=19 // pred_check
        %p560 = pneg %p129
      $region30: #{clip_forward.8} parent=19 // pred_check_branch
        %562 = sbr.rel (%p560) target = $region32
      $region31: #{clip_forward.8} parent=19 // pred_region
        %p563 = scmp.lt.s32.totalorder %s32, 1
        %s564 = scalar_select %p563, %s32, 1
        %s565 = scalar_lea.vmem %s3, %s564
      $region32: #{clip_forward.8} parent=19 // pred_fallthru
        _
      // Predicated region
      $region33: #{clip_forward.8} parent=19 // pred_check
        %p566 = pneg %p155
      $region34: #{clip_forward.8} parent=19 // pred_check_branch
        %568 = sbr.rel (%p566) target = $region36
      $region35: #{clip_forward.8} parent=19 // pred_region
        %p569 = scmp.lt.s32.totalorder %s32, 1
        %s570 = scalar_select %p569, %s32, 1
        %s571 = smul.addr %s570, 4
        %s572 = smul.addr %s571, 8
        %s573 = scalar_lea.vmem %s4, %s572
      $region36: #{clip_forward.8} parent=19 // pred_fallthru
        _
      // Predicated region
      $region37: #{clip_forward.8} parent=19 // pred_check
        %p574 = pneg %p181
      $region38: #{clip_forward.8} parent=19 // pred_check_branch
        %576 = sbr.rel (%p574) target = $region40
      $region39: #{clip_forward.8} parent=19 // pred_region
        %p577 = scmp.lt.s32.totalorder %s32, 1
        %s578 = scalar_select %p577, %s32, 1
        %s579 = smul.addr %s578, 4
        %s580 = smul.addr %s579, 8
        %s581 = scalar_lea.vmem %s5, %s580
      $region40: #{clip_forward.8} parent=19 // pred_fallthru
        _
      // Predicated region
      $region41: #{clip_forward.8} parent=19 // pred_check
        %p582 = pneg %p207
      $region42: #{clip_forward.8} parent=19 // pred_check_branch
        %584 = sbr.rel (%p582) target = $region44
      $region43: #{clip_forward.8} parent=19 // pred_region
        %p585 = scmp.lt.s32.totalorder %s32, 1
        %s586 = scalar_select %p585, %s32, 1
        %s587 = smul.addr %s586, 4
        %s588 = smul.addr %s587, 8
        %s589 = scalar_lea.vmem %s6, %s588
      $region44: #{clip_forward.8} parent=19 // pred_fallthru
        _
      // Predicated region
      $region45: #{clip_forward.8} parent=19 // pred_check
        %p590 = pneg %p233
      $region46: #{clip_forward.8} parent=19 // pred_check_branch
        %592 = sbr.rel (%p590) target = $region48
      $region47: #{clip_forward.8} parent=19 // pred_region
        %p593 = scmp.lt.s32.totalorder %s32, 1
        %s594 = scalar_select %p593, %s32, 1
        %s595 = scalar_lea.vmem %s7, %s594
      $region48: #{clip_forward.8} parent=19 // pred_fallthru
        _
      // Predicated region
      $region49: #{clip_forward.8} parent=19 // pred_check
        %p596 = pneg %p259
      $region50: #{clip_forward.8} parent=19 // pred_check_branch
        %598 = sbr.rel (%p596) target = $region52
      $region51: #{clip_forward.8} parent=19 // pred_region
        %p599 = scmp.lt.s32.totalorder %s32, 1
        %s600 = scalar_select %p599, %s32, 1
        %s601 = scalar_lea.vmem %s8, %s600
      $region52: #{clip_forward.8} parent=19 // pred_fallthru
        _
      // Predicated region
      $region53: #{clip_forward.8} parent=19 // pred_check
        %p602 = pneg %p285
      $region54: #{clip_forward.8} parent=19 // pred_check_branch
        %604 = sbr.rel (%p602) target = $region56
      $region55: #{clip_forward.8} parent=19 // pred_region
        %p605 = scmp.lt.s32.totalorder %s32, 1
        %s606 = scalar_select %p605, %s32, 1
        %s607 = scalar_lea.vmem %s9, %s606
      $region56: #{clip_forward.8} parent=19 // pred_fallthru
        _
      // Predicated region
      $region57: #{clip_forward.8} parent=19 // pred_check
        %p608 = pneg %p311
      $region58: #{clip_forward.8} parent=19 // pred_check_branch
        %610 = sbr.rel (%p608) target = $region60
      $region59: #{clip_forward.8} parent=19 // pred_region
        %p611 = scmp.lt.s32.totalorder %s32, 1
        %s612 = scalar_select %p611, %s32, 1
        %s613 = smul.addr %s612, 4
        %s614 = smul.addr %s613, 8
        %s615 = scalar_lea.vmem %s10, %s614
      $region60: #{clip_forward.8} parent=19 // pred_fallthru
        _
      // Predicated region
      $region61: #{clip_forward.8} parent=19 // pred_check
        %p616 = pneg %p337
      $region62: #{clip_forward.8} parent=19 // pred_check_branch
        %618 = sbr.rel (%p616) target = $region64
      $region63: #{clip_forward.8} parent=19 // pred_region
        %p619 = scmp.lt.s32.totalorder %s32, 1
        %s620 = scalar_select %p619, %s32, 1
        %s621 = scalar_lea.vmem %s11, %s620
      $region64: #{clip_forward.8} parent=19 // pred_fallthru
        _
      // Predicated region
      $region65: #{clip_forward.8} parent=19 // pred_check
        %p622 = pneg %p363
      $region66: #{clip_forward.8} parent=19 // pred_check_branch
        %624 = sbr.rel (%p622) target = $region68
      $region67: #{clip_forward.8} parent=19 // pred_region
        %p625 = scmp.lt.s32.totalorder %s32, 1
        %s626 = scalar_select %p625, %s32, 1
        %s627 = scalar_lea.vmem %s12, %s626
      $region68: #{clip_forward.8} parent=19 // pred_fallthru
        _
      // Predicated region
      $region69: #{clip_forward.8} parent=19 // pred_check
        %p628 = pneg %p389
      $region70: #{clip_forward.8} parent=19 // pred_check_branch
        %630 = sbr.rel (%p628) target = $region72
      $region71: #{clip_forward.8} parent=19 // pred_region
        %p631 = scmp.lt.s32.totalorder %s32, 1
        %s632 = scalar_select %p631, %s32, 1
        %s633 = scalar_lea.vmem %s13, %s632
      $region72: #{clip_forward.8} parent=19 // pred_fallthru
        _
      // Predicated region
      $region73: #{clip_forward.8} parent=19 // pred_check
        %p634 = pneg %p415
      $region74: #{clip_forward.8} parent=19 // pred_check_branch
        %636 = sbr.rel (%p634) target = $region76
      $region75: #{clip_forward.8} parent=19 // pred_region
        %p637 = scmp.lt.s32.totalorder %s32, 1
        %s638 = scalar_select %p637, %s32, 1
        %s639 = smul.addr %s638, 4
        %s640 = smul.addr %s639, 8
        %s641 = scalar_lea.vmem %s14, %s640
      $region76: #{clip_forward.8} parent=19 // pred_fallthru
        _
      // Predicated region
      $region77: #{clip_forward.8} parent=19 // pred_check
        %p642 = pneg %p441
      $region78: #{clip_forward.8} parent=19 // pred_check_branch
        %644 = sbr.rel (%p642) target = $region80
      $region79: #{clip_forward.8} parent=19 // pred_region
        %p645 = scmp.lt.s32.totalorder %s32, 1
        %s646 = scalar_select %p645, %s32, 1
        %s647 = scalar_lea.vmem %s15, %s646
      $region80: #{clip_forward.8} parent=19 // pred_fallthru
        _
      // Predicated region
      $region81: #{clip_forward.8} parent=19 // pred_check
        %p648 = pneg %p467
      $region82: #{clip_forward.8} parent=19 // pred_check_branch
        %650 = sbr.rel (%p648) target = $region84
      $region83: #{clip_forward.8} parent=19 // pred_region
        %p651 = scmp.lt.s32.totalorder %s32, 1
        %s652 = scalar_select %p651, %s32, 1
        %s653 = smul.addr %s652, 16
        %s654 = smul.addr %s653, 8
        %s655 = scalar_lea.vmem %s16, %s654
      $region84: #{clip_forward.8} parent=19 // pred_fallthru
        _
      // Predicated region
      $region85: #{clip_forward.8} parent=19 // pred_check
        %p656 = pneg %p493
      $region86: #{clip_forward.8} parent=19 // pred_check_branch
        %658 = sbr.rel (%p656) target = $region88
      $region87: #{clip_forward.8} parent=19 // pred_region
        %p659 = scmp.lt.s32.totalorder %s32, 1
        %s660 = scalar_select %p659, %s32, 1
        %s661 = scalar_lea.vmem %s17, %s660
      $region88: #{clip_forward.8} parent=19 // pred_fallthru
        _
    $region20: #{clip_forward.8} parent=5 // pred_fallthru
      _
    %p662 = scmp.le.s32.totalorder 1, %s24
    %p663 = scmp.lt.s32.totalorder %s24, 5
    %p664 = pnand %p662, %p663
    %p665 = pneg %p664
    // Predicated region
    $region89: #{clip_forward.8} parent=5 // pred_check
      _
    $region90: #{clip_forward.8} parent=5 // pred_check_branch
      %667 = sbr.rel (%p664) target = $region92
    $region91: #{clip_forward.8} parent=5 // pred_region
      %s668 = ssub.s32 %s24, 1
      %p669 = scmp.lt.s32.totalorder %s33, 1
      %s670 = scalar_select %p669, %s33, 1
      %s671 = smul.addr %s670, 8
      %s672 = scalar_lea.vmem %s0, %s671
      %p673 = pneg %p62
      %p674 = pneg %p59
      %p675 = pneg %p83
      %p676 = pneg %p80
      %p677 = scmp.lt.s32.totalorder %s34, 1
      %s678 = scalar_select %p677, %s34, 1
      %s679 = scalar_lea.vmem %s2, %s678
      %p680 = pneg %p109
      %p681 = pneg %p106
      %p682 = scmp.lt.s32.totalorder %s34, 1
      %s683 = scalar_select %p682, %s34, 1
      %s684 = scalar_lea.vmem %s3, %s683
      %p685 = pneg %p135
      %p686 = pneg %p132
      %p687 = scmp.lt.s32.totalorder %s34, 1
      %s688 = scalar_select %p687, %s34, 1
      %s689 = smul.addr %s688, 4
      %s690 = smul.addr %s689, 8
      %s691 = scalar_lea.vmem %s4, %s690
      %p692 = pneg %p161
      %p693 = pneg %p158
      %p694 = scmp.lt.s32.totalorder %s34, 1
      %s695 = scalar_select %p694, %s34, 1
      %s696 = smul.addr %s695, 4
      %s697 = smul.addr %s696, 8
      %s698 = scalar_lea.vmem %s5, %s697
      %p699 = pneg %p187
      %p700 = pneg %p184
      %p701 = scmp.lt.s32.totalorder %s34, 1
      %s702 = scalar_select %p701, %s34, 1
      %s703 = smul.addr %s702, 4
      %s704 = smul.addr %s703, 8
      %s705 = scalar_lea.vmem %s6, %s704
      %p706 = pneg %p213
      %p707 = pneg %p210
      %p708 = scmp.lt.s32.totalorder %s34, 1
      %s709 = scalar_select %p708, %s34, 1
      %s710 = scalar_lea.vmem %s7, %s709
      %p711 = pneg %p239
      %p712 = pneg %p236
      %p713 = scmp.lt.s32.totalorder %s34, 1
      %s714 = scalar_select %p713, %s34, 1
      %s715 = scalar_lea.vmem %s8, %s714
      %p716 = pneg %p265
      %p717 = pneg %p262
      %p718 = scmp.lt.s32.totalorder %s34, 1
      %s719 = scalar_select %p718, %s34, 1
      %s720 = scalar_lea.vmem %s9, %s719
      %p721 = pneg %p291
      %p722 = pneg %p288
      %p723 = scmp.lt.s32.totalorder %s34, 1
      %s724 = scalar_select %p723, %s34, 1
      %s725 = smul.addr %s724, 4
      %s726 = smul.addr %s725, 8
      %s727 = scalar_lea.vmem %s10, %s726
      %p728 = pneg %p317
      %p729 = pneg %p314
      %p730 = scmp.lt.s32.totalorder %s34, 1
      %s731 = scalar_select %p730, %s34, 1
      %s732 = scalar_lea.vmem %s11, %s731
      %p733 = pneg %p343
      %p734 = pneg %p340
      %p735 = scmp.lt.s32.totalorder %s34, 1
      %s736 = scalar_select %p735, %s34, 1
      %s737 = scalar_lea.vmem %s12, %s736
      %p738 = pneg %p369
      %p739 = pneg %p366
      %p740 = scmp.lt.s32.totalorder %s34, 1
      %s741 = scalar_select %p740, %s34, 1
      %s742 = scalar_lea.vmem %s13, %s741
      %p743 = pneg %p395
      %p744 = pneg %p392
      %p745 = scmp.lt.s32.totalorder %s34, 1
      %s746 = scalar_select %p745, %s34, 1
      %s747 = smul.addr %s746, 4
      %s748 = smul.addr %s747, 8
      %s749 = scalar_lea.vmem %s14, %s748
      %p750 = pneg %p421
      %p751 = pneg %p418
      %p752 = scmp.lt.s32.totalorder %s34, 1
      %s753 = scalar_select %p752, %s34, 1
      %s754 = scalar_lea.vmem %s15, %s753
      %p755 = pneg %p447
      %p756 = pneg %p444
      %p757 = scmp.lt.s32.totalorder %s34, 1
      %s758 = scalar_select %p757, %s34, 1
      %s759 = smul.addr %s758, 16
      %s760 = smul.addr %s759, 8
      %s761 = scalar_lea.vmem %s16, %s760
      %p762 = pneg %p473
      %p763 = pneg %p470
      %p764 = scmp.lt.s32.totalorder %s34, 1
      %s765 = scalar_select %p764, %s34, 1
      %s766 = scalar_lea.vmem %s17, %s765
      %p767 = pneg %p499
      %p768 = pneg %p496
      %p769 = pneg %p525
      %p770 = pneg %p522
      %p771 = scmp.lt.s32.totalorder %s33, 1
      %s772 = scalar_select %p771, %s33, 1
      %s773 = smul.addr %s772, 8
      %s774 = scalar_lea.vmem %s18, %s773
      %p775 = scmp.lt.s32.totalorder %s33, 1
      %s776 = scalar_select %p775, %s33, 1
      %s777 = smul.addr %s776, 8
      %s778 = scalar_lea.vmem %s0, %s777
      %p779 = scmp.lt.s32.totalorder %s34, 1
      %s780 = scalar_select %p779, %s34, 1
      %s781 = scalar_lea.vmem %s2, %s780
      %p782 = scmp.lt.s32.totalorder %s34, 1
      %s783 = scalar_select %p782, %s34, 1
      %s784 = scalar_lea.vmem %s3, %s783
      %p785 = scmp.lt.s32.totalorder %s34, 1
      %s786 = scalar_select %p785, %s34, 1
      %s787 = smul.addr %s786, 4
      %s788 = smul.addr %s787, 8
      %s789 = scalar_lea.vmem %s4, %s788
      %p790 = scmp.lt.s32.totalorder %s34, 1
      %s791 = scalar_select %p790, %s34, 1
      %s792 = smul.addr %s791, 4
      %s793 = smul.addr %s792, 8
      %s794 = scalar_lea.vmem %s5, %s793
      %p795 = scmp.lt.s32.totalorder %s34, 1
      %s796 = scalar_select %p795, %s34, 1
      %s797 = smul.addr %s796, 4
      %s798 = smul.addr %s797, 8
      %s799 = scalar_lea.vmem %s6, %s798
      %p800 = scmp.lt.s32.totalorder %s34, 1
      %s801 = scalar_select %p800, %s34, 1
      %s802 = scalar_lea.vmem %s7, %s801
      %p803 = scmp.lt.s32.totalorder %s34, 1
      %s804 = scalar_select %p803, %s34, 1
      %s805 = scalar_lea.vmem %s8, %s804
      %p806 = scmp.lt.s32.totalorder %s34, 1
      %s807 = scalar_select %p806, %s34, 1
      %s808 = scalar_lea.vmem %s9, %s807
      %p809 = scmp.lt.s32.totalorder %s34, 1
      %s810 = scalar_select %p809, %s34, 1
      %s811 = smul.addr %s810, 4
      %s812 = smul.addr %s811, 8
      %s813 = scalar_lea.vmem %s10, %s812
      %p814 = scmp.lt.s32.totalorder %s34, 1
      %s815 = scalar_select %p814, %s34, 1
      %s816 = scalar_lea.vmem %s11, %s815
      %p817 = scmp.lt.s32.totalorder %s34, 1
      %s818 = scalar_select %p817, %s34, 1
      %s819 = scalar_lea.vmem %s12, %s818
      %p820 = scmp.lt.s32.totalorder %s34, 1
      %s821 = scalar_select %p820, %s34, 1
      %s822 = scalar_lea.vmem %s13, %s821
      %p823 = scmp.lt.s32.totalorder %s34, 1
      %s824 = scalar_select %p823, %s34, 1
      %s825 = smul.addr %s824, 4
      %s826 = smul.addr %s825, 8
      %s827 = scalar_lea.vmem %s14, %s826
      %p828 = scmp.lt.s32.totalorder %s34, 1
      %s829 = scalar_select %p828, %s34, 1
      %s830 = scalar_lea.vmem %s15, %s829
      %p831 = scmp.lt.s32.totalorder %s34, 1
      %s832 = scalar_select %p831, %s34, 1
      %s833 = smul.addr %s832, 16
      %s834 = smul.addr %s833, 8
      %s835 = scalar_lea.vmem %s16, %s834
      %p836 = scmp.lt.s32.totalorder %s34, 1
      %s837 = scalar_select %p836, %s34, 1
      %s838 = scalar_lea.vmem %s17, %s837
      %p839 = scmp.lt.s32.totalorder %s33, 1
      %s840 = scalar_select %p839, %s33, 1
      %s841 = smul.addr %s840, 8
      %s842 = scalar_lea.vmem %s18, %s841
      %p844 = scmp.eq.s32.totalorder %s34, 0
      // Predicated region
      $region93: #{clip_forward.8} parent=91 // pred_check
        %p845 = pneg %p844
      $region94: #{clip_forward.8} parent=91 // pred_check_branch
        %847 = sbr.rel (%p845) target = $region96
      $region95: #{clip_forward.8} parent=91 // pred_region
        %v848 = vld [vmem:[%s778] sm:$0xff]
        %v849 = vld [vmem:[%s1] sm:$0xff]
        %v850 = vadd.f32 %v848, %v849
        %vm851 = vcmask 261120
        %852 = vst.msk [vmem:[%s842] sm:$0xff] %vm851, %v850
      $region96: #{clip_forward.8} parent=91 // pred_fallthru
        _
      %v853 = vld [vmem:[%s842] sm:$0xff]
      %v854 = vlaneseq
      %v855 = vshrl.u32 %v854, 7
      %v856 = vlaneseq
      %v857 = vand.u32 %v856, 127
      %vm858 = vcmp.le.s32.totalorder %v857, %v855
      %v859 = vld [vmem:[%s781] sm:$0x1]
      %v860 = vld [vmem:[%s784] sm:$0x1]
      %vm861 = vcmask 261120
      %v862 = vsel %vm861, %v853, 0.0
      %863 = vadd.xlane.f32.xlu0 %v862
      %v864 = vpop.xlane.xlu0 %863
      %v865 = vrcp.pop 32.0
      %v866 = vmul.f32 %v864, %v865
      %v867 = vsub.f32 %v853, %v866
      %v868 = vmul.f32 %v867, %v867
      %v869 = vsel %vm861, %v868, 0.0
      %870 = vadd.xlane.f32.xlu0 %v869
      %v871 = vpop.xlane.xlu0 %870
      %v872 = vmul.f32 %v871, %v865
      %v873 = vadd.f32 %v872, 1e-05
      %v874 = vrsqrt.pop %v873
      %v875 = vmul.f32 %v867, %v874
      %v877 = vlaneseq
      %v878 = vshrl.u32 %v877, 7
      %v879 = vsub.s32 0, %v878
      %v880 = vrot.slane %v859, %v879
      %v882 = vmul.f32 %v875, %v880
      %v884 = vlaneseq
      %v885 = vshrl.u32 %v884, 7
      %v886 = vsub.s32 0, %v885
      %v887 = vrot.slane %v860, %v886
      %v889 = vadd.f32 %v882, %v887
      %v890 = vpack.c.bf16 %v889, %v889
      %v891 = vld [vmem:[%s789] sm:$0xff]
      %v892 = vld [vmem:[%s789 + $0x8] sm:$0xff]
      %v893 = vld [vmem:[%s789 + $0x10] sm:$0xff]
      %v894 = vld [vmem:[%s789 + $0x18] sm:$0xff]
      %v895 = vpack.c.bf16 %v892, %v891
      %v896 = vpack.c.bf16 %v894, %v893
      %v897 = vld [vmem:[%s802] sm:$0x1]
      %v899 = vlaneseq
      %v900 = vshrl.u32 %v899, 7
      %v901 = vsub.s32 0, %v900
      %v902 = vrot.slane %v897, %v901
      %v905 = vsel %vm861, %v890, 0
      %907 = vmatprep.subr.bf16.mxu0 0
      %908 = vmatpush1.bf16.msra.mxu0 %v895
      %909 = vmatprep.subr.bf16.mxu0 0
      %910 = vmatpush1.bf16.msra.mxu0 %v896
      %911 = vmatprep.subr.bf16.mxu0 0
      %912 = vmatpush1.bf16.msra.mxu0 0
      %913 = vmatprep.subr.bf16.mxu0 0
      %914 = vmatpush1.bf16.msra.mxu0 0
      %915 = vmatprep.subr.bf16.mxu0 0
      %916 = vmatpush1.bf16.msra.mxu0 0
      %917 = vmatprep.subr.bf16.mxu0 0
      %918 = vmatpush1.bf16.msra.mxu0 0
      %919 = vmatprep.subr.bf16.mxu0 0
      %920 = vmatpush1.bf16.msra.mxu0 0
      %921 = vmatprep.subr.bf16.mxu0 0
      %922 = vmatpush1.bf16.msra.mxu0 0
      %923 = vmatprep.subr.bf16.mxu0 0
      %924 = vmatpush1.bf16.msra.mxu0 0
      %925 = vmatprep.subr.bf16.mxu0 0
      %926 = vmatpush1.bf16.msra.mxu0 0
      %927 = vmatprep.subr.bf16.mxu0 0
      %928 = vmatpush1.bf16.msra.mxu0 0
      %929 = vmatprep.subr.bf16.mxu0 0
      %930 = vmatpush1.bf16.msra.mxu0 0
      %931 = vmatprep.subr.bf16.mxu0 0
      %932 = vmatpush1.bf16.msra.mxu0 0
      %933 = vmatprep.subr.bf16.mxu0 0
      %934 = vmatpush1.bf16.msra.mxu0 0
      %935 = vmatprep.subr.bf16.mxu0 0
      %936 = vmatpush1.bf16.msra.mxu0 0
      %937 = vmatprep.subr.bf16.mxu0 0
      %938 = vmatpush1.bf16.msra.mxu0 0
      %939 = vmatprep.mubr.bf16.mxu0 0
      %940 = vmatmul.mubr.bf16.gmra.mrb[0].mxu0 %v905
      %v941 = vpop.f32.mrb[0].mxu0
      %v942 = vadd.f32 %v902, %v941
      %v943 = vpop.f32.mrb[0].mxu0
      %v944 = vpop.f32.mrb[0].mxu0
      %v945 = vpop.f32.mrb[0].mxu0
      %946 = vdwg.mxu0
      %v947 = vld [vmem:[%s794] sm:$0xff]
      %v948 = vld [vmem:[%s794 + $0x8] sm:$0xff]
      %v949 = vld [vmem:[%s794 + $0x10] sm:$0xff]
      %v950 = vld [vmem:[%s794 + $0x18] sm:$0xff]
      %v951 = vpack.c.bf16 %v948, %v947
      %v952 = vpack.c.bf16 %v950, %v949
      %v953 = vld [vmem:[%s805] sm:$0x1]
      %v955 = vlaneseq
      %v956 = vshrl.u32 %v955, 7
      %v957 = vsub.s32 0, %v956
      %v958 = vrot.slane %v953, %v957
      %960 = vmatprep.subr.bf16.mxu0 0
      %961 = vmatpush1.bf16.msra.mxu0 %v951
      %962 = vmatprep.subr.bf16.mxu0 0
      %963 = vmatpush1.bf16.msra.mxu0 %v952
      %964 = vmatprep.subr.bf16.mxu0 0
      %965 = vmatpush1.bf16.msra.mxu0 0
      %966 = vmatprep.subr.bf16.mxu0 0
      %967 = vmatpush1.bf16.msra.mxu0 0
      %968 = vmatprep.subr.bf16.mxu0 0
      %969 = vmatpush1.bf16.msra.mxu0 0
      %970 = vmatprep.subr.bf16.mxu0 0
      %971 = vmatpush1.bf16.msra.mxu0 0
      %972 = vmatprep.subr.bf16.mxu0 0
      %973 = vmatpush1.bf16.msra.mxu0 0
      %974 = vmatprep.subr.bf16.mxu0 0
      %975 = vmatpush1.bf16.msra.mxu0 0
      %976 = vmatprep.subr.bf16.mxu0 0
      %977 = vmatpush1.bf16.msra.mxu0 0
      %978 = vmatprep.subr.bf16.mxu0 0
      %979 = vmatpush1.bf16.msra.mxu0 0
      %980 = vmatprep.subr.bf16.mxu0 0
      %981 = vmatpush1.bf16.msra.mxu0 0
      %982 = vmatprep.subr.bf16.mxu0 0
      %983 = vmatpush1.bf16.msra.mxu0 0
      %984 = vmatprep.subr.bf16.mxu0 0
      %985 = vmatpush1.bf16.msra.mxu0 0
      %986 = vmatprep.subr.bf16.mxu0 0
      %987 = vmatpush1.bf16.msra.mxu0 0
      %988 = vmatprep.subr.bf16.mxu0 0
      %989 = vmatpush1.bf16.msra.mxu0 0
      %990 = vmatprep.subr.bf16.mxu0 0
      %991 = vmatpush1.bf16.msra.mxu0 0
      %992 = vmatprep.mubr.bf16.mxu0 0
      %993 = vmatmul.mubr.bf16.gmra.mrb[0].mxu0 %v905
      %v994 = vpop.f32.mrb[0].mxu0
      %v995 = vadd.f32 %v958, %v994
      %v996 = vpop.f32.mrb[0].mxu0
      %v997 = vpop.f32.mrb[0].mxu0
      %v998 = vpop.f32.mrb[0].mxu0
      %999 = vdwg.mxu0
      %v1000 = vld [vmem:[%s799] sm:$0xff]
      %v1001 = vld [vmem:[%s799 + $0x8] sm:$0xff]
      %v1002 = vld [vmem:[%s799 + $0x10] sm:$0xff]
      %v1003 = vld [vmem:[%s799 + $0x18] sm:$0xff]
      %v1004 = vpack.c.bf16 %v1001, %v1000
      %v1005 = vpack.c.bf16 %v1003, %v1002
      %v1006 = vld [vmem:[%s808] sm:$0x1]
      %v1008 = vlaneseq
      %v1009 = vshrl.u32 %v1008, 7
      %v1010 = vsub.s32 0, %v1009
      %v1011 = vrot.slane %v1006, %v1010
      %1013 = vmatprep.subr.bf16.mxu0 0
      %1014 = vmatpush1.bf16.msra.mxu0 %v1004
      %1015 = vmatprep.subr.bf16.mxu0 0
      %1016 = vmatpush1.bf16.msra.mxu0 %v1005
      %1017 = vmatprep.subr.bf16.mxu0 0
      %1018 = vmatpush1.bf16.msra.mxu0 0
      %1019 = vmatprep.subr.bf16.mxu0 0
      %1020 = vmatpush1.bf16.msra.mxu0 0
      %1021 = vmatprep.subr.bf16.mxu0 0
      %1022 = vmatpush1.bf16.msra.mxu0 0
      %1023 = vmatprep.subr.bf16.mxu0 0
      %1024 = vmatpush1.bf16.msra.mxu0 0
      %1025 = vmatprep.subr.bf16.mxu0 0
      %1026 = vmatpush1.bf16.msra.mxu0 0
      %1027 = vmatprep.subr.bf16.mxu0 0
      %1028 = vmatpush1.bf16.msra.mxu0 0
      %1029 = vmatprep.subr.bf16.mxu0 0
      %1030 = vmatpush1.bf16.msra.mxu0 0
      %1031 = vmatprep.subr.bf16.mxu0 0
      %1032 = vmatpush1.bf16.msra.mxu0 0
      %1033 = vmatprep.subr.bf16.mxu0 0
      %1034 = vmatpush1.bf16.msra.mxu0 0
      %1035 = vmatprep.subr.bf16.mxu0 0
      %1036 = vmatpush1.bf16.msra.mxu0 0
      %1037 = vmatprep.subr.bf16.mxu0 0
      %1038 = vmatpush1.bf16.msra.mxu0 0
      %1039 = vmatprep.subr.bf16.mxu0 0
      %1040 = vmatpush1.bf16.msra.mxu0 0
      %1041 = vmatprep.subr.bf16.mxu0 0
      %1042 = vmatpush1.bf16.msra.mxu0 0
      %1043 = vmatprep.subr.bf16.mxu0 0
      %1044 = vmatpush1.bf16.msra.mxu0 0
      %1045 = vmatprep.mubr.bf16.mxu0 0
      %1046 = vmatmul.mubr.bf16.gmra.mrb[0].mxu0 %v905
      %v1047 = vpop.f32.mrb[0].mxu0
      %v1048 = vadd.f32 %v1011, %v1047
      %v1049 = vpop.f32.mrb[0].mxu0
      %v1050 = vpop.f32.mrb[0].mxu0
      %v1051 = vpop.f32.mrb[0].mxu0
      %1052 = vdwg.mxu0
      %vm1053 = vcmask 64512
      %v1055 = vsel %vm1053, %v942, 0
      %v1058 = vsel %vm1053, %v995, 0
      %1060 = vmatprep.subr.mxu0 0.0
      %1061 = vmatpush1.xpose.msra.mxu0 %v1058
      %1062 = vmatprep.subr.mxu0 0.0
      %1063 = vmatpush1.xpose.msra.mxu0 0.0
      %1064 = vmatprep.subr.mxu0 0.0
      %1065 = vmatpush1.xpose.msra.mxu0 0.0
      %1066 = vmatprep.subr.mxu0 0.0
      %1067 = vmatpush1.xpose.msra.mxu0 0.0
      %1068 = vmatprep.subr.mxu0 0.0
      %1069 = vmatpush1.xpose.msra.mxu0 0.0
      %1070 = vmatprep.subr.mxu0 0.0
      %1071 = vmatpush1.xpose.msra.mxu0 0.0
      %1072 = vmatprep.subr.mxu0 0.0
      %1073 = vmatpush1.xpose.msra.mxu0 0.0
      %1074 = vmatprep.subr.mxu0 0.0
      %1075 = vmatpush1.xpose.msra.mxu0 0.0
      %1076 = vmatprep.subr.mxu0 0.0
      %1077 = vmatpush1.xpose.msra.mxu0 0.0
      %1078 = vmatprep.subr.mxu0 0.0
      %1079 = vmatpush1.xpose.msra.mxu0 0.0
      %1080 = vmatprep.subr.mxu0 0.0
      %1081 = vmatpush1.xpose.msra.mxu0 0.0
      %1082 = vmatprep.subr.mxu0 0.0
      %1083 = vmatpush1.xpose.msra.mxu0 0.0
      %1084 = vmatprep.subr.mxu0 0.0
      %1085 = vmatpush1.xpose.msra.mxu0 0.0
      %1086 = vmatprep.subr.mxu0 0.0
      %1087 = vmatpush1.xpose.msra.mxu0 0.0
      %1088 = vmatprep.subr.mxu0 0.0
      %1089 = vmatpush1.xpose.msra.mxu0 0.0
      %1090 = vmatprep.subr.mxu0 0.0
      %1091 = vmatpush1.xpose.msra.mxu0 0.0
      %1092 = vmatprep.subr.mxu0 0.0
      %1093 = vmatpush1.xpose.msra.mxu0 0.0
      %1094 = vmatprep.subr.mxu0 0.0
      %1095 = vmatpush1.xpose.msra.mxu0 0.0
      %1096 = vmatprep.subr.mxu0 0.0
      %1097 = vmatpush1.xpose.msra.mxu0 0.0
      %1098 = vmatprep.subr.mxu0 0.0
      %1099 = vmatpush1.xpose.msra.mxu0 0.0
      %1100 = vmatprep.subr.mxu0 0.0
      %1101 = vmatpush1.xpose.msra.mxu0 0.0
      %1102 = vmatprep.subr.mxu0 0.0
      %1103 = vmatpush1.xpose.msra.mxu0 0.0
      %1104 = vmatprep.subr.mxu0 0.0
      %1105 = vmatpush1.xpose.msra.mxu0 0.0
      %1106 = vmatprep.subr.mxu0 0.0
      %1107 = vmatpush1.xpose.msra.mxu0 0.0
      %1108 = vmatprep.subr.mxu0 0.0
      %1109 = vmatpush1.xpose.msra.mxu0 0.0
      %1110 = vmatprep.subr.mxu0 0.0
      %1111 = vmatpush1.xpose.msra.mxu0 0.0
      %1112 = vmatprep.subr.mxu0 0.0
      %1113 = vmatpush1.xpose.msra.mxu0 0.0
      %1114 = vmatprep.subr.mxu0 0.0
      %1115 = vmatpush1.xpose.msra.mxu0 0.0
      %1116 = vmatprep.subr.mxu0 0.0
      %1117 = vmatpush1.xpose.msra.mxu0 0.0
      %1118 = vmatprep.subr.mxu0 0.0
      %1119 = vmatpush1.xpose.msra.mxu0 0.0
      %1120 = vmatprep.subr.mxu0 0.0
      %1121 = vmatpush1.xpose.msra.mxu0 0.0
      %1122 = vmatprep.subr.mxu0 0.0
      %1123 = vmatpush1.xpose.msra.mxu0 0.0
      %1124 = vmatprep.mubr.f32.mxu0 0.0
      %1125 = vmatmul.mubr.f32.gmra.mrb[0].mxu0 %v1055
      %v1126 = vpop.f32.mrb[0].mxu0
      %v1127 = vadd.f32 0.0, %v1126
      %v1128 = vpop.f32.mrb[0].mxu0
      %1129 = vdwg.mxu0
      %v1130 = vmul.f32 %v1127, 0.35355338
      %v1131 = vsel %vm858, %v1130, -1e+30
      %v1132 = vsel %vm1053, %v1131, -inf
      %1133 = vmax.xlane.f32.xlu0 %v1132
      %v1134 = vpop.xlane.xlu0 %1133
      %v1135 = vsub.f32 %v1131, %v1134
      %v1136 = vmul.f32 %v1135, 1.442695
      %v1137 = vpow.pop %v1136
      %v1138 = vsel %vm1053, %v1137, 0.0
      %1139 = vadd.xlane.f32.xlu0 %v1138
      %v1140 = vpop.xlane.xlu0 %1139
      %v1141 = vrcp.pop %v1140
      %v1142 = vmul.f32 %v1137, %v1141
      %v1144 = vsel %vm1053, %v1142, 0
      %1146 = vmatprep.subr.mxu0 0.0
      %1147 = vmatpush1.msra.mxu0 %v1048
      %1148 = vmatprep.subr.mxu0 0.0
      %1149 = vmatpush1.msra.mxu0 0.0
      %1150 = vmatprep.subr.mxu0 0.0
      %1151 = vmatpush1.msra.mxu0 0.0
      %1152 = vmatprep.subr.mxu0 0.0
      %1153 = vmatpush1.msra.mxu0 0.0
      %1154 = vmatprep.subr.mxu0 0.0
      %1155 = vmatpush1.msra.mxu0 0.0
      %1156 = vmatprep.subr.mxu0 0.0
      %1157 = vmatpush1.msra.mxu0 0.0
      %1158 = vmatprep.subr.mxu0 0.0
      %1159 = vmatpush1.msra.mxu0 0.0
      %1160 = vmatprep.subr.mxu0 0.0
      %1161 = vmatpush1.msra.mxu0 0.0
      %1162 = vmatprep.subr.mxu0 0.0
      %1163 = vmatpush1.msra.mxu0 0.0
      %1164 = vmatprep.subr.mxu0 0.0
      %1165 = vmatpush1.msra.mxu0 0.0
      %1166 = vmatprep.subr.mxu0 0.0
      %1167 = vmatpush1.msra.mxu0 0.0
      %1168 = vmatprep.subr.mxu0 0.0
      %1169 = vmatpush1.msra.mxu0 0.0
      %1170 = vmatprep.subr.mxu0 0.0
      %1171 = vmatpush1.msra.mxu0 0.0
      %1172 = vmatprep.subr.mxu0 0.0
      %1173 = vmatpush1.msra.mxu0 0.0
      %1174 = vmatprep.subr.mxu0 0.0
      %1175 = vmatpush1.msra.mxu0 0.0
      %1176 = vmatprep.subr.mxu0 0.0
      %1177 = vmatpush1.msra.mxu0 0.0
      %1178 = vmatprep.subr.mxu0 0.0
      %1179 = vmatpush1.msra.mxu0 0.0
      %1180 = vmatprep.subr.mxu0 0.0
      %1181 = vmatpush1.msra.mxu0 0.0
      %1182 = vmatprep.subr.mxu0 0.0
      %1183 = vmatpush1.msra.mxu0 0.0
      %1184 = vmatprep.subr.mxu0 0.0
      %1185 = vmatpush1.msra.mxu0 0.0
      %1186 = vmatprep.subr.mxu0 0.0
      %1187 = vmatpush1.msra.mxu0 0.0
      %1188 = vmatprep.subr.mxu0 0.0
      %1189 = vmatpush1.msra.mxu0 0.0
      %1190 = vmatprep.subr.mxu0 0.0
      %1191 = vmatpush1.msra.mxu0 0.0
      %1192 = vmatprep.subr.mxu0 0.0
      %1193 = vmatpush1.msra.mxu0 0.0
      %1194 = vmatprep.subr.mxu0 0.0
      %1195 = vmatpush1.msra.mxu0 0.0
      %1196 = vmatprep.subr.mxu0 0.0
      %1197 = vmatpush1.msra.mxu0 0.0
      %1198 = vmatprep.subr.mxu0 0.0
      %1199 = vmatpush1.msra.mxu0 0.0
      %1200 = vmatprep.subr.mxu0 0.0
      %1201 = vmatpush1.msra.mxu0 0.0
      %1202 = vmatprep.subr.mxu0 0.0
      %1203 = vmatpush1.msra.mxu0 0.0
      %1204 = vmatprep.subr.mxu0 0.0
      %1205 = vmatpush1.msra.mxu0 0.0
      %1206 = vmatprep.subr.mxu0 0.0
      %1207 = vmatpush1.msra.mxu0 0.0
      %1208 = vmatprep.subr.mxu0 0.0
      %1209 = vmatpush1.msra.mxu0 0.0
      %1210 = vmatprep.mubr.f32.mxu0 0.0
      %1211 = vmatmul.mubr.f32.gmra.mrb[0].mxu0 %v1144
      %v1212 = vpop.f32.mrb[0].mxu0
      %v1213 = vadd.f32 0.0, %v1212
      %v1214 = vpop.f32.mrb[0].mxu0
      %1215 = vdwg.mxu0
      %1216 = vrot.lane.b32.xlu0 %v942, 120
      %v1217 = vpop.permute.xlu0 %1216
      %1218 = vrot.lane.b32.xlu0 %v995, 120
      %v1219 = vpop.permute.xlu0 %1218
      %v1220 = vsel %vm1053, %v1217, 0
      %v1222 = vsel %vm1053, %v1219, 0
      %1224 = vmatprep.subr.mxu0 0.0
      %1225 = vmatpush1.xpose.msra.mxu0 %v1222
      %1226 = vmatprep.subr.mxu0 0.0
      %1227 = vmatpush1.xpose.msra.mxu0 0.0
      %1228 = vmatprep.subr.mxu0 0.0
      %1229 = vmatpush1.xpose.msra.mxu0 0.0
      %1230 = vmatprep.subr.mxu0 0.0
      %1231 = vmatpush1.xpose.msra.mxu0 0.0
      %1232 = vmatprep.subr.mxu0 0.0
      %1233 = vmatpush1.xpose.msra.mxu0 0.0
      %1234 = vmatprep.subr.mxu0 0.0
      %1235 = vmatpush1.xpose.msra.mxu0 0.0
      %1236 = vmatprep.subr.mxu0 0.0
      %1237 = vmatpush1.xpose.msra.mxu0 0.0
      %1238 = vmatprep.subr.mxu0 0.0
      %1239 = vmatpush1.xpose.msra.mxu0 0.0
      %1240 = vmatprep.subr.mxu0 0.0
      %1241 = vmatpush1.xpose.msra.mxu0 0.0
      %1242 = vmatprep.subr.mxu0 0.0
      %1243 = vmatpush1.xpose.msra.mxu0 0.0
      %1244 = vmatprep.subr.mxu0 0.0
      %1245 = vmatpush1.xpose.msra.mxu0 0.0
      %1246 = vmatprep.subr.mxu0 0.0
      %1247 = vmatpush1.xpose.msra.mxu0 0.0
      %1248 = vmatprep.subr.mxu0 0.0
      %1249 = vmatpush1.xpose.msra.mxu0 0.0
      %1250 = vmatprep.subr.mxu0 0.0
      %1251 = vmatpush1.xpose.msra.mxu0 0.0
      %1252 = vmatprep.subr.mxu0 0.0
      %1253 = vmatpush1.xpose.msra.mxu0 0.0
      %1254 = vmatprep.subr.mxu0 0.0
      %1255 = vmatpush1.xpose.msra.mxu0 0.0
      %1256 = vmatprep.subr.mxu0 0.0
      %1257 = vmatpush1.xpose.msra.mxu0 0.0
      %1258 = vmatprep.subr.mxu0 0.0
      %1259 = vmatpush1.xpose.msra.mxu0 0.0
      %1260 = vmatprep.subr.mxu0 0.0
      %1261 = vmatpush1.xpose.msra.mxu0 0.0
      %1262 = vmatprep.subr.mxu0 0.0
      %1263 = vmatpush1.xpose.msra.mxu0 0.0
      %1264 = vmatprep.subr.mxu0 0.0
      %1265 = vmatpush1.xpose.msra.mxu0 0.0
      %1266 = vmatprep.subr.mxu0 0.0
      %1267 = vmatpush1.xpose.msra.mxu0 0.0
      %1268 = vmatprep.subr.mxu0 0.0
      %1269 = vmatpush1.xpose.msra.mxu0 0.0
      %1270 = vmatprep.subr.mxu0 0.0
      %1271 = vmatpush1.xpose.msra.mxu0 0.0
      %1272 = vmatprep.subr.mxu0 0.0
      %1273 = vmatpush1.xpose.msra.mxu0 0.0
      %1274 = vmatprep.subr.mxu0 0.0
      %1275 = vmatpush1.xpose.msra.mxu0 0.0
      %1276 = vmatprep.subr.mxu0 0.0
      %1277 = vmatpush1.xpose.msra.mxu0 0.0
      %1278 = vmatprep.subr.mxu0 0.0
      %1279 = vmatpush1.xpose.msra.mxu0 0.0
      %1280 = vmatprep.subr.mxu0 0.0
      %1281 = vmatpush1.xpose.msra.mxu0 0.0
      %1282 = vmatprep.subr.mxu0 0.0
      %1283 = vmatpush1.xpose.msra.mxu0 0.0
      %1284 = vmatprep.subr.mxu0 0.0
      %1285 = vmatpush1.xpose.msra.mxu0 0.0
      %1286 = vmatprep.subr.mxu0 0.0
      %1287 = vmatpush1.xpose.msra.mxu0 0.0
      %1288 = vmatprep.mubr.f32.mxu0 0.0
      %1289 = vmatmul.mubr.f32.gmra.mrb[0].mxu0 %v1220
      %v1290 = vpop.f32.mrb[0].mxu0
      %v1291 = vadd.f32 0.0, %v1290
      %v1292 = vpop.f32.mrb[0].mxu0
      %1293 = vdwg.mxu0
      %v1294 = vmul.f32 %v1291, 0.35355338
      %v1295 = vsel %vm858, %v1294, -1e+30
      %v1296 = vsel %vm1053, %v1295, -inf
      %1297 = vmax.xlane.f32.xlu0 %v1296
      %v1298 = vpop.xlane.xlu0 %1297
      %v1299 = vsub.f32 %v1295, %v1298
      %v1300 = vmul.f32 %v1299, 1.442695
      %v1301 = vpow.pop %v1300
      %v1302 = vsel %vm1053, %v1301, 0.0
      %1303 = vadd.xlane.f32.xlu0 %v1302
      %v1304 = vpop.xlane.xlu0 %1303
      %v1305 = vrcp.pop %v1304
      %v1306 = vmul.f32 %v1301, %v1305
      %1308 = vrot.lane.b32.xlu0 %v1048, 120
      %v1309 = vpop.permute.xlu0 %1308
      %v1312 = vsel %vm1053, %v1306, 0
      %1314 = vmatprep.subr.mxu0 0.0
      %1315 = vmatpush1.msra.mxu0 %v1309
      %1316 = vmatprep.subr.mxu0 0.0
      %1317 = vmatpush1.msra.mxu0 0.0
      %1318 = vmatprep.subr.mxu0 0.0
      %1319 = vmatpush1.msra.mxu0 0.0
      %1320 = vmatprep.subr.mxu0 0.0
      %1321 = vmatpush1.msra.mxu0 0.0
      %1322 = vmatprep.subr.mxu0 0.0
      %1323 = vmatpush1.msra.mxu0 0.0
      %1324 = vmatprep.subr.mxu0 0.0
      %1325 = vmatpush1.msra.mxu0 0.0
      %1326 = vmatprep.subr.mxu0 0.0
      %1327 = vmatpush1.msra.mxu0 0.0
      %1328 = vmatprep.subr.mxu0 0.0
      %1329 = vmatpush1.msra.mxu0 0.0
      %1330 = vmatprep.subr.mxu0 0.0
      %1331 = vmatpush1.msra.mxu0 0.0
      %1332 = vmatprep.subr.mxu0 0.0
      %1333 = vmatpush1.msra.mxu0 0.0
      %1334 = vmatprep.subr.mxu0 0.0
      %1335 = vmatpush1.msra.mxu0 0.0
      %1336 = vmatprep.subr.mxu0 0.0
      %1337 = vmatpush1.msra.mxu0 0.0
      %1338 = vmatprep.subr.mxu0 0.0
      %1339 = vmatpush1.msra.mxu0 0.0
      %1340 = vmatprep.subr.mxu0 0.0
      %1341 = vmatpush1.msra.mxu0 0.0
      %1342 = vmatprep.subr.mxu0 0.0
      %1343 = vmatpush1.msra.mxu0 0.0
      %1344 = vmatprep.subr.mxu0 0.0
      %1345 = vmatpush1.msra.mxu0 0.0
      %1346 = vmatprep.subr.mxu0 0.0
      %1347 = vmatpush1.msra.mxu0 0.0
      %1348 = vmatprep.subr.mxu0 0.0
      %1349 = vmatpush1.msra.mxu0 0.0
      %1350 = vmatprep.subr.mxu0 0.0
      %1351 = vmatpush1.msra.mxu0 0.0
      %1352 = vmatprep.subr.mxu0 0.0
      %1353 = vmatpush1.msra.mxu0 0.0
      %1354 = vmatprep.subr.mxu0 0.0
      %1355 = vmatpush1.msra.mxu0 0.0
      %1356 = vmatprep.subr.mxu0 0.0
      %1357 = vmatpush1.msra.mxu0 0.0
      %1358 = vmatprep.subr.mxu0 0.0
      %1359 = vmatpush1.msra.mxu0 0.0
      %1360 = vmatprep.subr.mxu0 0.0
      %1361 = vmatpush1.msra.mxu0 0.0
      %1362 = vmatprep.subr.mxu0 0.0
      %1363 = vmatpush1.msra.mxu0 0.0
      %1364 = vmatprep.subr.mxu0 0.0
      %1365 = vmatpush1.msra.mxu0 0.0
      %1366 = vmatprep.subr.mxu0 0.0
      %1367 = vmatpush1.msra.mxu0 0.0
      %1368 = vmatprep.subr.mxu0 0.0
      %1369 = vmatpush1.msra.mxu0 0.0
      %1370 = vmatprep.subr.mxu0 0.0
      %1371 = vmatpush1.msra.mxu0 0.0
      %1372 = vmatprep.subr.mxu0 0.0
      %1373 = vmatpush1.msra.mxu0 0.0
      %1374 = vmatprep.subr.mxu0 0.0
      %1375 = vmatpush1.msra.mxu0 0.0
      %1376 = vmatprep.subr.mxu0 0.0
      %1377 = vmatpush1.msra.mxu0 0.0
      %1378 = vmatprep.mubr.f32.mxu0 0.0
      %1379 = vmatmul.mubr.f32.gmra.mrb[0].mxu0 %v1312
      %v1380 = vpop.f32.mrb[0].mxu0
      %v1381 = vadd.f32 0.0, %v1380
      %v1382 = vpop.f32.mrb[0].mxu0
      %1383 = vdwg.mxu0
      %1384 = vrot.lane.b32.xlu0 %v942, 112
      %v1385 = vpop.permute.xlu0 %1384
      %1386 = vrot.lane.b32.xlu0 %v995, 112
      %v1387 = vpop.permute.xlu0 %1386
      %v1388 = vsel %vm1053, %v1385, 0
      %v1390 = vsel %vm1053, %v1387, 0
      %1392 = vmatprep.subr.mxu0 0.0
      %1393 = vmatpush1.xpose.msra.mxu0 %v1390
      %1394 = vmatprep.subr.mxu0 0.0
      %1395 = vmatpush1.xpose.msra.mxu0 0.0
      %1396 = vmatprep.subr.mxu0 0.0
      %1397 = vmatpush1.xpose.msra.mxu0 0.0
      %1398 = vmatprep.subr.mxu0 0.0
      %1399 = vmatpush1.xpose.msra.mxu0 0.0
      %1400 = vmatprep.subr.mxu0 0.0
      %1401 = vmatpush1.xpose.msra.mxu0 0.0
      %1402 = vmatprep.subr.mxu0 0.0
      %1403 = vmatpush1.xpose.msra.mxu0 0.0
      %1404 = vmatprep.subr.mxu0 0.0
      %1405 = vmatpush1.xpose.msra.mxu0 0.0
      %1406 = vmatprep.subr.mxu0 0.0
      %1407 = vmatpush1.xpose.msra.mxu0 0.0
      %1408 = vmatprep.subr.mxu0 0.0
      %1409 = vmatpush1.xpose.msra.mxu0 0.0
      %1410 = vmatprep.subr.mxu0 0.0
      %1411 = vmatpush1.xpose.msra.mxu0 0.0
      %1412 = vmatprep.subr.mxu0 0.0
      %1413 = vmatpush1.xpose.msra.mxu0 0.0
      %1414 = vmatprep.subr.mxu0 0.0
      %1415 = vmatpush1.xpose.msra.mxu0 0.0
      %1416 = vmatprep.subr.mxu0 0.0
      %1417 = vmatpush1.xpose.msra.mxu0 0.0
      %1418 = vmatprep.subr.mxu0 0.0
      %1419 = vmatpush1.xpose.msra.mxu0 0.0
      %1420 = vmatprep.subr.mxu0 0.0
      %1421 = vmatpush1.xpose.msra.mxu0 0.0
      %1422 = vmatprep.subr.mxu0 0.0
      %1423 = vmatpush1.xpose.msra.mxu0 0.0
      %1424 = vmatprep.subr.mxu0 0.0
      %1425 = vmatpush1.xpose.msra.mxu0 0.0
      %1426 = vmatprep.subr.mxu0 0.0
      %1427 = vmatpush1.xpose.msra.mxu0 0.0
      %1428 = vmatprep.subr.mxu0 0.0
      %1429 = vmatpush1.xpose.msra.mxu0 0.0
      %1430 = vmatprep.subr.mxu0 0.0
      %1431 = vmatpush1.xpose.msra.mxu0 0.0
      %1432 = vmatprep.subr.mxu0 0.0
      %1433 = vmatpush1.xpose.msra.mxu0 0.0
      %1434 = vmatprep.subr.mxu0 0.0
      %1435 = vmatpush1.xpose.msra.mxu0 0.0
      %1436 = vmatprep.subr.mxu0 0.0
      %1437 = vmatpush1.xpose.msra.mxu0 0.0
      %1438 = vmatprep.subr.mxu0 0.0
      %1439 = vmatpush1.xpose.msra.mxu0 0.0
      %1440 = vmatprep.subr.mxu0 0.0
      %1441 = vmatpush1.xpose.msra.mxu0 0.0
      %1442 = vmatprep.subr.mxu0 0.0
      %1443 = vmatpush1.xpose.msra.mxu0 0.0
      %1444 = vmatprep.subr.mxu0 0.0
      %1445 = vmatpush1.xpose.msra.mxu0 0.0
      %1446 = vmatprep.subr.mxu0 0.0
      %1447 = vmatpush1.xpose.msra.mxu0 0.0
      %1448 = vmatprep.subr.mxu0 0.0
      %1449 = vmatpush1.xpose.msra.mxu0 0.0
      %1450 = vmatprep.subr.mxu0 0.0
      %1451 = vmatpush1.xpose.msra.mxu0 0.0
      %1452 = vmatprep.subr.mxu0 0.0
      %1453 = vmatpush1.xpose.msra.mxu0 0.0
      %1454 = vmatprep.subr.mxu0 0.0
      %1455 = vmatpush1.xpose.msra.mxu0 0.0
      %1456 = vmatprep.mubr.f32.mxu0 0.0
      %1457 = vmatmul.mubr.f32.gmra.mrb[0].mxu0 %v1388
      %v1458 = vpop.f32.mrb[0].mxu0
      %v1459 = vadd.f32 0.0, %v1458
      %v1460 = vpop.f32.mrb[0].mxu0
      %1461 = vdwg.mxu0
      %v1462 = vmul.f32 %v1459, 0.35355338
      %v1463 = vsel %vm858, %v1462, -1e+30
      %v1464 = vsel %vm1053, %v1463, -inf
      %1465 = vmax.xlane.f32.xlu0 %v1464
      %v1466 = vpop.xlane.xlu0 %1465
      %v1467 = vsub.f32 %v1463, %v1466
      %v1468 = vmul.f32 %v1467, 1.442695
      %v1469 = vpow.pop %v1468
      %v1470 = vsel %vm1053, %v1469, 0.0
      %1471 = vadd.xlane.f32.xlu0 %v1470
      %v1472 = vpop.xlane.xlu0 %1471
      %v1473 = vrcp.pop %v1472
      %v1474 = vmul.f32 %v1469, %v1473
      %1475 = vrot.lane.b32.xlu0 %v1048, 112
      %v1476 = vpop.permute.xlu0 %1475
      %v1479 = vsel %vm1053, %v1474, 0
      %1481 = vmatprep.subr.mxu0 0.0
      %1482 = vmatpush1.msra.mxu0 %v1476
      %1483 = vmatprep.subr.mxu0 0.0
      %1484 = vmatpush1.msra.mxu0 0.0
      %1485 = vmatprep.subr.mxu0 0.0
      %1486 = vmatpush1.msra.mxu0 0.0
      %1487 = vmatprep.subr.mxu0 0.0
      %1488 = vmatpush1.msra.mxu0 0.0
      %1489 = vmatprep.subr.mxu0 0.0
      %1490 = vmatpush1.msra.mxu0 0.0
      %1491 = vmatprep.subr.mxu0 0.0
      %1492 = vmatpush1.msra.mxu0 0.0
      %1493 = vmatprep.subr.mxu0 0.0
      %1494 = vmatpush1.msra.mxu0 0.0
      %1495 = vmatprep.subr.mxu0 0.0
      %1496 = vmatpush1.msra.mxu0 0.0
      %1497 = vmatprep.subr.mxu0 0.0
      %1498 = vmatpush1.msra.mxu0 0.0
      %1499 = vmatprep.subr.mxu0 0.0
      %1500 = vmatpush1.msra.mxu0 0.0
      %1501 = vmatprep.subr.mxu0 0.0
      %1502 = vmatpush1.msra.mxu0 0.0
      %1503 = vmatprep.subr.mxu0 0.0
      %1504 = vmatpush1.msra.mxu0 0.0
      %1505 = vmatprep.subr.mxu0 0.0
      %1506 = vmatpush1.msra.mxu0 0.0
      %1507 = vmatprep.subr.mxu0 0.0
      %1508 = vmatpush1.msra.mxu0 0.0
      %1509 = vmatprep.subr.mxu0 0.0
      %1510 = vmatpush1.msra.mxu0 0.0
      %1511 = vmatprep.subr.mxu0 0.0
      %1512 = vmatpush1.msra.mxu0 0.0
      %1513 = vmatprep.subr.mxu0 0.0
      %1514 = vmatpush1.msra.mxu0 0.0
      %1515 = vmatprep.subr.mxu0 0.0
      %1516 = vmatpush1.msra.mxu0 0.0
      %1517 = vmatprep.subr.mxu0 0.0
      %1518 = vmatpush1.msra.mxu0 0.0
      %1519 = vmatprep.subr.mxu0 0.0
      %1520 = vmatpush1.msra.mxu0 0.0
      %1521 = vmatprep.subr.mxu0 0.0
      %1522 = vmatpush1.msra.mxu0 0.0
      %1523 = vmatprep.subr.mxu0 0.0
      %1524 = vmatpush1.msra.mxu0 0.0
      %1525 = vmatprep.subr.mxu0 0.0
      %1526 = vmatpush1.msra.mxu0 0.0
      %1527 = vmatprep.subr.mxu0 0.0
      %1528 = vmatpush1.msra.mxu0 0.0
      %1529 = vmatprep.subr.mxu0 0.0
      %1530 = vmatpush1.msra.mxu0 0.0
      %1531 = vmatprep.subr.mxu0 0.0
      %1532 = vmatpush1.msra.mxu0 0.0
      %1533 = vmatprep.subr.mxu0 0.0
      %1534 = vmatpush1.msra.mxu0 0.0
      %1535 = vmatprep.subr.mxu0 0.0
      %1536 = vmatpush1.msra.mxu0 0.0
      %1537 = vmatprep.subr.mxu0 0.0
      %1538 = vmatpush1.msra.mxu0 0.0
      %1539 = vmatprep.subr.mxu0 0.0
      %1540 = vmatpush1.msra.mxu0 0.0
      %1541 = vmatprep.subr.mxu0 0.0
      %1542 = vmatpush1.msra.mxu0 0.0
      %1543 = vmatprep.subr.mxu0 0.0
      %1544 = vmatpush1.msra.mxu0 0.0
      %1545 = vmatprep.mubr.f32.mxu0 0.0
      %1546 = vmatmul.mubr.f32.gmra.mrb[0].mxu0 %v1479
      %v1547 = vpop.f32.mrb[0].mxu0
      %v1548 = vadd.f32 0.0, %v1547
      %v1549 = vpop.f32.mrb[0].mxu0
      %1550 = vdwg.mxu0
      %1551 = vrot.lane.b32.xlu0 %v942, 104
      %v1552 = vpop.permute.xlu0 %1551
      %1553 = vrot.lane.b32.xlu0 %v995, 104
      %v1554 = vpop.permute.xlu0 %1553
      %v1555 = vsel %vm1053, %v1552, 0
      %v1557 = vsel %vm1053, %v1554, 0
      %1559 = vmatprep.subr.mxu0 0.0
      %1560 = vmatpush1.xpose.msra.mxu0 %v1557
      %1561 = vmatprep.subr.mxu0 0.0
      %1562 = vmatpush1.xpose.msra.mxu0 0.0
      %1563 = vmatprep.subr.mxu0 0.0
      %1564 = vmatpush1.xpose.msra.mxu0 0.0
      %1565 = vmatprep.subr.mxu0 0.0
      %1566 = vmatpush1.xpose.msra.mxu0 0.0
      %1567 = vmatprep.subr.mxu0 0.0
      %1568 = vmatpush1.xpose.msra.mxu0 0.0
      %1569 = vmatprep.subr.mxu0 0.0
      %1570 = vmatpush1.xpose.msra.mxu0 0.0
      %1571 = vmatprep.subr.mxu0 0.0
      %1572 = vmatpush1.xpose.msra.mxu0 0.0
      %1573 = vmatprep.subr.mxu0 0.0
      %1574 = vmatpush1.xpose.msra.mxu0 0.0
      %1575 = vmatprep.subr.mxu0 0.0
      %1576 = vmatpush1.xpose.msra.mxu0 0.0
      %1577 = vmatprep.subr.mxu0 0.0
      %1578 = vmatpush1.xpose.msra.mxu0 0.0
      %1579 = vmatprep.subr.mxu0 0.0
      %1580 = vmatpush1.xpose.msra.mxu0 0.0
      %1581 = vmatprep.subr.mxu0 0.0
      %1582 = vmatpush1.xpose.msra.mxu0 0.0
      %1583 = vmatprep.subr.mxu0 0.0
      %1584 = vmatpush1.xpose.msra.mxu0 0.0
      %1585 = vmatprep.subr.mxu0 0.0
      %1586 = vmatpush1.xpose.msra.mxu0 0.0
      %1587 = vmatprep.subr.mxu0 0.0
      %1588 = vmatpush1.xpose.msra.mxu0 0.0
      %1589 = vmatprep.subr.mxu0 0.0
      %1590 = vmatpush1.xpose.msra.mxu0 0.0
      %1591 = vmatprep.subr.mxu0 0.0
      %1592 = vmatpush1.xpose.msra.mxu0 0.0
      %1593 = vmatprep.subr.mxu0 0.0
      %1594 = vmatpush1.xpose.msra.mxu0 0.0
      %1595 = vmatprep.subr.mxu0 0.0
      %1596 = vmatpush1.xpose.msra.mxu0 0.0
      %1597 = vmatprep.subr.mxu0 0.0
      %1598 = vmatpush1.xpose.msra.mxu0 0.0
      %1599 = vmatprep.subr.mxu0 0.0
      %1600 = vmatpush1.xpose.msra.mxu0 0.0
      %1601 = vmatprep.subr.mxu0 0.0
      %1602 = vmatpush1.xpose.msra.mxu0 0.0
      %1603 = vmatprep.subr.mxu0 0.0
      %1604 = vmatpush1.xpose.msra.mxu0 0.0
      %1605 = vmatprep.subr.mxu0 0.0
      %1606 = vmatpush1.xpose.msra.mxu0 0.0
      %1607 = vmatprep.subr.mxu0 0.0
      %1608 = vmatpush1.xpose.msra.mxu0 0.0
      %1609 = vmatprep.subr.mxu0 0.0
      %1610 = vmatpush1.xpose.msra.mxu0 0.0
      %1611 = vmatprep.subr.mxu0 0.0
      %1612 = vmatpush1.xpose.msra.mxu0 0.0
      %1613 = vmatprep.subr.mxu0 0.0
      %1614 = vmatpush1.xpose.msra.mxu0 0.0
      %1615 = vmatprep.subr.mxu0 0.0
      %1616 = vmatpush1.xpose.msra.mxu0 0.0
      %1617 = vmatprep.subr.mxu0 0.0
      %1618 = vmatpush1.xpose.msra.mxu0 0.0
      %1619 = vmatprep.subr.mxu0 0.0
      %1620 = vmatpush1.xpose.msra.mxu0 0.0
      %1621 = vmatprep.subr.mxu0 0.0
      %1622 = vmatpush1.xpose.msra.mxu0 0.0
      %1623 = vmatprep.mubr.f32.mxu0 0.0
      %1624 = vmatmul.mubr.f32.gmra.mrb[0].mxu0 %v1555
      %v1625 = vpop.f32.mrb[0].mxu0
      %v1626 = vadd.f32 0.0, %v1625
      %v1627 = vpop.f32.mrb[0].mxu0
      %1628 = vdwg.mxu0
      %v1629 = vmul.f32 %v1626, 0.35355338
      %v1630 = vsel %vm858, %v1629, -1e+30
      %v1631 = vsel %vm1053, %v1630, -inf
      %1632 = vmax.xlane.f32.xlu0 %v1631
      %v1633 = vpop.xlane.xlu0 %1632
      %v1634 = vsub.f32 %v1630, %v1633
      %v1635 = vmul.f32 %v1634, 1.442695
      %v1636 = vpow.pop %v1635
      %v1637 = vsel %vm1053, %v1636, 0.0
      %1638 = vadd.xlane.f32.xlu0 %v1637
      %v1639 = vpop.xlane.xlu0 %1638
      %v1640 = vrcp.pop %v1639
      %v1641 = vmul.f32 %v1636, %v1640
      %1642 = vrot.lane.b32.xlu0 %v1048, 104
      %v1643 = vpop.permute.xlu0 %1642
      %v1646 = vsel %vm1053, %v1641, 0
      %1648 = vmatprep.subr.mxu0 0.0
      %1649 = vmatpush1.msra.mxu0 %v1643
      %1650 = vmatprep.subr.mxu0 0.0
      %1651 = vmatpush1.msra.mxu0 0.0
      %1652 = vmatprep.subr.mxu0 0.0
      %1653 = vmatpush1.msra.mxu0 0.0
      %1654 = vmatprep.subr.mxu0 0.0
      %1655 = vmatpush1.msra.mxu0 0.0
      %1656 = vmatprep.subr.mxu0 0.0
      %1657 = vmatpush1.msra.mxu0 0.0
      %1658 = vmatprep.subr.mxu0 0.0
      %1659 = vmatpush1.msra.mxu0 0.0
      %1660 = vmatprep.subr.mxu0 0.0
      %1661 = vmatpush1.msra.mxu0 0.0
      %1662 = vmatprep.subr.mxu0 0.0
      %1663 = vmatpush1.msra.mxu0 0.0
      %1664 = vmatprep.subr.mxu0 0.0
      %1665 = vmatpush1.msra.mxu0 0.0
      %1666 = vmatprep.subr.mxu0 0.0
      %1667 = vmatpush1.msra.mxu0 0.0
      %1668 = vmatprep.subr.mxu0 0.0
      %1669 = vmatpush1.msra.mxu0 0.0
      %1670 = vmatprep.subr.mxu0 0.0
      %1671 = vmatpush1.msra.mxu0 0.0
      %1672 = vmatprep.subr.mxu0 0.0
      %1673 = vmatpush1.msra.mxu0 0.0
      %1674 = vmatprep.subr.mxu0 0.0
      %1675 = vmatpush1.msra.mxu0 0.0
      %1676 = vmatprep.subr.mxu0 0.0
      %1677 = vmatpush1.msra.mxu0 0.0
      %1678 = vmatprep.subr.mxu0 0.0
      %1679 = vmatpush1.msra.mxu0 0.0
      %1680 = vmatprep.subr.mxu0 0.0
      %1681 = vmatpush1.msra.mxu0 0.0
      %1682 = vmatprep.subr.mxu0 0.0
      %1683 = vmatpush1.msra.mxu0 0.0
      %1684 = vmatprep.subr.mxu0 0.0
      %1685 = vmatpush1.msra.mxu0 0.0
      %1686 = vmatprep.subr.mxu0 0.0
      %1687 = vmatpush1.msra.mxu0 0.0
      %1688 = vmatprep.subr.mxu0 0.0
      %1689 = vmatpush1.msra.mxu0 0.0
      %1690 = vmatprep.subr.mxu0 0.0
      %1691 = vmatpush1.msra.mxu0 0.0
      %1692 = vmatprep.subr.mxu0 0.0
      %1693 = vmatpush1.msra.mxu0 0.0
      %1694 = vmatprep.subr.mxu0 0.0
      %1695 = vmatpush1.msra.mxu0 0.0
      %1696 = vmatprep.subr.mxu0 0.0
      %1697 = vmatpush1.msra.mxu0 0.0
      %1698 = vmatprep.subr.mxu0 0.0
      %1699 = vmatpush1.msra.mxu0 0.0
      %1700 = vmatprep.subr.mxu0 0.0
      %1701 = vmatpush1.msra.mxu0 0.0
      %1702 = vmatprep.subr.mxu0 0.0
      %1703 = vmatpush1.msra.mxu0 0.0
      %1704 = vmatprep.subr.mxu0 0.0
      %1705 = vmatpush1.msra.mxu0 0.0
      %1706 = vmatprep.subr.mxu0 0.0
      %1707 = vmatpush1.msra.mxu0 0.0
      %1708 = vmatprep.subr.mxu0 0.0
      %1709 = vmatpush1.msra.mxu0 0.0
      %1710 = vmatprep.subr.mxu0 0.0
      %1711 = vmatpush1.msra.mxu0 0.0
      %1712 = vmatprep.mubr.f32.mxu0 0.0
      %1713 = vmatmul.mubr.f32.gmra.mrb[0].mxu0 %v1646
      %v1714 = vpop.f32.mrb[0].mxu0
      %v1715 = vadd.f32 0.0, %v1714
      %v1716 = vpop.f32.mrb[0].mxu0
      %1717 = vdwg.mxu0
      %1719 = vrot.lane.b32.xlu0 %v1381, 8
      %v1720 = vpop.permute.xlu0 %1719
      %1723 = vrot.lane.b32.xlu0 %v1548, 16
      %v1724 = vpop.permute.xlu0 %1723
      %1727 = vrot.lane.b32.xlu0 %v1715, 24
      %v1728 = vpop.permute.xlu0 %1727
      %v1730 = vsel %vm1053, %v1213, %v1720
      %vm1731 = vcmask 130048
      %v1732 = vsel %vm1731, %v1730, %v1724
      %vm1733 = vcmask 195584
      %v1734 = vsel %vm1733, %v1732, %v1728
      %v1735 = vpack.c.bf16 %v1734, %v1734
      %v1736 = vld [vmem:[%s813] sm:$0xff]
      %v1737 = vld [vmem:[%s813 + $0x8] sm:$0xff]
      %v1738 = vld [vmem:[%s813 + $0x10] sm:$0xff]
      %v1739 = vld [vmem:[%s813 + $0x18] sm:$0xff]
      %v1740 = vpack.c.bf16 %v1737, %v1736
      %v1741 = vpack.c.bf16 %v1739, %v1738
      %v1742 = vld [vmem:[%s816] sm:$0x1]
      %v1744 = vlaneseq
      %v1745 = vshrl.u32 %v1744, 7
      %v1746 = vsub.s32 0, %v1745
      %v1747 = vrot.slane %v1742, %v1746
      %v1750 = vsel %vm861, %v1735, 0
      %1752 = vmatprep.subr.bf16.mxu0 0
      %1753 = vmatpush1.bf16.msra.mxu0 %v1740
      %1754 = vmatprep.subr.bf16.mxu0 0
      %1755 = vmatpush1.bf16.msra.mxu0 %v1741
      %1756 = vmatprep.subr.bf16.mxu0 0
      %1757 = vmatpush1.bf16.msra.mxu0 0
      %1758 = vmatprep.subr.bf16.mxu0 0
      %1759 = vmatpush1.bf16.msra.mxu0 0
      %1760 = vmatprep.subr.bf16.mxu0 0
      %1761 = vmatpush1.bf16.msra.mxu0 0
      %1762 = vmatprep.subr.bf16.mxu0 0
      %1763 = vmatpush1.bf16.msra.mxu0 0
      %1764 = vmatprep.subr.bf16.mxu0 0
      %1765 = vmatpush1.bf16.msra.mxu0 0
      %1766 = vmatprep.subr.bf16.mxu0 0
      %1767 = vmatpush1.bf16.msra.mxu0 0
      %1768 = vmatprep.subr.bf16.mxu0 0
      %1769 = vmatpush1.bf16.msra.mxu0 0
      %1770 = vmatprep.subr.bf16.mxu0 0
      %1771 = vmatpush1.bf16.msra.mxu0 0
      %1772 = vmatprep.subr.bf16.mxu0 0
      %1773 = vmatpush1.bf16.msra.mxu0 0
      %1774 = vmatprep.subr.bf16.mxu0 0
      %1775 = vmatpush1.bf16.msra.mxu0 0
      %1776 = vmatprep.subr.bf16.mxu0 0
      %1777 = vmatpush1.bf16.msra.mxu0 0
      %1778 = vmatprep.subr.bf16.mxu0 0
      %1779 = vmatpush1.bf16.msra.mxu0 0
      %1780 = vmatprep.subr.bf16.mxu0 0
      %1781 = vmatpush1.bf16.msra.mxu0 0
      %1782 = vmatprep.subr.bf16.mxu0 0
      %1783 = vmatpush1.bf16.msra.mxu0 0
      %1784 = vmatprep.mubr.bf16.mxu0 0
      %1785 = vmatmul.mubr.bf16.gmra.mrb[0].mxu0 %v1750
      %v1786 = vpop.f32.mrb[0].mxu0
      %v1787 = vadd.f32 %v1747, %v1786
      %v1788 = vpop.f32.mrb[0].mxu0
      %v1789 = vpop.f32.mrb[0].mxu0
      %v1790 = vpop.f32.mrb[0].mxu0
      %1791 = vdwg.mxu0
      %v1792 = vadd.f32 %v853, %v1787
      %v1793 = vld [vmem:[%s819] sm:$0x1]
      %v1794 = vld [vmem:[%s822] sm:$0x1]
      %v1795 = vsel %vm861, %v1792, 0.0
      %1796 = vadd.xlane.f32.xlu0 %v1795
      %v1797 = vpop.xlane.xlu0 %1796
      %v1798 = vmul.f32 %v1797, %v865
      %v1799 = vsub.f32 %v1792, %v1798
      %v1800 = vmul.f32 %v1799, %v1799
      %v1801 = vsel %vm861, %v1800, 0.0
      %1802 = vadd.xlane.f32.xlu0 %v1801
      %v1803 = vpop.xlane.xlu0 %1802
      %v1804 = vmul.f32 %v1803, %v865
      %v1805 = vadd.f32 %v1804, 1e-05
      %v1806 = vrsqrt.pop %v1805
      %v1807 = vmul.f32 %v1799, %v1806
      %v1809 = vlaneseq
      %v1810 = vshrl.u32 %v1809, 7
      %v1811 = vsub.s32 0, %v1810
      %v1812 = vrot.slane %v1793, %v1811
      %v1814 = vmul.f32 %v1807, %v1812
      %v1816 = vlaneseq
      %v1817 = vshrl.u32 %v1816, 7
      %v1818 = vsub.s32 0, %v1817
      %v1819 = vrot.slane %v1794, %v1818
      %v1821 = vadd.f32 %v1814, %v1819
      %v1822 = vpack.c.bf16 %v1821, %v1821
      %v1823 = vld [vmem:[%s827] sm:$0xff]
      %v1824 = vld [vmem:[%s827 + $0x8] sm:$0xff]
      %v1825 = vld [vmem:[%s827 + $0x10] sm:$0xff]
      %v1826 = vld [vmem:[%s827 + $0x18] sm:$0xff]
      %v1827 = vpack.c.bf16 %v1824, %v1823
      %v1828 = vpack.c.bf16 %v1826, %v1825
      %v1829 = vld [vmem:[%s830] sm:$0x1]
      %v1831 = vlaneseq
      %v1832 = vshrl.u32 %v1831, 7
      %v1833 = vsub.s32 0, %v1832
      %v1834 = vrot.slane %v1829, %v1833
      %v1837 = vsel %vm861, %v1822, 0
      %1839 = vmatprep.subr.bf16.mxu0 0
      %1840 = vmatpush1.bf16.msra.mxu0 %v1827
      %1841 = vmatprep.subr.bf16.mxu0 0
      %1842 = vmatpush1.bf16.msra.mxu0 %v1828
      %1843 = vmatprep.subr.bf16.mxu0 0
      %1844 = vmatpush1.bf16.msra.mxu0 0
      %1845 = vmatprep.subr.bf16.mxu0 0
      %1846 = vmatpush1.bf16.msra.mxu0 0
      %1847 = vmatprep.subr.bf16.mxu0 0
      %1848 = vmatpush1.bf16.msra.mxu0 0
      %1849 = vmatprep.subr.bf16.mxu0 0
      %1850 = vmatpush1.bf16.msra.mxu0 0
      %1851 = vmatprep.subr.bf16.mxu0 0
      %1852 = vmatpush1.bf16.msra.mxu0 0
      %1853 = vmatprep.subr.bf16.mxu0 0
      %1854 = vmatpush1.bf16.msra.mxu0 0
      %1855 = vmatprep.subr.bf16.mxu0 0
      %1856 = vmatpush1.bf16.msra.mxu0 0
      %1857 = vmatprep.subr.bf16.mxu0 0
      %1858 = vmatpush1.bf16.msra.mxu0 0
      %1859 = vmatprep.subr.bf16.mxu0 0
      %1860 = vmatpush1.bf16.msra.mxu0 0
      %1861 = vmatprep.subr.bf16.mxu0 0
      %1862 = vmatpush1.bf16.msra.mxu0 0
      %1863 = vmatprep.subr.bf16.mxu0 0
      %1864 = vmatpush1.bf16.msra.mxu0 0
      %1865 = vmatprep.subr.bf16.mxu0 0
      %1866 = vmatpush1.bf16.msra.mxu0 0
      %1867 = vmatprep.subr.bf16.mxu0 0
      %1868 = vmatpush1.bf16.msra.mxu0 0
      %1869 = vmatprep.subr.bf16.mxu0 0
      %1870 = vmatpush1.bf16.msra.mxu0 0
      %1871 = vmatprep.mubr.bf16.mxu0 0
      %1872 = vmatmul.mubr.bf16.gmra.mrb[0].mxu0 %v1837
      %v1873 = vpop.f32.mrb[0].mxu0
      %v1874 = vadd.f32 %v1834, %v1873
      %v1875 = vpop.f32.mrb[0].mxu0
      %v1876 = vpop.f32.mrb[0].mxu0
      %v1877 = vpop.f32.mrb[0].mxu0
      %1878 = vdwg.mxu0
      %v1879 = vmul.f32 %v1874, %v1874
      %v1880 = vmul.f32 %v1874, %v1879
      %v1881 = vmul.f32 %v1880, 0.044715
      %v1882 = vadd.f32 %v1874, %v1881
      %v1883 = vmul.f32 %v1882, 0.7978846
      %v1884 = vtanh.pop %v1883
      %v1885 = vadd.f32 %v1884, 1.0
      %v1886 = vmul.f32 %v1885, 0.5
      %v1887 = vmul.f32 %v1874, %v1886
      %v1888 = vpack.c.bf16 %v1887, %v1887
      %v1889 = vld [vmem:[%s835] sm:$0xff]
      %v1890 = vld [vmem:[%s835 + $0x8] sm:$0xff]
      %v1891 = vld [vmem:[%s835 + $0x10] sm:$0xff]
      %v1892 = vld [vmem:[%s835 + $0x18] sm:$0xff]
      %v1893 = vld [vmem:[%s835 + $0x20] sm:$0xff]
      %v1894 = vld [vmem:[%s835 + $0x28] sm:$0xff]
      %v1895 = vld [vmem:[%s835 + $0x30] sm:$0xff]
      %v1896 = vld [vmem:[%s835 + $0x38] sm:$0xff]
      %v1897 = vld [vmem:[%s835 + $0x40] sm:$0xff]
      %v1898 = vld [vmem:[%s835 + $0x48] sm:$0xff]
      %v1899 = vld [vmem:[%s835 + $0x50] sm:$0xff]
      %v1900 = vld [vmem:[%s835 + $0x58] sm:$0xff]
      %v1901 = vld [vmem:[%s835 + $0x60] sm:$0xff]
      %v1902 = vld [vmem:[%s835 + $0x68] sm:$0xff]
      %v1903 = vld [vmem:[%s835 + $0x70] sm:$0xff]
      %v1904 = vld [vmem:[%s835 + $0x78] sm:$0xff]
      %v1905 = vpack.c.bf16 %v1890, %v1889
      %v1906 = vpack.c.bf16 %v1892, %v1891
      %v1907 = vpack.c.bf16 %v1894, %v1893
      %v1908 = vpack.c.bf16 %v1896, %v1895
      %v1909 = vpack.c.bf16 %v1898, %v1897
      %v1910 = vpack.c.bf16 %v1900, %v1899
      %v1911 = vpack.c.bf16 %v1902, %v1901
      %v1912 = vpack.c.bf16 %v1904, %v1903
      %v1913 = vld [vmem:[%s838] sm:$0x1]
      %v1915 = vlaneseq
      %v1916 = vshrl.u32 %v1915, 7
      %v1917 = vsub.s32 0, %v1916
      %v1918 = vrot.slane %v1913, %v1917
      %1920 = vmatprep.subr.bf16.mxu0 0
      %1921 = vmatpush1.bf16.msra.mxu0 %v1905
      %1922 = vmatprep.subr.bf16.mxu0 0
      %1923 = vmatpush1.bf16.msra.mxu0 %v1906
      %1924 = vmatprep.subr.bf16.mxu0 0
      %1925 = vmatpush1.bf16.msra.mxu0 %v1907
      %1926 = vmatprep.subr.bf16.mxu0 0
      %1927 = vmatpush1.bf16.msra.mxu0 %v1908
      %1928 = vmatprep.subr.bf16.mxu0 0
      %1929 = vmatpush1.bf16.msra.mxu0 %v1909
      %1930 = vmatprep.subr.bf16.mxu0 0
      %1931 = vmatpush1.bf16.msra.mxu0 %v1910
      %1932 = vmatprep.subr.bf16.mxu0 0
      %1933 = vmatpush1.bf16.msra.mxu0 %v1911
      %1934 = vmatprep.subr.bf16.mxu0 0
      %1935 = vmatpush1.bf16.msra.mxu0 %v1912
      %1936 = vmatprep.subr.bf16.mxu0 0
      %1937 = vmatpush1.bf16.msra.mxu0 0
      %1938 = vmatprep.subr.bf16.mxu0 0
      %1939 = vmatpush1.bf16.msra.mxu0 0
      %1940 = vmatprep.subr.bf16.mxu0 0
      %1941 = vmatpush1.bf16.msra.mxu0 0
      %1942 = vmatprep.subr.bf16.mxu0 0
      %1943 = vmatpush1.bf16.msra.mxu0 0
      %1944 = vmatprep.subr.bf16.mxu0 0
      %1945 = vmatpush1.bf16.msra.mxu0 0
      %1946 = vmatprep.subr.bf16.mxu0 0
      %1947 = vmatpush1.bf16.msra.mxu0 0
      %1948 = vmatprep.subr.bf16.mxu0 0
      %1949 = vmatpush1.bf16.msra.mxu0 0
      %1950 = vmatprep.subr.bf16.mxu0 0
      %1951 = vmatpush1.bf16.msra.mxu0 0
      %1952 = vmatprep.mubr.bf16.mxu0 0
      %1953 = vmatmul.mubr.bf16.gmra.mrb[0].mxu0 %v1888
      %v1954 = vpop.f32.mrb[0].mxu0
      %v1955 = vadd.f32 %v1918, %v1954
      %v1956 = vpop.f32.mrb[0].mxu0
      %v1957 = vpop.f32.mrb[0].mxu0
      %v1958 = vpop.f32.mrb[0].mxu0
      %1959 = vdwg.mxu0
      %v1960 = vadd.f32 %v1792, %v1955
      %1961 = vst.msk [vmem:[%s842] sm:$0xff] %vm861, %v1960
      %p1962 = scmp.lt.s32.totalorder %s33, 1
      %s1963 = scalar_select %p1962, %s33, 1
      %s1964 = smul.addr %s1963, 8
      %s1965 = scalar_lea.vmem %s18, %s1964
      // Predicated region
      $region97: #{clip_forward.8} parent=91 // pred_check
        %p1966 = pneg %p522
      $region98: #{clip_forward.8} parent=91 // pred_check_branch
        %1968 = sbr.rel (%p1966) target = $region100
      $region99: #{clip_forward.8} parent=91 // pred_region
        _
      $region100: #{clip_forward.8} parent=91 // pred_fallthru
        _
    $region92: #{clip_forward.8} parent=5 // pred_fallthru
      _
    %p1969 = scmp.le.s32.totalorder 2, %s24
    // Predicated region
    $region101: #{clip_forward.8} parent=5 // pred_check
      %p1970 = pneg %p1969
    $region102: #{clip_forward.8} parent=5 // pred_check_branch
      %1972 = sbr.rel (%p1970) target = $region104
    $region103: #{clip_forward.8} parent=5 // pred_region
      %s1973 = ssub.s32 %s24, 2
      // Predicated region
      $region105: #{clip_forward.8} parent=103 // pred_check
        %p1974 = pneg %p528
      $region106: #{clip_forward.8} parent=103 // pred_check_branch
        %1976 = sbr.rel (%p1974) target = $region108
      $region107: #{clip_forward.8} parent=103 // pred_region
        %p1977 = scmp.lt.s32.totalorder %s35, 1
        %s1978 = scalar_select %p1977, %s35, 1
        %s1979 = smul.addr %s1978, 8
        %s1980 = scalar_lea.vmem %s18, %s1979
      $region108: #{clip_forward.8} parent=103 // pred_fallthru
        _
    $region104: #{clip_forward.8} parent=5 // pred_fallthru
      _
  $region6: #{clip_forward.8} parent=0 // loop_footer
    %s28 = sadd.s32 1, %s24
  $region7: #{clip_forward.8} parent=0 // loop_footer_branch
    %23 = sbr.rel target = $region3
  $region8: #{clip_forward.8} parent=0 // loop_exit
    _

</llo_original>
